<compile_context>
chip_gen: v7x
topology: tpu7x:2x2x1
jax: 0.10.0
libtpu: 0.0.40
codegen_flags: <defaults>
</compile_context>

<pallas_src>
import functools

import jax
import jax.numpy as jnp
import numpy as np
from jax.experimental import pallas as pl
from jax.experimental.pallas import tpu as pltpu


# ----------------------------- fused Pallas kernel ----------------------------

def _fused_lstm_kernel(x_ref, wih1_ref, whh1_ref, b1_ref,
                       wih2_ref, whh2_ref, b2_ref, wfc_ref, bfc_ref,
                       logits_ref, hidden_ref,
                       xs_ref, hs_ref):
    """Whole forward pass in one invocation.

    x_ref    : (B, T, D)  batch_first input (full block, VMEM resident)
    wih*_ref : (D|H, 4H)  input->gates weights (pre-transposed)
    whh*_ref : (H, 4H)    hidden->gates weights (pre-transposed)
    b*_ref   : (1, 4H)    combined bias (b_ih + b_hh)
    wfc_ref  : (H, 2), bfc_ref: (1, 2)  FC head
    logits_ref : (B, T, 2) output
    hidden_ref : (B, T, H) output (layer-2 hidden states)
    xs_ref   : (T, B, D) VMEM scratch, time-major staged input
    hs_ref   : (T, B, H) VMEM scratch, time-major layer-2 hidden states
    """
    B = x_ref.shape[0]
    T = x_ref.shape[1]
    H = whh1_ref.shape[0]

    # Stage batch_first input time-major (static copies; layout plumbing, stays in VMEM).
    for t in range(T):
        xs_ref[t] = x_ref[:, t, :]

    # Weights stay resident for the whole recurrence.
    wih1 = wih1_ref[...]; whh1 = whh1_ref[...]; b1 = b1_ref[...]
    wih2 = wih2_ref[...]; whh2 = whh2_ref[...]; b2 = b2_ref[...]

    def cell(x_t, h, c, wih, whh, b):
        g = (jnp.dot(x_t, wih, preferred_element_type=jnp.float32)
             + jnp.dot(h, whh, preferred_element_type=jnp.float32)
             + b)                                     # (B, 4H), PyTorch gate order i, f, g, o
        i_g = jax.nn.sigmoid(g[:, 0 * H:1 * H])
        f_g = jax.nn.sigmoid(g[:, 1 * H:2 * H])
        g_g = jnp.tanh(g[:, 2 * H:3 * H])
        o_g = jax.nn.sigmoid(g[:, 3 * H:4 * H])
        c_new = f_g * c + i_g * g_g
        h_new = o_g * jnp.tanh(c_new)
        return h_new, c_new

    def step(t, carry):
        h1, c1, h2, c2 = carry
        x_t = xs_ref[t]                               # (B, D) dynamic leading-dim read
        h1, c1 = cell(x_t, h1, c1, wih1, whh1, b1)    # layer 1
        h2, c2 = cell(h1, h2, c2, wih2, whh2, b2)     # layer 2 (no dropout: eval semantics)
        hs_ref[t] = h2                                # stage hidden state time-major
        return (h1, c1, h2, c2)

    z = jnp.zeros((B, H), jnp.float32)                # zero h0/c0, matches nn.LSTM default
    jax.lax.fori_loop(0, T, step, (z, z, z, z), unroll=True)

    # Epilogue: FC head + batch_first writeback (all static indexing).
    wfc = wfc_ref[...]
    bfc = bfc_ref[...]
    for t in range(T):
        h_t = hs_ref[t]                               # (B, H)
        hidden_ref[:, t, :] = h_t
        logits_ref[:, t, :] = (jnp.dot(h_t, wfc, preferred_element_type=jnp.float32) + bfc)


# ----------------------------- wrapper -----------------------------------------

def fused_lstm_fc_pallas(x, layer1, layer2, fc_w, fc_b):
    """x: (B, T, D) batch_first float32. layer*: dicts with PyTorch-layout LSTM weights.
    Returns (logits (B,T,2), hidden (B,T,H))."""
    B, T, D = x.shape
    H = layer1["w_hh"].shape[1]
    O = fc_w.shape[0]

    wih1 = jnp.asarray(layer1["w_ih"], jnp.float32).T                       # (D, 4H)
    whh1 = jnp.asarray(layer1["w_hh"], jnp.float32).T                       # (H, 4H)
    b1 = (jnp.asarray(layer1["b_ih"], jnp.float32)
          + jnp.asarray(layer1["b_hh"], jnp.float32)).reshape(1, 4 * H)
    wih2 = jnp.asarray(layer2["w_ih"], jnp.float32).T                       # (H, 4H)
    whh2 = jnp.asarray(layer2["w_hh"], jnp.float32).T                       # (H, 4H)
    b2 = (jnp.asarray(layer2["b_ih"], jnp.float32)
          + jnp.asarray(layer2["b_hh"], jnp.float32)).reshape(1, 4 * H)
    wfc = jnp.asarray(fc_w, jnp.float32).T                                  # (H, O)
    bfc = jnp.asarray(fc_b, jnp.float32).reshape(1, O)

    def full(shape):
        return pl.BlockSpec(shape, lambda i, _s=shape: (0,) * len(_s))

    return pl.pallas_call(
        _fused_lstm_kernel,
        out_shape=(jax.ShapeDtypeStruct((B, T, O), jnp.float32),
                   jax.ShapeDtypeStruct((B, T, H), jnp.float32)),
        grid_spec=pltpu.PrefetchScalarGridSpec(
            num_scalar_prefetch=0,
            grid=(1,),
            in_specs=[
                full((B, T, D)),
                full((D, 4 * H)), full((H, 4 * H)), full((1, 4 * H)),
                full((H, 4 * H)), full((H, 4 * H)), full((1, 4 * H)),
                full((H, O)), full((1, O)),
            ],
            out_specs=[full((B, T, O)), full((B, T, H))],
            scratch_shapes=[pltpu.VMEM((T, B, D), jnp.float32),
                            pltpu.VMEM((T, B, H), jnp.float32)],
        ),
        compiler_params=pltpu.CompilerParams(
            dimension_semantics=("arbitrary",)),
    )(x, wih1, whh1, b1, wih2, whh2, b2, wfc, bfc)


@functools.partial(jax.jit, static_argnames=("return_hidden",))
def lstm_model_forward(params, X, X_last_obsv, Mask, Delta, return_hidden=False):
    """Matches LSTMmodel.forward: only X_last_obsv is consumed (X/Mask/Delta unused)."""
    x = jnp.asarray(X_last_obsv, jnp.float32)            # (B, T, D) batch_first
    layer1, layer2 = params["lstm"]                       # module fixes num_layers=2
    logits, hidden = fused_lstm_fc_pallas(x, layer1, layer2, params["fc_w"], params["fc_b"])
    if return_hidden:
        return logits, hidden
    return logits


# ----------------------------- parameter init ----------------------------------

def init_params(key, input_dim, hidden_dim, num_layers=2, out_dim=2):
    """Deterministic init mirroring PyTorch's U(-1/sqrt(H), 1/sqrt(H))."""
    params = {"lstm": []}
    bound = 1.0 / np.sqrt(hidden_dim)
    for layer in range(num_layers):
        in_d = input_dim if layer == 0 else hidden_dim
        key, k1, k2, k3, k4 = jax.random.split(key, 5)
        params["lstm"].append({
            "w_ih": jax.random.uniform(k1, (4 * hidden_dim, in_d),
                                       jnp.float32, -bound, bound),
            "w_hh": jax.random.uniform(k2, (4 * hidden_dim, hidden_dim),
                                       jnp.float32, -bound, bound),
            "b_ih": jax.random.uniform(k3, (4 * hidden_dim,),
                                       jnp.float32, -bound, bound),
            "b_hh": jax.random.uniform(k4, (4 * hidden_dim,),
                                       jnp.float32, -bound, bound),
        })
    key, k1, k2 = jax.random.split(key, 3)
    params["fc_w"] = jax.random.uniform(k1, (out_dim, hidden_dim),
                                        jnp.float32, -bound, bound)
    params["fc_b"] = jax.random.uniform(k2, (out_dim,),
                                        jnp.float32, -bound, bound)
    return params


# ----------------------------- pure-JAX reference -------------------------------

def _reference_forward(params, x):
    """lax.scan LSTM reference. Returns (logits (B,T,2), hidden (B,T,H))."""
    h_seq = jnp.transpose(x, (1, 0, 2))  # (T, B, D)
    for layer in params["lstm"]:
        wih_t = layer["w_ih"].T
        whh_t = layer["w_hh"].T
        bias = layer["b_ih"] + layer["b_hh"]
        H = layer["w_hh"].shape[1]
        B = h_seq.shape[1]

        def step(carry, xt):
            h, c = carry
            g = xt @ wih_t + h @ whh_t + bias
            i = jax.nn.sigmoid(g[:, :H])
            f = jax.nn.sigmoid(g[:, H:2 * H])
            gg = jnp.tanh(g[:, 2 * H:3 * H])
            o = jax.nn.sigmoid(g[:, 3 * H:])
            c_new = f * c + i * gg
            h_new = o * jnp.tanh(c_new)
            return (h_new, c_new), h_new

        init = (jnp.zeros((B, H), jnp.float32), jnp.zeros((B, H), jnp.float32))
        _, h_seq = jax.lax.scan(step, init, h_seq)
    hidden = jnp.transpose(h_seq, (1, 0, 2))                       # (B, T, H)
    logits = hidden @ params["fc_w"].T + params["fc_b"]            # (B, T, 2)
    return logits, hidden


# ----------------------------- main ---------------------------------------------

if __name__ == "__main__":
    B, T, D, H = 2, 8, 16, 32   # batch, seq, input_dim, hidden_dim

    key = jax.random.PRNGKey(0)
    kp, kx, kxl, km, kd = jax.random.split(key, 5)

    params = init_params(kp, input_dim=D, hidden_dim=H, num_layers=2, out_dim=2)

    X = jax.random.normal(kx, (B, T, D), jnp.float32)
    X_last_obsv = jax.random.normal(kxl, (B, T, D), jnp.float32)
    Mask = (jax.random.uniform(km, (B, T, D)) > 0.5).astype(jnp.float32)
    Delta = jax.random.uniform(kd, (B, T, D), jnp.float32)

    # default path (logits only)
    logits = jax.block_until_ready(lstm_model_forward(params, X, X_last_obsv, Mask, Delta))
    assert logits.shape == (B, T, 2), logits.shape

    # return_hidden path
    logits_h, hidden = lstm_model_forward(params, X, X_last_obsv, Mask, Delta,
                                          return_hidden=True)
    logits_h = jax.block_until_ready(logits_h)
    hidden = jax.block_until_ready(hidden)
    assert hidden.shape == (B, T, H), hidden.shape

    ref_logits, ref_hidden = _reference_forward(params, X_last_obsv)
    np.testing.assert_allclose(np.asarray(logits), np.asarray(ref_logits),
                               rtol=1e-4, atol=1e-4)
    np.testing.assert_allclose(np.asarray(logits_h), np.asarray(ref_logits),
                               rtol=1e-4, atol=1e-4)
    np.testing.assert_allclose(np.asarray(hidden), np.asarray(ref_hidden),
                               rtol=1e-4, atol=1e-4)

    print("KERNEL_OK")
</pallas_src>

<mosaic_0001>
module attributes {stable_mosaic.version = 11 : i64} {
  func.func @_fused_lstm_kernel(%arg0: i32, %arg1: memref<2x8x16xf32, #tpu.memory_space<vmem>>, %arg2: memref<16x128xf32, #tpu.memory_space<vmem>>, %arg3: memref<32x128xf32, #tpu.memory_space<vmem>>, %arg4: memref<1x128xf32, #tpu.memory_space<vmem>>, %arg5: memref<32x128xf32, #tpu.memory_space<vmem>>, %arg6: memref<32x128xf32, #tpu.memory_space<vmem>>, %arg7: memref<1x128xf32, #tpu.memory_space<vmem>>, %arg8: memref<32x2xf32, #tpu.memory_space<vmem>>, %arg9: memref<1x2xf32, #tpu.memory_space<vmem>>, %arg10: memref<2x8x2xf32, #tpu.memory_space<vmem>>, %arg11: memref<2x8x32xf32, #tpu.memory_space<vmem>>, %arg12: memref<8x2x16xf32, #tpu.memory_space<vmem>>, %arg13: memref<8x2x32xf32, #tpu.memory_space<vmem>>) attributes {dimension_semantics = [#tpu.dimension_semantics<arbitrary>], iteration_bounds = array<i64: 1>, scalar_prefetch = 0 : i64, scratch_operands = 2 : i64, tpu.core_type = #tpu.core_type<tc>, window_params = [{pipeline_mode = #tpu.pipeline_mode<synchronous>, transform_indices = @transform_0, window_bounds = array<i64: 2, 8, 16>}, {pipeline_mode = #tpu.pipeline_mode<synchronous>, transform_indices = @transform_1, window_bounds = array<i64: 16, 128>}, {pipeline_mode = #tpu.pipeline_mode<synchronous>, transform_indices = @transform_2, window_bounds = array<i64: 32, 128>}, {pipeline_mode = #tpu.pipeline_mode<synchronous>, transform_indices = @transform_3, window_bounds = array<i64: 1, 128>}, {pipeline_mode = #tpu.pipeline_mode<synchronous>, transform_indices = @transform_4, window_bounds = array<i64: 32, 128>}, {pipeline_mode = #tpu.pipeline_mode<synchronous>, transform_indices = @transform_5, window_bounds = array<i64: 32, 128>}, {pipeline_mode = #tpu.pipeline_mode<synchronous>, transform_indices = @transform_6, window_bounds = array<i64: 1, 128>}, {pipeline_mode = #tpu.pipeline_mode<synchronous>, transform_indices = @transform_7, window_bounds = array<i64: 32, 2>}, {pipeline_mode = #tpu.pipeline_mode<synchronous>, transform_indices = @transform_8, window_bounds = array<i64: 1, 2>}, {pipeline_mode = #tpu.pipeline_mode<synchronous>, transform_indices = @transform_9, window_bounds = array<i64: 2, 8, 2>}, {pipeline_mode = #tpu.pipeline_mode<synchronous>, transform_indices = @transform_10, window_bounds = array<i64: 2, 8, 32>}]} {
    %c0 = arith.constant 0 : index
    %c0_0 = arith.constant 0 : index
    %c0_1 = arith.constant 0 : index
    %0 = vector.load %arg1[%c0, %c0_0, %c0_1] : memref<2x8x16xf32, #tpu.memory_space<vmem>>, vector<2x1x16xf32>
    %1 = vector.shape_cast %0 : vector<2x1x16xf32> to vector<2x16xf32>
    %c0_2 = arith.constant 0 : index
    %c0_3 = arith.constant 0 : index
    %c0_4 = arith.constant 0 : index
    %2 = vector.load %arg12[%c0_2, %c0_3, %c0_4] : memref<8x2x16xf32, #tpu.memory_space<vmem>>, vector<1x2x16xf32>
    %3 = vector.shape_cast %2 : vector<1x2x16xf32> to vector<2x16xf32>
    %4 = vector.shape_cast %1 : vector<2x16xf32> to vector<1x2x16xf32>
    tpu.vector_store %arg12[%c0_2, %c0_3, %c0_4], %4 {strides = array<i32>} : memref<8x2x16xf32, #tpu.memory_space<vmem>>, vector<1x2x16xf32>,
    %c0_5 = arith.constant 0 : index
    %c1 = arith.constant 1 : index
    %c0_6 = arith.constant 0 : index
    %5 = vector.load %arg1[%c0_5, %c1, %c0_6] : memref<2x8x16xf32, #tpu.memory_space<vmem>>, vector<2x1x16xf32>
    %6 = vector.shape_cast %5 : vector<2x1x16xf32> to vector<2x16xf32>
    %c1_7 = arith.constant 1 : index
    %c0_8 = arith.constant 0 : index
    %c0_9 = arith.constant 0 : index
    %7 = vector.load %arg12[%c1_7, %c0_8, %c0_9] : memref<8x2x16xf32, #tpu.memory_space<vmem>>, vector<1x2x16xf32>
    %8 = vector.shape_cast %7 : vector<1x2x16xf32> to vector<2x16xf32>
    %9 = vector.shape_cast %6 : vector<2x16xf32> to vector<1x2x16xf32>
    tpu.vector_store %arg12[%c1_7, %c0_8, %c0_9], %9 {strides = array<i32>} : memref<8x2x16xf32, #tpu.memory_space<vmem>>, vector<1x2x16xf32>,
    %c0_10 = arith.constant 0 : index
    %c2 = arith.constant 2 : index
    %c0_11 = arith.constant 0 : index
    %10 = vector.load %arg1[%c0_10, %c2, %c0_11] : memref<2x8x16xf32, #tpu.memory_space<vmem>>, vector<2x1x16xf32>
    %11 = vector.shape_cast %10 : vector<2x1x16xf32> to vector<2x16xf32>
    %c2_12 = arith.constant 2 : index
    %c0_13 = arith.constant 0 : index
    %c0_14 = arith.constant 0 : index
    %12 = vector.load %arg12[%c2_12, %c0_13, %c0_14] : memref<8x2x16xf32, #tpu.memory_space<vmem>>, vector<1x2x16xf32>
    %13 = vector.shape_cast %12 : vector<1x2x16xf32> to vector<2x16xf32>
    %14 = vector.shape_cast %11 : vector<2x16xf32> to vector<1x2x16xf32>
    tpu.vector_store %arg12[%c2_12, %c0_13, %c0_14], %14 {strides = array<i32>} : memref<8x2x16xf32, #tpu.memory_space<vmem>>, vector<1x2x16xf32>,
    %c0_15 = arith.constant 0 : index
    %c3 = arith.constant 3 : index
    %c0_16 = arith.constant 0 : index
    %15 = vector.load %arg1[%c0_15, %c3, %c0_16] : memref<2x8x16xf32, #tpu.memory_space<vmem>>, vector<2x1x16xf32>
    %16 = vector.shape_cast %15 : vector<2x1x16xf32> to vector<2x16xf32>
    %c3_17 = arith.constant 3 : index
    %c0_18 = arith.constant 0 : index
    %c0_19 = arith.constant 0 : index
    %17 = vector.load %arg12[%c3_17, %c0_18, %c0_19] : memref<8x2x16xf32, #tpu.memory_space<vmem>>, vector<1x2x16xf32>
    %18 = vector.shape_cast %17 : vector<1x2x16xf32> to vector<2x16xf32>
    %19 = vector.shape_cast %16 : vector<2x16xf32> to vector<1x2x16xf32>
    tpu.vector_store %arg12[%c3_17, %c0_18, %c0_19], %19 {strides = array<i32>} : memref<8x2x16xf32, #tpu.memory_space<vmem>>, vector<1x2x16xf32>,
    %c0_20 = arith.constant 0 : index
    %c4 = arith.constant 4 : index
    %c0_21 = arith.constant 0 : index
    %20 = vector.load %arg1[%c0_20, %c4, %c0_21] : memref<2x8x16xf32, #tpu.memory_space<vmem>>, vector<2x1x16xf32>
    %21 = vector.shape_cast %20 : vector<2x1x16xf32> to vector<2x16xf32>
    %c4_22 = arith.constant 4 : index
    %c0_23 = arith.constant 0 : index
    %c0_24 = arith.constant 0 : index
    %22 = vector.load %arg12[%c4_22, %c0_23, %c0_24] : memref<8x2x16xf32, #tpu.memory_space<vmem>>, vector<1x2x16xf32>
    %23 = vector.shape_cast %22 : vector<1x2x16xf32> to vector<2x16xf32>
    %24 = vector.shape_cast %21 : vector<2x16xf32> to vector<1x2x16xf32>
    tpu.vector_store %arg12[%c4_22, %c0_23, %c0_24], %24 {strides = array<i32>} : memref<8x2x16xf32, #tpu.memory_space<vmem>>, vector<1x2x16xf32>,
    %c0_25 = arith.constant 0 : index
    %c5 = arith.constant 5 : index
    %c0_26 = arith.constant 0 : index
    %25 = vector.load %arg1[%c0_25, %c5, %c0_26] : memref<2x8x16xf32, #tpu.memory_space<vmem>>, vector<2x1x16xf32>
    %26 = vector.shape_cast %25 : vector<2x1x16xf32> to vector<2x16xf32>
    %c5_27 = arith.constant 5 : index
    %c0_28 = arith.constant 0 : index
    %c0_29 = arith.constant 0 : index
    %27 = vector.load %arg12[%c5_27, %c0_28, %c0_29] : memref<8x2x16xf32, #tpu.memory_space<vmem>>, vector<1x2x16xf32>
    %28 = vector.shape_cast %27 : vector<1x2x16xf32> to vector<2x16xf32>
    %29 = vector.shape_cast %26 : vector<2x16xf32> to vector<1x2x16xf32>
    tpu.vector_store %arg12[%c5_27, %c0_28, %c0_29], %29 {strides = array<i32>} : memref<8x2x16xf32, #tpu.memory_space<vmem>>, vector<1x2x16xf32>,
    %c0_30 = arith.constant 0 : index
    %c6 = arith.constant 6 : index
    %c0_31 = arith.constant 0 : index
    %30 = vector.load %arg1[%c0_30, %c6, %c0_31] : memref<2x8x16xf32, #tpu.memory_space<vmem>>, vector<2x1x16xf32>
    %31 = vector.shape_cast %30 : vector<2x1x16xf32> to vector<2x16xf32>
    %c6_32 = arith.constant 6 : index
    %c0_33 = arith.constant 0 : index
    %c0_34 = arith.constant 0 : index
    %32 = vector.load %arg12[%c6_32, %c0_33, %c0_34] : memref<8x2x16xf32, #tpu.memory_space<vmem>>, vector<1x2x16xf32>
    %33 = vector.shape_cast %32 : vector<1x2x16xf32> to vector<2x16xf32>
    %34 = vector.shape_cast %31 : vector<2x16xf32> to vector<1x2x16xf32>
    tpu.vector_store %arg12[%c6_32, %c0_33, %c0_34], %34 {strides = array<i32>} : memref<8x2x16xf32, #tpu.memory_space<vmem>>, vector<1x2x16xf32>,
    %c0_35 = arith.constant 0 : index
    %c7 = arith.constant 7 : index
    %c0_36 = arith.constant 0 : index
    %35 = vector.load %arg1[%c0_35, %c7, %c0_36] : memref<2x8x16xf32, #tpu.memory_space<vmem>>, vector<2x1x16xf32>
    %36 = vector.shape_cast %35 : vector<2x1x16xf32> to vector<2x16xf32>
    %c7_37 = arith.constant 7 : index
    %c0_38 = arith.constant 0 : index
    %c0_39 = arith.constant 0 : index
    %37 = vector.load %arg12[%c7_37, %c0_38, %c0_39] : memref<8x2x16xf32, #tpu.memory_space<vmem>>, vector<1x2x16xf32>
    %38 = vector.shape_cast %37 : vector<1x2x16xf32> to vector<2x16xf32>
    %39 = vector.shape_cast %36 : vector<2x16xf32> to vector<1x2x16xf32>
    tpu.vector_store %arg12[%c7_37, %c0_38, %c0_39], %39 {strides = array<i32>} : memref<8x2x16xf32, #tpu.memory_space<vmem>>, vector<1x2x16xf32>,
    %c0_40 = arith.constant 0 : index
    %c0_41 = arith.constant 0 : index
    %40 = vector.load %arg2[%c0_40, %c0_41] : memref<16x128xf32, #tpu.memory_space<vmem>>, vector<16x128xf32>
    %c0_42 = arith.constant 0 : index
    %c0_43 = arith.constant 0 : index
    %41 = vector.load %arg3[%c0_42, %c0_43] : memref<32x128xf32, #tpu.memory_space<vmem>>, vector<32x128xf32>
    %c0_44 = arith.constant 0 : index
    %c0_45 = arith.constant 0 : index
    %42 = vector.load %arg4[%c0_44, %c0_45] : memref<1x128xf32, #tpu.memory_space<vmem>>, vector<1x128xf32>
    %c0_46 = arith.constant 0 : index
    %c0_47 = arith.constant 0 : index
    %43 = vector.load %arg5[%c0_46, %c0_47] : memref<32x128xf32, #tpu.memory_space<vmem>>, vector<32x128xf32>
    %c0_48 = arith.constant 0 : index
    %c0_49 = arith.constant 0 : index
    %44 = vector.load %arg6[%c0_48, %c0_49] : memref<32x128xf32, #tpu.memory_space<vmem>>, vector<32x128xf32>
    %c0_50 = arith.constant 0 : index
    %c0_51 = arith.constant 0 : index
    %45 = vector.load %arg7[%c0_50, %c0_51] : memref<1x128xf32, #tpu.memory_space<vmem>>, vector<1x128xf32>
    %cst = arith.constant 0.000000e+00 : f32
    %46 = vector.broadcast %cst : f32 to vector<2x32xf32>
    %c0_i32 = arith.constant 0 : i32
    %47 = arith.index_cast %c0_i32 : i32 to index
    %c0_52 = arith.constant 0 : index
    %c0_53 = arith.constant 0 : index
    %48 = vector.load %arg12[%47, %c0_52, %c0_53] : memref<8x2x16xf32, #tpu.memory_space<vmem>>, vector<1x2x16xf32>
    %49 = vector.shape_cast %48 : vector<1x2x16xf32> to vector<2x16xf32>
    %cst_54 = arith.constant dense<0.000000e+00> : vector<2x128xf32>
    %50 = tpu.matmul %49, %40, %cst_54 {dimension_numbers = #tpu.dot_dimension_numbers<[1], [0], [0], [1], [0, 0, 1, 1], [], []>} : vector<2x16xf32>, vector<16x128xf32>, vector<2x128xf32> -> vector<2x128xf32>
    %cst_55 = arith.constant dense<0.000000e+00> : vector<2x128xf32>
    %51 = tpu.matmul %46, %41, %cst_55 {dimension_numbers = #tpu.dot_dimension_numbers<[1], [0], [0], [1], [0, 0, 1, 1], [], []>} : vector<2x32xf32>, vector<32x128xf32>, vector<2x128xf32> -> vector<2x128xf32>
    %52 = arith.addf %50, %51 : vector<2x128xf32>
    %53 = vector.broadcast %42 : vector<1x128xf32> to vector<2x128xf32>
    %54 = arith.addf %52, %53 : vector<2x128xf32>
    %55 = vector.extract_strided_slice %54 {offsets = [0, 0], sizes = [2, 32], strides = [1, 1]} : vector<2x128xf32> to vector<2x32xf32>
    %56 = arith.negf %55 : vector<2x32xf32>
    %57 = math.exp %56 : vector<2x32xf32>
    %cst_56 = arith.constant 1.000000e+00 : f32
    %58 = vector.broadcast %cst_56 : f32 to vector<2x32xf32>
    %59 = arith.addf %58, %57 : vector<2x32xf32>
    %60 = arith.divf %58, %59 : vector<2x32xf32>
    %61 = vector.extract_strided_slice %54 {offsets = [0, 32], sizes = [2, 32], strides = [1, 1]} : vector<2x128xf32> to vector<2x32xf32>
    %62 = arith.negf %61 : vector<2x32xf32>
    %63 = math.exp %62 : vector<2x32xf32>
    %cst_57 = arith.constant 1.000000e+00 : f32
    %64 = vector.broadcast %cst_57 : f32 to vector<2x32xf32>
    %65 = arith.addf %64, %63 : vector<2x32xf32>
    %66 = arith.divf %64, %65 : vector<2x32xf32>
    %67 = vector.extract_strided_slice %54 {offsets = [0, 64], sizes = [2, 32], strides = [1, 1]} : vector<2x128xf32> to vector<2x32xf32>
    %68 = math.tanh %67 : vector<2x32xf32>
    %69 = vector.extract_strided_slice %54 {offsets = [0, 96], sizes = [2, 32], strides = [1, 1]} : vector<2x128xf32> to vector<2x32xf32>
    %70 = arith.negf %69 : vector<2x32xf32>
    %71 = math.exp %70 : vector<2x32xf32>
    %cst_58 = arith.constant 1.000000e+00 : f32
    %72 = vector.broadcast %cst_58 : f32 to vector<2x32xf32>
    %73 = arith.addf %72, %71 : vector<2x32xf32>
    %74 = arith.divf %72, %73 : vector<2x32xf32>
    %75 = arith.mulf %66, %46 : vector<2x32xf32>
    %76 = arith.mulf %60, %68 : vector<2x32xf32>
    %77 = arith.addf %75, %76 : vector<2x32xf32>
    %78 = math.tanh %77 : vector<2x32xf32>
    %79 = arith.mulf %74, %78 : vector<2x32xf32>
    %cst_59 = arith.constant dense<0.000000e+00> : vector<2x128xf32>
    %80 = tpu.matmul %79, %43, %cst_59 {dimension_numbers = #tpu.dot_dimension_numbers<[1], [0], [0], [1], [0, 0, 1, 1], [], []>} : vector<2x32xf32>, vector<32x128xf32>, vector<2x128xf32> -> vector<2x128xf32>
    %cst_60 = arith.constant dense<0.000000e+00> : vector<2x128xf32>
    %81 = tpu.matmul %46, %44, %cst_60 {dimension_numbers = #tpu.dot_dimension_numbers<[1], [0], [0], [1], [0, 0, 1, 1], [], []>} : vector<2x32xf32>, vector<32x128xf32>, vector<2x128xf32> -> vector<2x128xf32>
    %82 = arith.addf %80, %81 : vector<2x128xf32>
    %83 = vector.broadcast %45 : vector<1x128xf32> to vector<2x128xf32>
    %84 = arith.addf %82, %83 : vector<2x128xf32>
    %85 = vector.extract_strided_slice %84 {offsets = [0, 0], sizes = [2, 32], strides = [1, 1]} : vector<2x128xf32> to vector<2x32xf32>
    %86 = arith.negf %85 : vector<2x32xf32>
    %87 = math.exp %86 : vector<2x32xf32>
    %cst_61 = arith.constant 1.000000e+00 : f32
    %88 = vector.broadcast %cst_61 : f32 to vector<2x32xf32>
    %89 = arith.addf %88, %87 : vector<2x32xf32>
    %90 = arith.divf %88, %89 : vector<2x32xf32>
    %91 = vector.extract_strided_slice %84 {offsets = [0, 32], sizes = [2, 32], strides = [1, 1]} : vector<2x128xf32> to vector<2x32xf32>
    %92 = arith.negf %91 : vector<2x32xf32>
    %93 = math.exp %92 : vector<2x32xf32>
    %cst_62 = arith.constant 1.000000e+00 : f32
    %94 = vector.broadcast %cst_62 : f32 to vector<2x32xf32>
    %95 = arith.addf %94, %93 : vector<2x32xf32>
    %96 = arith.divf %94, %95 : vector<2x32xf32>
    %97 = vector.extract_strided_slice %84 {offsets = [0, 64], sizes = [2, 32], strides = [1, 1]} : vector<2x128xf32> to vector<2x32xf32>
    %98 = math.tanh %97 : vector<2x32xf32>
    %99 = vector.extract_strided_slice %84 {offsets = [0, 96], sizes = [2, 32], strides = [1, 1]} : vector<2x128xf32> to vector<2x32xf32>
    %100 = arith.negf %99 : vector<2x32xf32>
    %101 = math.exp %100 : vector<2x32xf32>
    %cst_63 = arith.constant 1.000000e+00 : f32
    %102 = vector.broadcast %cst_63 : f32 to vector<2x32xf32>
    %103 = arith.addf %102, %101 : vector<2x32xf32>
    %104 = arith.divf %102, %103 : vector<2x32xf32>
    %105 = arith.mulf %96, %46 : vector<2x32xf32>
    %106 = arith.mulf %90, %98 : vector<2x32xf32>
    %107 = arith.addf %105, %106 : vector<2x32xf32>
    %108 = math.tanh %107 : vector<2x32xf32>
    %109 = arith.mulf %104, %108 : vector<2x32xf32>
    %110 = arith.index_cast %c0_i32 : i32 to index
    %c0_64 = arith.constant 0 : index
    %c0_65 = arith.constant 0 : index
    %111 = vector.load %arg13[%110, %c0_64, %c0_65] : memref<8x2x32xf32, #tpu.memory_space<vmem>>, vector<1x2x32xf32>
    %112 = vector.shape_cast %111 : vector<1x2x32xf32> to vector<2x32xf32>
    %113 = vector.shape_cast %109 : vector<2x32xf32> to vector<1x2x32xf32>
    tpu.vector_store %arg13[%110, %c0_64, %c0_65], %113 {strides = array<i32>} : memref<8x2x32xf32, #tpu.memory_space<vmem>>, vector<1x2x32xf32>,
    %c1_i32 = arith.constant 1 : i32
    %114 = arith.index_cast %c1_i32 : i32 to index
    %c0_66 = arith.constant 0 : index
    %c0_67 = arith.constant 0 : index
    %115 = vector.load %arg12[%114, %c0_66, %c0_67] : memref<8x2x16xf32, #tpu.memory_space<vmem>>, vector<1x2x16xf32>
    %116 = vector.shape_cast %115 : vector<1x2x16xf32> to vector<2x16xf32>
    %cst_68 = arith.constant dense<0.000000e+00> : vector<2x128xf32>
    %117 = tpu.matmul %116, %40, %cst_68 {dimension_numbers = #tpu.dot_dimension_numbers<[1], [0], [0], [1], [0, 0, 1, 1], [], []>} : vector<2x16xf32>, vector<16x128xf32>, vector<2x128xf32> -> vector<2x128xf32>
    %cst_69 = arith.constant dense<0.000000e+00> : vector<2x128xf32>
    %118 = tpu.matmul %79, %41, %cst_69 {dimension_numbers = #tpu.dot_dimension_numbers<[1], [0], [0], [1], [0, 0, 1, 1], [], []>} : vector<2x32xf32>, vector<32x128xf32>, vector<2x128xf32> -> vector<2x128xf32>
    %119 = arith.addf %117, %118 : vector<2x128xf32>
    %120 = vector.broadcast %42 : vector<1x128xf32> to vector<2x128xf32>
    %121 = arith.addf %119, %120 : vector<2x128xf32>
    %122 = vector.extract_strided_slice %121 {offsets = [0, 0], sizes = [2, 32], strides = [1, 1]} : vector<2x128xf32> to vector<2x32xf32>
    %123 = arith.negf %122 : vector<2x32xf32>
    %124 = math.exp %123 : vector<2x32xf32>
    %cst_70 = arith.constant 1.000000e+00 : f32
    %125 = vector.broadcast %cst_70 : f32 to vector<2x32xf32>
    %126 = arith.addf %125, %124 : vector<2x32xf32>
    %127 = arith.divf %125, %126 : vector<2x32xf32>
    %128 = vector.extract_strided_slice %121 {offsets = [0, 32], sizes = [2, 32], strides = [1, 1]} : vector<2x128xf32> to vector<2x32xf32>
    %129 = arith.negf %128 : vector<2x32xf32>
    %130 = math.exp %129 : vector<2x32xf32>
    %cst_71 = arith.constant 1.000000e+00 : f32
    %131 = vector.broadcast %cst_71 : f32 to vector<2x32xf32>
    %132 = arith.addf %131, %130 : vector<2x32xf32>
    %133 = arith.divf %131, %132 : vector<2x32xf32>
    %134 = vector.extract_strided_slice %121 {offsets = [0, 64], sizes = [2, 32], strides = [1, 1]} : vector<2x128xf32> to vector<2x32xf32>
    %135 = math.tanh %134 : vector<2x32xf32>
    %136 = vector.extract_strided_slice %121 {offsets = [0, 96], sizes = [2, 32], strides = [1, 1]} : vector<2x128xf32> to vector<2x32xf32>
    %137 = arith.negf %136 : vector<2x32xf32>
    %138 = math.exp %137 : vector<2x32xf32>
    %cst_72 = arith.constant 1.000000e+00 : f32
    %139 = vector.broadcast %cst_72 : f32 to vector<2x32xf32>
    %140 = arith.addf %139, %138 : vector<2x32xf32>
    %141 = arith.divf %139, %140 : vector<2x32xf32>
    %142 = arith.mulf %133, %77 : vector<2x32xf32>
    %143 = arith.mulf %127, %135 : vector<2x32xf32>
    %144 = arith.addf %142, %143 : vector<2x32xf32>
    %145 = math.tanh %144 : vector<2x32xf32>
    %146 = arith.mulf %141, %145 : vector<2x32xf32>
    %cst_73 = arith.constant dense<0.000000e+00> : vector<2x128xf32>
    %147 = tpu.matmul %146, %43, %cst_73 {dimension_numbers = #tpu.dot_dimension_numbers<[1], [0], [0], [1], [0, 0, 1, 1], [], []>} : vector<2x32xf32>, vector<32x128xf32>, vector<2x128xf32> -> vector<2x128xf32>
    %cst_74 = arith.constant dense<0.000000e+00> : vector<2x128xf32>
    %148 = tpu.matmul %109, %44, %cst_74 {dimension_numbers = #tpu.dot_dimension_numbers<[1], [0], [0], [1], [0, 0, 1, 1], [], []>} : vector<2x32xf32>, vector<32x128xf32>, vector<2x128xf32> -> vector<2x128xf32>
    %149 = arith.addf %147, %148 : vector<2x128xf32>
    %150 = vector.broadcast %45 : vector<1x128xf32> to vector<2x128xf32>
    %151 = arith.addf %149, %150 : vector<2x128xf32>
    %152 = vector.extract_strided_slice %151 {offsets = [0, 0], sizes = [2, 32], strides = [1, 1]} : vector<2x128xf32> to vector<2x32xf32>
    %153 = arith.negf %152 : vector<2x32xf32>
    %154 = math.exp %153 : vector<2x32xf32>
    %cst_75 = arith.constant 1.000000e+00 : f32
    %155 = vector.broadcast %cst_75 : f32 to vector<2x32xf32>
    %156 = arith.addf %155, %154 : vector<2x32xf32>
    %157 = arith.divf %155, %156 : vector<2x32xf32>
    %158 = vector.extract_strided_slice %151 {offsets = [0, 32], sizes = [2, 32], strides = [1, 1]} : vector<2x128xf32> to vector<2x32xf32>
    %159 = arith.negf %158 : vector<2x32xf32>
    %160 = math.exp %159 : vector<2x32xf32>
    %cst_76 = arith.constant 1.000000e+00 : f32
    %161 = vector.broadcast %cst_76 : f32 to vector<2x32xf32>
    %162 = arith.addf %161, %160 : vector<2x32xf32>
    %163 = arith.divf %161, %162 : vector<2x32xf32>
    %164 = vector.extract_strided_slice %151 {offsets = [0, 64], sizes = [2, 32], strides = [1, 1]} : vector<2x128xf32> to vector<2x32xf32>
    %165 = math.tanh %164 : vector<2x32xf32>
    %166 = vector.extract_strided_slice %151 {offsets = [0, 96], sizes = [2, 32], strides = [1, 1]} : vector<2x128xf32> to vector<2x32xf32>
    %167 = arith.negf %166 : vector<2x32xf32>
    %168 = math.exp %167 : vector<2x32xf32>
    %cst_77 = arith.constant 1.000000e+00 : f32
    %169 = vector.broadcast %cst_77 : f32 to vector<2x32xf32>
    %170 = arith.addf %169, %168 : vector<2x32xf32>
    %171 = arith.divf %169, %170 : vector<2x32xf32>
    %172 = arith.mulf %163, %107 : vector<2x32xf32>
    %173 = arith.mulf %157, %165 : vector<2x32xf32>
    %174 = arith.addf %172, %173 : vector<2x32xf32>
    %175 = math.tanh %174 : vector<2x32xf32>
    %176 = arith.mulf %171, %175 : vector<2x32xf32>
    %177 = arith.index_cast %c1_i32 : i32 to index
    %c0_78 = arith.constant 0 : index
    %c0_79 = arith.constant 0 : index
    %178 = vector.load %arg13[%177, %c0_78, %c0_79] : memref<8x2x32xf32, #tpu.memory_space<vmem>>, vector<1x2x32xf32>
    %179 = vector.shape_cast %178 : vector<1x2x32xf32> to vector<2x32xf32>
    %180 = vector.shape_cast %176 : vector<2x32xf32> to vector<1x2x32xf32>
    tpu.vector_store %arg13[%177, %c0_78, %c0_79], %180 {strides = array<i32>} : memref<8x2x32xf32, #tpu.memory_space<vmem>>, vector<1x2x32xf32>,
    %c2_i32 = arith.constant 2 : i32
    %181 = arith.index_cast %c2_i32 : i32 to index
    %c0_80 = arith.constant 0 : index
    %c0_81 = arith.constant 0 : index
    %182 = vector.load %arg12[%181, %c0_80, %c0_81] : memref<8x2x16xf32, #tpu.memory_space<vmem>>, vector<1x2x16xf32>
    %183 = vector.shape_cast %182 : vector<1x2x16xf32> to vector<2x16xf32>
    %cst_82 = arith.constant dense<0.000000e+00> : vector<2x128xf32>
    %184 = tpu.matmul %183, %40, %cst_82 {dimension_numbers = #tpu.dot_dimension_numbers<[1], [0], [0], [1], [0, 0, 1, 1], [], []>} : vector<2x16xf32>, vector<16x128xf32>, vector<2x128xf32> -> vector<2x128xf32>
    %cst_83 = arith.constant dense<0.000000e+00> : vector<2x128xf32>
    %185 = tpu.matmul %146, %41, %cst_83 {dimension_numbers = #tpu.dot_dimension_numbers<[1], [0], [0], [1], [0, 0, 1, 1], [], []>} : vector<2x32xf32>, vector<32x128xf32>, vector<2x128xf32> -> vector<2x128xf32>
    %186 = arith.addf %184, %185 : vector<2x128xf32>
    %187 = vector.broadcast %42 : vector<1x128xf32> to vector<2x128xf32>
    %188 = arith.addf %186, %187 : vector<2x128xf32>
    %189 = vector.extract_strided_slice %188 {offsets = [0, 0], sizes = [2, 32], strides = [1, 1]} : vector<2x128xf32> to vector<2x32xf32>
    %190 = arith.negf %189 : vector<2x32xf32>
    %191 = math.exp %190 : vector<2x32xf32>
    %cst_84 = arith.constant 1.000000e+00 : f32
    %192 = vector.broadcast %cst_84 : f32 to vector<2x32xf32>
    %193 = arith.addf %192, %191 : vector<2x32xf32>
    %194 = arith.divf %192, %193 : vector<2x32xf32>
    %195 = vector.extract_strided_slice %188 {offsets = [0, 32], sizes = [2, 32], strides = [1, 1]} : vector<2x128xf32> to vector<2x32xf32>
    %196 = arith.negf %195 : vector<2x32xf32>
    %197 = math.exp %196 : vector<2x32xf32>
    %cst_85 = arith.constant 1.000000e+00 : f32
    %198 = vector.broadcast %cst_85 : f32 to vector<2x32xf32>
    %199 = arith.addf %198, %197 : vector<2x32xf32>
    %200 = arith.divf %198, %199 : vector<2x32xf32>
    %201 = vector.extract_strided_slice %188 {offsets = [0, 64], sizes = [2, 32], strides = [1, 1]} : vector<2x128xf32> to vector<2x32xf32>
    %202 = math.tanh %201 : vector<2x32xf32>
    %203 = vector.extract_strided_slice %188 {offsets = [0, 96], sizes = [2, 32], strides = [1, 1]} : vector<2x128xf32> to vector<2x32xf32>
    %204 = arith.negf %203 : vector<2x32xf32>
    %205 = math.exp %204 : vector<2x32xf32>
    %cst_86 = arith.constant 1.000000e+00 : f32
    %206 = vector.broadcast %cst_86 : f32 to vector<2x32xf32>
    %207 = arith.addf %206, %205 : vector<2x32xf32>
    %208 = arith.divf %206, %207 : vector<2x32xf32>
    %209 = arith.mulf %200, %144 : vector<2x32xf32>
    %210 = arith.mulf %194, %202 : vector<2x32xf32>
    %211 = arith.addf %209, %210 : vector<2x32xf32>
    %212 = math.tanh %211 : vector<2x32xf32>
    %213 = arith.mulf %208, %212 : vector<2x32xf32>
    %cst_87 = arith.constant dense<0.000000e+00> : vector<2x128xf32>
    %214 = tpu.matmul %213, %43, %cst_87 {dimension_numbers = #tpu.dot_dimension_numbers<[1], [0], [0], [1], [0, 0, 1, 1], [], []>} : vector<2x32xf32>, vector<32x128xf32>, vector<2x128xf32> -> vector<2x128xf32>
    %cst_88 = arith.constant dense<0.000000e+00> : vector<2x128xf32>
    %215 = tpu.matmul %176, %44, %cst_88 {dimension_numbers = #tpu.dot_dimension_numbers<[1], [0], [0], [1], [0, 0, 1, 1], [], []>} : vector<2x32xf32>, vector<32x128xf32>, vector<2x128xf32> -> vector<2x128xf32>
    %216 = arith.addf %214, %215 : vector<2x128xf32>
    %217 = vector.broadcast %45 : vector<1x128xf32> to vector<2x128xf32>
    %218 = arith.addf %216, %217 : vector<2x128xf32>
    %219 = vector.extract_strided_slice %218 {offsets = [0, 0], sizes = [2, 32], strides = [1, 1]} : vector<2x128xf32> to vector<2x32xf32>
    %220 = arith.negf %219 : vector<2x32xf32>
    %221 = math.exp %220 : vector<2x32xf32>
    %cst_89 = arith.constant 1.000000e+00 : f32
    %222 = vector.broadcast %cst_89 : f32 to vector<2x32xf32>
    %223 = arith.addf %222, %221 : vector<2x32xf32>
    %224 = arith.divf %222, %223 : vector<2x32xf32>
    %225 = vector.extract_strided_slice %218 {offsets = [0, 32], sizes = [2, 32], strides = [1, 1]} : vector<2x128xf32> to vector<2x32xf32>
    %226 = arith.negf %225 : vector<2x32xf32>
    %227 = math.exp %226 : vector<2x32xf32>
    %cst_90 = arith.constant 1.000000e+00 : f32
    %228 = vector.broadcast %cst_90 : f32 to vector<2x32xf32>
    %229 = arith.addf %228, %227 : vector<2x32xf32>
    %230 = arith.divf %228, %229 : vector<2x32xf32>
    %231 = vector.extract_strided_slice %218 {offsets = [0, 64], sizes = [2, 32], strides = [1, 1]} : vector<2x128xf32> to vector<2x32xf32>
    %232 = math.tanh %231 : vector<2x32xf32>
    %233 = vector.extract_strided_slice %218 {offsets = [0, 96], sizes = [2, 32], strides = [1, 1]} : vector<2x128xf32> to vector<2x32xf32>
    %234 = arith.negf %233 : vector<2x32xf32>
    %235 = math.exp %234 : vector<2x32xf32>
    %cst_91 = arith.constant 1.000000e+00 : f32
    %236 = vector.broadcast %cst_91 : f32 to vector<2x32xf32>
    %237 = arith.addf %236, %235 : vector<2x32xf32>
    %238 = arith.divf %236, %237 : vector<2x32xf32>
    %239 = arith.mulf %230, %174 : vector<2x32xf32>
    %240 = arith.mulf %224, %232 : vector<2x32xf32>
    %241 = arith.addf %239, %240 : vector<2x32xf32>
    %242 = math.tanh %241 : vector<2x32xf32>
    %243 = arith.mulf %238, %242 : vector<2x32xf32>
    %244 = arith.index_cast %c2_i32 : i32 to index
    %c0_92 = arith.constant 0 : index
    %c0_93 = arith.constant 0 : index
    %245 = vector.load %arg13[%244, %c0_92, %c0_93] : memref<8x2x32xf32, #tpu.memory_space<vmem>>, vector<1x2x32xf32>
    %246 = vector.shape_cast %245 : vector<1x2x32xf32> to vector<2x32xf32>
    %247 = vector.shape_cast %243 : vector<2x32xf32> to vector<1x2x32xf32>
    tpu.vector_store %arg13[%244, %c0_92, %c0_93], %247 {strides = array<i32>} : memref<8x2x32xf32, #tpu.memory_space<vmem>>, vector<1x2x32xf32>,
    %c3_i32 = arith.constant 3 : i32
    %248 = arith.index_cast %c3_i32 : i32 to index
    %c0_94 = arith.constant 0 : index
    %c0_95 = arith.constant 0 : index
    %249 = vector.load %arg12[%248, %c0_94, %c0_95] : memref<8x2x16xf32, #tpu.memory_space<vmem>>, vector<1x2x16xf32>
    %250 = vector.shape_cast %249 : vector<1x2x16xf32> to vector<2x16xf32>
    %cst_96 = arith.constant dense<0.000000e+00> : vector<2x128xf32>
    %251 = tpu.matmul %250, %40, %cst_96 {dimension_numbers = #tpu.dot_dimension_numbers<[1], [0], [0], [1], [0, 0, 1, 1], [], []>} : vector<2x16xf32>, vector<16x128xf32>, vector<2x128xf32> -> vector<2x128xf32>
    %cst_97 = arith.constant dense<0.000000e+00> : vector<2x128xf32>
    %252 = tpu.matmul %213, %41, %cst_97 {dimension_numbers = #tpu.dot_dimension_numbers<[1], [0], [0], [1], [0, 0, 1, 1], [], []>} : vector<2x32xf32>, vector<32x128xf32>, vector<2x128xf32> -> vector<2x128xf32>
    %253 = arith.addf %251, %252 : vector<2x128xf32>
    %254 = vector.broadcast %42 : vector<1x128xf32> to vector<2x128xf32>
    %255 = arith.addf %253, %254 : vector<2x128xf32>
    %256 = vector.extract_strided_slice %255 {offsets = [0, 0], sizes = [2, 32], strides = [1, 1]} : vector<2x128xf32> to vector<2x32xf32>
    %257 = arith.negf %256 : vector<2x32xf32>
    %258 = math.exp %257 : vector<2x32xf32>
    %cst_98 = arith.constant 1.000000e+00 : f32
    %259 = vector.broadcast %cst_98 : f32 to vector<2x32xf32>
    %260 = arith.addf %259, %258 : vector<2x32xf32>
    %261 = arith.divf %259, %260 : vector<2x32xf32>
    %262 = vector.extract_strided_slice %255 {offsets = [0, 32], sizes = [2, 32], strides = [1, 1]} : vector<2x128xf32> to vector<2x32xf32>
    %263 = arith.negf %262 : vector<2x32xf32>
    %264 = math.exp %263 : vector<2x32xf32>
    %cst_99 = arith.constant 1.000000e+00 : f32
    %265 = vector.broadcast %cst_99 : f32 to vector<2x32xf32>
    %266 = arith.addf %265, %264 : vector<2x32xf32>
    %267 = arith.divf %265, %266 : vector<2x32xf32>
    %268 = vector.extract_strided_slice %255 {offsets = [0, 64], sizes = [2, 32], strides = [1, 1]} : vector<2x128xf32> to vector<2x32xf32>
    %269 = math.tanh %268 : vector<2x32xf32>
    %270 = vector.extract_strided_slice %255 {offsets = [0, 96], sizes = [2, 32], strides = [1, 1]} : vector<2x128xf32> to vector<2x32xf32>
    %271 = arith.negf %270 : vector<2x32xf32>
    %272 = math.exp %271 : vector<2x32xf32>
    %cst_100 = arith.constant 1.000000e+00 : f32
    %273 = vector.broadcast %cst_100 : f32 to vector<2x32xf32>
    %274 = arith.addf %273, %272 : vector<2x32xf32>
    %275 = arith.divf %273, %274 : vector<2x32xf32>
    %276 = arith.mulf %267, %211 : vector<2x32xf32>
    %277 = arith.mulf %261, %269 : vector<2x32xf32>
    %278 = arith.addf %276, %277 : vector<2x32xf32>
    %279 = math.tanh %278 : vector<2x32xf32>
    %280 = arith.mulf %275, %279 : vector<2x32xf32>
    %cst_101 = arith.constant dense<0.000000e+00> : vector<2x128xf32>
    %281 = tpu.matmul %280, %43, %cst_101 {dimension_numbers = #tpu.dot_dimension_numbers<[1], [0], [0], [1], [0, 0, 1, 1], [], []>} : vector<2x32xf32>, vector<32x128xf32>, vector<2x128xf32> -> vector<2x128xf32>
    %cst_102 = arith.constant dense<0.000000e+00> : vector<2x128xf32>
    %282 = tpu.matmul %243, %44, %cst_102 {dimension_numbers = #tpu.dot_dimension_numbers<[1], [0], [0], [1], [0, 0, 1, 1], [], []>} : vector<2x32xf32>, vector<32x128xf32>, vector<2x128xf32> -> vector<2x128xf32>
    %283 = arith.addf %281, %282 : vector<2x128xf32>
    %284 = vector.broadcast %45 : vector<1x128xf32> to vector<2x128xf32>
    %285 = arith.addf %283, %284 : vector<2x128xf32>
    %286 = vector.extract_strided_slice %285 {offsets = [0, 0], sizes = [2, 32], strides = [1, 1]} : vector<2x128xf32> to vector<2x32xf32>
    %287 = arith.negf %286 : vector<2x32xf32>
    %288 = math.exp %287 : vector<2x32xf32>
    %cst_103 = arith.constant 1.000000e+00 : f32
    %289 = vector.broadcast %cst_103 : f32 to vector<2x32xf32>
    %290 = arith.addf %289, %288 : vector<2x32xf32>
    %291 = arith.divf %289, %290 : vector<2x32xf32>
    %292 = vector.extract_strided_slice %285 {offsets = [0, 32], sizes = [2, 32], strides = [1, 1]} : vector<2x128xf32> to vector<2x32xf32>
    %293 = arith.negf %292 : vector<2x32xf32>
    %294 = math.exp %293 : vector<2x32xf32>
    %cst_104 = arith.constant 1.000000e+00 : f32
    %295 = vector.broadcast %cst_104 : f32 to vector<2x32xf32>
    %296 = arith.addf %295, %294 : vector<2x32xf32>
    %297 = arith.divf %295, %296 : vector<2x32xf32>
    %298 = vector.extract_strided_slice %285 {offsets = [0, 64], sizes = [2, 32], strides = [1, 1]} : vector<2x128xf32> to vector<2x32xf32>
    %299 = math.tanh %298 : vector<2x32xf32>
    %300 = vector.extract_strided_slice %285 {offsets = [0, 96], sizes = [2, 32], strides = [1, 1]} : vector<2x128xf32> to vector<2x32xf32>
    %301 = arith.negf %300 : vector<2x32xf32>
    %302 = math.exp %301 : vector<2x32xf32>
    %cst_105 = arith.constant 1.000000e+00 : f32
    %303 = vector.broadcast %cst_105 : f32 to vector<2x32xf32>
    %304 = arith.addf %303, %302 : vector<2x32xf32>
    %305 = arith.divf %303, %304 : vector<2x32xf32>
    %306 = arith.mulf %297, %241 : vector<2x32xf32>
    %307 = arith.mulf %291, %299 : vector<2x32xf32>
    %308 = arith.addf %306, %307 : vector<2x32xf32>
    %309 = math.tanh %308 : vector<2x32xf32>
    %310 = arith.mulf %305, %309 : vector<2x32xf32>
    %311 = arith.index_cast %c3_i32 : i32 to index
    %c0_106 = arith.constant 0 : index
    %c0_107 = arith.constant 0 : index
    %312 = vector.load %arg13[%311, %c0_106, %c0_107] : memref<8x2x32xf32, #tpu.memory_space<vmem>>, vector<1x2x32xf32>
    %313 = vector.shape_cast %312 : vector<1x2x32xf32> to vector<2x32xf32>
    %314 = vector.shape_cast %310 : vector<2x32xf32> to vector<1x2x32xf32>
    tpu.vector_store %arg13[%311, %c0_106, %c0_107], %314 {strides = array<i32>} : memref<8x2x32xf32, #tpu.memory_space<vmem>>, vector<1x2x32xf32>,
    %c4_i32 = arith.constant 4 : i32
    %315 = arith.index_cast %c4_i32 : i32 to index
    %c0_108 = arith.constant 0 : index
    %c0_109 = arith.constant 0 : index
    %316 = vector.load %arg12[%315, %c0_108, %c0_109] : memref<8x2x16xf32, #tpu.memory_space<vmem>>, vector<1x2x16xf32>
    %317 = vector.shape_cast %316 : vector<1x2x16xf32> to vector<2x16xf32>
    %cst_110 = arith.constant dense<0.000000e+00> : vector<2x128xf32>
    %318 = tpu.matmul %317, %40, %cst_110 {dimension_numbers = #tpu.dot_dimension_numbers<[1], [0], [0], [1], [0, 0, 1, 1], [], []>} : vector<2x16xf32>, vector<16x128xf32>, vector<2x128xf32> -> vector<2x128xf32>
    %cst_111 = arith.constant dense<0.000000e+00> : vector<2x128xf32>
    %319 = tpu.matmul %280, %41, %cst_111 {dimension_numbers = #tpu.dot_dimension_numbers<[1], [0], [0], [1], [0, 0, 1, 1], [], []>} : vector<2x32xf32>, vector<32x128xf32>, vector<2x128xf32> -> vector<2x128xf32>
    %320 = arith.addf %318, %319 : vector<2x128xf32>
    %321 = vector.broadcast %42 : vector<1x128xf32> to vector<2x128xf32>
    %322 = arith.addf %320, %321 : vector<2x128xf32>
    %323 = vector.extract_strided_slice %322 {offsets = [0, 0], sizes = [2, 32], strides = [1, 1]} : vector<2x128xf32> to vector<2x32xf32>
    %324 = arith.negf %323 : vector<2x32xf32>
    %325 = math.exp %324 : vector<2x32xf32>
    %cst_112 = arith.constant 1.000000e+00 : f32
    %326 = vector.broadcast %cst_112 : f32 to vector<2x32xf32>
    %327 = arith.addf %326, %325 : vector<2x32xf32>
    %328 = arith.divf %326, %327 : vector<2x32xf32>
    %329 = vector.extract_strided_slice %322 {offsets = [0, 32], sizes = [2, 32], strides = [1, 1]} : vector<2x128xf32> to vector<2x32xf32>
    %330 = arith.negf %329 : vector<2x32xf32>
    %331 = math.exp %330 : vector<2x32xf32>
    %cst_113 = arith.constant 1.000000e+00 : f32
    %332 = vector.broadcast %cst_113 : f32 to vector<2x32xf32>
    %333 = arith.addf %332, %331 : vector<2x32xf32>
    %334 = arith.divf %332, %333 : vector<2x32xf32>
    %335 = vector.extract_strided_slice %322 {offsets = [0, 64], sizes = [2, 32], strides = [1, 1]} : vector<2x128xf32> to vector<2x32xf32>
    %336 = math.tanh %335 : vector<2x32xf32>
    %337 = vector.extract_strided_slice %322 {offsets = [0, 96], sizes = [2, 32], strides = [1, 1]} : vector<2x128xf32> to vector<2x32xf32>
    %338 = arith.negf %337 : vector<2x32xf32>
    %339 = math.exp %338 : vector<2x32xf32>
    %cst_114 = arith.constant 1.000000e+00 : f32
    %340 = vector.broadcast %cst_114 : f32 to vector<2x32xf32>
    %341 = arith.addf %340, %339 : vector<2x32xf32>
    %342 = arith.divf %340, %341 : vector<2x32xf32>
    %343 = arith.mulf %334, %278 : vector<2x32xf32>
    %344 = arith.mulf %328, %336 : vector<2x32xf32>
    %345 = arith.addf %343, %344 : vector<2x32xf32>
    %346 = math.tanh %345 : vector<2x32xf32>
    %347 = arith.mulf %342, %346 : vector<2x32xf32>
    %cst_115 = arith.constant dense<0.000000e+00> : vector<2x128xf32>
    %348 = tpu.matmul %347, %43, %cst_115 {dimension_numbers = #tpu.dot_dimension_numbers<[1], [0], [0], [1], [0, 0, 1, 1], [], []>} : vector<2x32xf32>, vector<32x128xf32>, vector<2x128xf32> -> vector<2x128xf32>
    %cst_116 = arith.constant dense<0.000000e+00> : vector<2x128xf32>
    %349 = tpu.matmul %310, %44, %cst_116 {dimension_numbers = #tpu.dot_dimension_numbers<[1], [0], [0], [1], [0, 0, 1, 1], [], []>} : vector<2x32xf32>, vector<32x128xf32>, vector<2x128xf32> -> vector<2x128xf32>
    %350 = arith.addf %348, %349 : vector<2x128xf32>
    %351 = vector.broadcast %45 : vector<1x128xf32> to vector<2x128xf32>
    %352 = arith.addf %350, %351 : vector<2x128xf32>
    %353 = vector.extract_strided_slice %352 {offsets = [0, 0], sizes = [2, 32], strides = [1, 1]} : vector<2x128xf32> to vector<2x32xf32>
    %354 = arith.negf %353 : vector<2x32xf32>
    %355 = math.exp %354 : vector<2x32xf32>
    %cst_117 = arith.constant 1.000000e+00 : f32
    %356 = vector.broadcast %cst_117 : f32 to vector<2x32xf32>
    %357 = arith.addf %356, %355 : vector<2x32xf32>
    %358 = arith.divf %356, %357 : vector<2x32xf32>
    %359 = vector.extract_strided_slice %352 {offsets = [0, 32], sizes = [2, 32], strides = [1, 1]} : vector<2x128xf32> to vector<2x32xf32>
    %360 = arith.negf %359 : vector<2x32xf32>
    %361 = math.exp %360 : vector<2x32xf32>
    %cst_118 = arith.constant 1.000000e+00 : f32
    %362 = vector.broadcast %cst_118 : f32 to vector<2x32xf32>
    %363 = arith.addf %362, %361 : vector<2x32xf32>
    %364 = arith.divf %362, %363 : vector<2x32xf32>
    %365 = vector.extract_strided_slice %352 {offsets = [0, 64], sizes = [2, 32], strides = [1, 1]} : vector<2x128xf32> to vector<2x32xf32>
    %366 = math.tanh %365 : vector<2x32xf32>
    %367 = vector.extract_strided_slice %352 {offsets = [0, 96], sizes = [2, 32], strides = [1, 1]} : vector<2x128xf32> to vector<2x32xf32>
    %368 = arith.negf %367 : vector<2x32xf32>
    %369 = math.exp %368 : vector<2x32xf32>
    %cst_119 = arith.constant 1.000000e+00 : f32
    %370 = vector.broadcast %cst_119 : f32 to vector<2x32xf32>
    %371 = arith.addf %370, %369 : vector<2x32xf32>
    %372 = arith.divf %370, %371 : vector<2x32xf32>
    %373 = arith.mulf %364, %308 : vector<2x32xf32>
    %374 = arith.mulf %358, %366 : vector<2x32xf32>
    %375 = arith.addf %373, %374 : vector<2x32xf32>
    %376 = math.tanh %375 : vector<2x32xf32>
    %377 = arith.mulf %372, %376 : vector<2x32xf32>
    %378 = arith.index_cast %c4_i32 : i32 to index
    %c0_120 = arith.constant 0 : index
    %c0_121 = arith.constant 0 : index
    %379 = vector.load %arg13[%378, %c0_120, %c0_121] : memref<8x2x32xf32, #tpu.memory_space<vmem>>, vector<1x2x32xf32>
    %380 = vector.shape_cast %379 : vector<1x2x32xf32> to vector<2x32xf32>
    %381 = vector.shape_cast %377 : vector<2x32xf32> to vector<1x2x32xf32>
    tpu.vector_store %arg13[%378, %c0_120, %c0_121], %381 {strides = array<i32>} : memref<8x2x32xf32, #tpu.memory_space<vmem>>, vector<1x2x32xf32>,
    %c5_i32 = arith.constant 5 : i32
    %382 = arith.index_cast %c5_i32 : i32 to index
    %c0_122 = arith.constant 0 : index
    %c0_123 = arith.constant 0 : index
    %383 = vector.load %arg12[%382, %c0_122, %c0_123] : memref<8x2x16xf32, #tpu.memory_space<vmem>>, vector<1x2x16xf32>
    %384 = vector.shape_cast %383 : vector<1x2x16xf32> to vector<2x16xf32>
    %cst_124 = arith.constant dense<0.000000e+00> : vector<2x128xf32>
    %385 = tpu.matmul %384, %40, %cst_124 {dimension_numbers = #tpu.dot_dimension_numbers<[1], [0], [0], [1], [0, 0, 1, 1], [], []>} : vector<2x16xf32>, vector<16x128xf32>, vector<2x128xf32> -> vector<2x128xf32>
    %cst_125 = arith.constant dense<0.000000e+00> : vector<2x128xf32>
    %386 = tpu.matmul %347, %41, %cst_125 {dimension_numbers = #tpu.dot_dimension_numbers<[1], [0], [0], [1], [0, 0, 1, 1], [], []>} : vector<2x32xf32>, vector<32x128xf32>, vector<2x128xf32> -> vector<2x128xf32>
    %387 = arith.addf %385, %386 : vector<2x128xf32>
    %388 = vector.broadcast %42 : vector<1x128xf32> to vector<2x128xf32>
    %389 = arith.addf %387, %388 : vector<2x128xf32>
    %390 = vector.extract_strided_slice %389 {offsets = [0, 0], sizes = [2, 32], strides = [1, 1]} : vector<2x128xf32> to vector<2x32xf32>
    %391 = arith.negf %390 : vector<2x32xf32>
    %392 = math.exp %391 : vector<2x32xf32>
    %cst_126 = arith.constant 1.000000e+00 : f32
    %393 = vector.broadcast %cst_126 : f32 to vector<2x32xf32>
    %394 = arith.addf %393, %392 : vector<2x32xf32>
    %395 = arith.divf %393, %394 : vector<2x32xf32>
    %396 = vector.extract_strided_slice %389 {offsets = [0, 32], sizes = [2, 32], strides = [1, 1]} : vector<2x128xf32> to vector<2x32xf32>
    %397 = arith.negf %396 : vector<2x32xf32>
    %398 = math.exp %397 : vector<2x32xf32>
    %cst_127 = arith.constant 1.000000e+00 : f32
    %399 = vector.broadcast %cst_127 : f32 to vector<2x32xf32>
    %400 = arith.addf %399, %398 : vector<2x32xf32>
    %401 = arith.divf %399, %400 : vector<2x32xf32>
    %402 = vector.extract_strided_slice %389 {offsets = [0, 64], sizes = [2, 32], strides = [1, 1]} : vector<2x128xf32> to vector<2x32xf32>
    %403 = math.tanh %402 : vector<2x32xf32>
    %404 = vector.extract_strided_slice %389 {offsets = [0, 96], sizes = [2, 32], strides = [1, 1]} : vector<2x128xf32> to vector<2x32xf32>
    %405 = arith.negf %404 : vector<2x32xf32>
    %406 = math.exp %405 : vector<2x32xf32>
    %cst_128 = arith.constant 1.000000e+00 : f32
    %407 = vector.broadcast %cst_128 : f32 to vector<2x32xf32>
    %408 = arith.addf %407, %406 : vector<2x32xf32>
    %409 = arith.divf %407, %408 : vector<2x32xf32>
    %410 = arith.mulf %401, %345 : vector<2x32xf32>
    %411 = arith.mulf %395, %403 : vector<2x32xf32>
    %412 = arith.addf %410, %411 : vector<2x32xf32>
    %413 = math.tanh %412 : vector<2x32xf32>
    %414 = arith.mulf %409, %413 : vector<2x32xf32>
    %cst_129 = arith.constant dense<0.000000e+00> : vector<2x128xf32>
    %415 = tpu.matmul %414, %43, %cst_129 {dimension_numbers = #tpu.dot_dimension_numbers<[1], [0], [0], [1], [0, 0, 1, 1], [], []>} : vector<2x32xf32>, vector<32x128xf32>, vector<2x128xf32> -> vector<2x128xf32>
    %cst_130 = arith.constant dense<0.000000e+00> : vector<2x128xf32>
    %416 = tpu.matmul %377, %44, %cst_130 {dimension_numbers = #tpu.dot_dimension_numbers<[1], [0], [0], [1], [0, 0, 1, 1], [], []>} : vector<2x32xf32>, vector<32x128xf32>, vector<2x128xf32> -> vector<2x128xf32>
    %417 = arith.addf %415, %416 : vector<2x128xf32>
    %418 = vector.broadcast %45 : vector<1x128xf32> to vector<2x128xf32>
    %419 = arith.addf %417, %418 : vector<2x128xf32>
    %420 = vector.extract_strided_slice %419 {offsets = [0, 0], sizes = [2, 32], strides = [1, 1]} : vector<2x128xf32> to vector<2x32xf32>
    %421 = arith.negf %420 : vector<2x32xf32>
    %422 = math.exp %421 : vector<2x32xf32>
    %cst_131 = arith.constant 1.000000e+00 : f32
    %423 = vector.broadcast %cst_131 : f32 to vector<2x32xf32>
    %424 = arith.addf %423, %422 : vector<2x32xf32>
    %425 = arith.divf %423, %424 : vector<2x32xf32>
    %426 = vector.extract_strided_slice %419 {offsets = [0, 32], sizes = [2, 32], strides = [1, 1]} : vector<2x128xf32> to vector<2x32xf32>
    %427 = arith.negf %426 : vector<2x32xf32>
    %428 = math.exp %427 : vector<2x32xf32>
    %cst_132 = arith.constant 1.000000e+00 : f32
    %429 = vector.broadcast %cst_132 : f32 to vector<2x32xf32>
    %430 = arith.addf %429, %428 : vector<2x32xf32>
    %431 = arith.divf %429, %430 : vector<2x32xf32>
    %432 = vector.extract_strided_slice %419 {offsets = [0, 64], sizes = [2, 32], strides = [1, 1]} : vector<2x128xf32> to vector<2x32xf32>
    %433 = math.tanh %432 : vector<2x32xf32>
    %434 = vector.extract_strided_slice %419 {offsets = [0, 96], sizes = [2, 32], strides = [1, 1]} : vector<2x128xf32> to vector<2x32xf32>
    %435 = arith.negf %434 : vector<2x32xf32>
    %436 = math.exp %435 : vector<2x32xf32>
    %cst_133 = arith.constant 1.000000e+00 : f32
    %437 = vector.broadcast %cst_133 : f32 to vector<2x32xf32>
    %438 = arith.addf %437, %436 : vector<2x32xf32>
    %439 = arith.divf %437, %438 : vector<2x32xf32>
    %440 = arith.mulf %431, %375 : vector<2x32xf32>
    %441 = arith.mulf %425, %433 : vector<2x32xf32>
    %442 = arith.addf %440, %441 : vector<2x32xf32>
    %443 = math.tanh %442 : vector<2x32xf32>
    %444 = arith.mulf %439, %443 : vector<2x32xf32>
    %445 = arith.index_cast %c5_i32 : i32 to index
    %c0_134 = arith.constant 0 : index
    %c0_135 = arith.constant 0 : index
    %446 = vector.load %arg13[%445, %c0_134, %c0_135] : memref<8x2x32xf32, #tpu.memory_space<vmem>>, vector<1x2x32xf32>
    %447 = vector.shape_cast %446 : vector<1x2x32xf32> to vector<2x32xf32>
    %448 = vector.shape_cast %444 : vector<2x32xf32> to vector<1x2x32xf32>
    tpu.vector_store %arg13[%445, %c0_134, %c0_135], %448 {strides = array<i32>} : memref<8x2x32xf32, #tpu.memory_space<vmem>>, vector<1x2x32xf32>,
    %c6_i32 = arith.constant 6 : i32
    %449 = arith.index_cast %c6_i32 : i32 to index
    %c0_136 = arith.constant 0 : index
    %c0_137 = arith.constant 0 : index
    %450 = vector.load %arg12[%449, %c0_136, %c0_137] : memref<8x2x16xf32, #tpu.memory_space<vmem>>, vector<1x2x16xf32>
    %451 = vector.shape_cast %450 : vector<1x2x16xf32> to vector<2x16xf32>
    %cst_138 = arith.constant dense<0.000000e+00> : vector<2x128xf32>
    %452 = tpu.matmul %451, %40, %cst_138 {dimension_numbers = #tpu.dot_dimension_numbers<[1], [0], [0], [1], [0, 0, 1, 1], [], []>} : vector<2x16xf32>, vector<16x128xf32>, vector<2x128xf32> -> vector<2x128xf32>
    %cst_139 = arith.constant dense<0.000000e+00> : vector<2x128xf32>
    %453 = tpu.matmul %414, %41, %cst_139 {dimension_numbers = #tpu.dot_dimension_numbers<[1], [0], [0], [1], [0, 0, 1, 1], [], []>} : vector<2x32xf32>, vector<32x128xf32>, vector<2x128xf32> -> vector<2x128xf32>
    %454 = arith.addf %452, %453 : vector<2x128xf32>
    %455 = vector.broadcast %42 : vector<1x128xf32> to vector<2x128xf32>
    %456 = arith.addf %454, %455 : vector<2x128xf32>
    %457 = vector.extract_strided_slice %456 {offsets = [0, 0], sizes = [2, 32], strides = [1, 1]} : vector<2x128xf32> to vector<2x32xf32>
    %458 = arith.negf %457 : vector<2x32xf32>
    %459 = math.exp %458 : vector<2x32xf32>
    %cst_140 = arith.constant 1.000000e+00 : f32
    %460 = vector.broadcast %cst_140 : f32 to vector<2x32xf32>
    %461 = arith.addf %460, %459 : vector<2x32xf32>
    %462 = arith.divf %460, %461 : vector<2x32xf32>
    %463 = vector.extract_strided_slice %456 {offsets = [0, 32], sizes = [2, 32], strides = [1, 1]} : vector<2x128xf32> to vector<2x32xf32>
    %464 = arith.negf %463 : vector<2x32xf32>
    %465 = math.exp %464 : vector<2x32xf32>
    %cst_141 = arith.constant 1.000000e+00 : f32
    %466 = vector.broadcast %cst_141 : f32 to vector<2x32xf32>
    %467 = arith.addf %466, %465 : vector<2x32xf32>
    %468 = arith.divf %466, %467 : vector<2x32xf32>
    %469 = vector.extract_strided_slice %456 {offsets = [0, 64], sizes = [2, 32], strides = [1, 1]} : vector<2x128xf32> to vector<2x32xf32>
    %470 = math.tanh %469 : vector<2x32xf32>
    %471 = vector.extract_strided_slice %456 {offsets = [0, 96], sizes = [2, 32], strides = [1, 1]} : vector<2x128xf32> to vector<2x32xf32>
    %472 = arith.negf %471 : vector<2x32xf32>
    %473 = math.exp %472 : vector<2x32xf32>
    %cst_142 = arith.constant 1.000000e+00 : f32
    %474 = vector.broadcast %cst_142 : f32 to vector<2x32xf32>
    %475 = arith.addf %474, %473 : vector<2x32xf32>
    %476 = arith.divf %474, %475 : vector<2x32xf32>
    %477 = arith.mulf %468, %412 : vector<2x32xf32>
    %478 = arith.mulf %462, %470 : vector<2x32xf32>
    %479 = arith.addf %477, %478 : vector<2x32xf32>
    %480 = math.tanh %479 : vector<2x32xf32>
    %481 = arith.mulf %476, %480 : vector<2x32xf32>
    %cst_143 = arith.constant dense<0.000000e+00> : vector<2x128xf32>
    %482 = tpu.matmul %481, %43, %cst_143 {dimension_numbers = #tpu.dot_dimension_numbers<[1], [0], [0], [1], [0, 0, 1, 1], [], []>} : vector<2x32xf32>, vector<32x128xf32>, vector<2x128xf32> -> vector<2x128xf32>
    %cst_144 = arith.constant dense<0.000000e+00> : vector<2x128xf32>
    %483 = tpu.matmul %444, %44, %cst_144 {dimension_numbers = #tpu.dot_dimension_numbers<[1], [0], [0], [1], [0, 0, 1, 1], [], []>} : vector<2x32xf32>, vector<32x128xf32>, vector<2x128xf32> -> vector<2x128xf32>
    %484 = arith.addf %482, %483 : vector<2x128xf32>
    %485 = vector.broadcast %45 : vector<1x128xf32> to vector<2x128xf32>
    %486 = arith.addf %484, %485 : vector<2x128xf32>
    %487 = vector.extract_strided_slice %486 {offsets = [0, 0], sizes = [2, 32], strides = [1, 1]} : vector<2x128xf32> to vector<2x32xf32>
    %488 = arith.negf %487 : vector<2x32xf32>
    %489 = math.exp %488 : vector<2x32xf32>
    %cst_145 = arith.constant 1.000000e+00 : f32
    %490 = vector.broadcast %cst_145 : f32 to vector<2x32xf32>
    %491 = arith.addf %490, %489 : vector<2x32xf32>
    %492 = arith.divf %490, %491 : vector<2x32xf32>
    %493 = vector.extract_strided_slice %486 {offsets = [0, 32], sizes = [2, 32], strides = [1, 1]} : vector<2x128xf32> to vector<2x32xf32>
    %494 = arith.negf %493 : vector<2x32xf32>
    %495 = math.exp %494 : vector<2x32xf32>
    %cst_146 = arith.constant 1.000000e+00 : f32
    %496 = vector.broadcast %cst_146 : f32 to vector<2x32xf32>
    %497 = arith.addf %496, %495 : vector<2x32xf32>
    %498 = arith.divf %496, %497 : vector<2x32xf32>
    %499 = vector.extract_strided_slice %486 {offsets = [0, 64], sizes = [2, 32], strides = [1, 1]} : vector<2x128xf32> to vector<2x32xf32>
    %500 = math.tanh %499 : vector<2x32xf32>
    %501 = vector.extract_strided_slice %486 {offsets = [0, 96], sizes = [2, 32], strides = [1, 1]} : vector<2x128xf32> to vector<2x32xf32>
    %502 = arith.negf %501 : vector<2x32xf32>
    %503 = math.exp %502 : vector<2x32xf32>
    %cst_147 = arith.constant 1.000000e+00 : f32
    %504 = vector.broadcast %cst_147 : f32 to vector<2x32xf32>
    %505 = arith.addf %504, %503 : vector<2x32xf32>
    %506 = arith.divf %504, %505 : vector<2x32xf32>
    %507 = arith.mulf %498, %442 : vector<2x32xf32>
    %508 = arith.mulf %492, %500 : vector<2x32xf32>
    %509 = arith.addf %507, %508 : vector<2x32xf32>
    %510 = math.tanh %509 : vector<2x32xf32>
    %511 = arith.mulf %506, %510 : vector<2x32xf32>
    %512 = arith.index_cast %c6_i32 : i32 to index
    %c0_148 = arith.constant 0 : index
    %c0_149 = arith.constant 0 : index
    %513 = vector.load %arg13[%512, %c0_148, %c0_149] : memref<8x2x32xf32, #tpu.memory_space<vmem>>, vector<1x2x32xf32>
    %514 = vector.shape_cast %513 : vector<1x2x32xf32> to vector<2x32xf32>
    %515 = vector.shape_cast %511 : vector<2x32xf32> to vector<1x2x32xf32>
    tpu.vector_store %arg13[%512, %c0_148, %c0_149], %515 {strides = array<i32>} : memref<8x2x32xf32, #tpu.memory_space<vmem>>, vector<1x2x32xf32>,
    %c7_i32 = arith.constant 7 : i32
    %516 = arith.index_cast %c7_i32 : i32 to index
    %c0_150 = arith.constant 0 : index
    %c0_151 = arith.constant 0 : index
    %517 = vector.load %arg12[%516, %c0_150, %c0_151] : memref<8x2x16xf32, #tpu.memory_space<vmem>>, vector<1x2x16xf32>
    %518 = vector.shape_cast %517 : vector<1x2x16xf32> to vector<2x16xf32>
    %cst_152 = arith.constant dense<0.000000e+00> : vector<2x128xf32>
    %519 = tpu.matmul %518, %40, %cst_152 {dimension_numbers = #tpu.dot_dimension_numbers<[1], [0], [0], [1], [0, 0, 1, 1], [], []>} : vector<2x16xf32>, vector<16x128xf32>, vector<2x128xf32> -> vector<2x128xf32>
    %cst_153 = arith.constant dense<0.000000e+00> : vector<2x128xf32>
    %520 = tpu.matmul %481, %41, %cst_153 {dimension_numbers = #tpu.dot_dimension_numbers<[1], [0], [0], [1], [0, 0, 1, 1], [], []>} : vector<2x32xf32>, vector<32x128xf32>, vector<2x128xf32> -> vector<2x128xf32>
    %521 = arith.addf %519, %520 : vector<2x128xf32>
    %522 = vector.broadcast %42 : vector<1x128xf32> to vector<2x128xf32>
    %523 = arith.addf %521, %522 : vector<2x128xf32>
    %524 = vector.extract_strided_slice %523 {offsets = [0, 0], sizes = [2, 32], strides = [1, 1]} : vector<2x128xf32> to vector<2x32xf32>
    %525 = arith.negf %524 : vector<2x32xf32>
    %526 = math.exp %525 : vector<2x32xf32>
    %cst_154 = arith.constant 1.000000e+00 : f32
    %527 = vector.broadcast %cst_154 : f32 to vector<2x32xf32>
    %528 = arith.addf %527, %526 : vector<2x32xf32>
    %529 = arith.divf %527, %528 : vector<2x32xf32>
    %530 = vector.extract_strided_slice %523 {offsets = [0, 32], sizes = [2, 32], strides = [1, 1]} : vector<2x128xf32> to vector<2x32xf32>
    %531 = arith.negf %530 : vector<2x32xf32>
    %532 = math.exp %531 : vector<2x32xf32>
    %cst_155 = arith.constant 1.000000e+00 : f32
    %533 = vector.broadcast %cst_155 : f32 to vector<2x32xf32>
    %534 = arith.addf %533, %532 : vector<2x32xf32>
    %535 = arith.divf %533, %534 : vector<2x32xf32>
    %536 = vector.extract_strided_slice %523 {offsets = [0, 64], sizes = [2, 32], strides = [1, 1]} : vector<2x128xf32> to vector<2x32xf32>
    %537 = math.tanh %536 : vector<2x32xf32>
    %538 = vector.extract_strided_slice %523 {offsets = [0, 96], sizes = [2, 32], strides = [1, 1]} : vector<2x128xf32> to vector<2x32xf32>
    %539 = arith.negf %538 : vector<2x32xf32>
    %540 = math.exp %539 : vector<2x32xf32>
    %cst_156 = arith.constant 1.000000e+00 : f32
    %541 = vector.broadcast %cst_156 : f32 to vector<2x32xf32>
    %542 = arith.addf %541, %540 : vector<2x32xf32>
    %543 = arith.divf %541, %542 : vector<2x32xf32>
    %544 = arith.mulf %535, %479 : vector<2x32xf32>
    %545 = arith.mulf %529, %537 : vector<2x32xf32>
    %546 = arith.addf %544, %545 : vector<2x32xf32>
    %547 = math.tanh %546 : vector<2x32xf32>
    %548 = arith.mulf %543, %547 : vector<2x32xf32>
    %cst_157 = arith.constant dense<0.000000e+00> : vector<2x128xf32>
    %549 = tpu.matmul %548, %43, %cst_157 {dimension_numbers = #tpu.dot_dimension_numbers<[1], [0], [0], [1], [0, 0, 1, 1], [], []>} : vector<2x32xf32>, vector<32x128xf32>, vector<2x128xf32> -> vector<2x128xf32>
    %cst_158 = arith.constant dense<0.000000e+00> : vector<2x128xf32>
    %550 = tpu.matmul %511, %44, %cst_158 {dimension_numbers = #tpu.dot_dimension_numbers<[1], [0], [0], [1], [0, 0, 1, 1], [], []>} : vector<2x32xf32>, vector<32x128xf32>, vector<2x128xf32> -> vector<2x128xf32>
    %551 = arith.addf %549, %550 : vector<2x128xf32>
    %552 = vector.broadcast %45 : vector<1x128xf32> to vector<2x128xf32>
    %553 = arith.addf %551, %552 : vector<2x128xf32>
    %554 = vector.extract_strided_slice %553 {offsets = [0, 0], sizes = [2, 32], strides = [1, 1]} : vector<2x128xf32> to vector<2x32xf32>
    %555 = arith.negf %554 : vector<2x32xf32>
    %556 = math.exp %555 : vector<2x32xf32>
    %cst_159 = arith.constant 1.000000e+00 : f32
    %557 = vector.broadcast %cst_159 : f32 to vector<2x32xf32>
    %558 = arith.addf %557, %556 : vector<2x32xf32>
    %559 = arith.divf %557, %558 : vector<2x32xf32>
    %560 = vector.extract_strided_slice %553 {offsets = [0, 32], sizes = [2, 32], strides = [1, 1]} : vector<2x128xf32> to vector<2x32xf32>
    %561 = arith.negf %560 : vector<2x32xf32>
    %562 = math.exp %561 : vector<2x32xf32>
    %cst_160 = arith.constant 1.000000e+00 : f32
    %563 = vector.broadcast %cst_160 : f32 to vector<2x32xf32>
    %564 = arith.addf %563, %562 : vector<2x32xf32>
    %565 = arith.divf %563, %564 : vector<2x32xf32>
    %566 = vector.extract_strided_slice %553 {offsets = [0, 64], sizes = [2, 32], strides = [1, 1]} : vector<2x128xf32> to vector<2x32xf32>
    %567 = math.tanh %566 : vector<2x32xf32>
    %568 = vector.extract_strided_slice %553 {offsets = [0, 96], sizes = [2, 32], strides = [1, 1]} : vector<2x128xf32> to vector<2x32xf32>
    %569 = arith.negf %568 : vector<2x32xf32>
    %570 = math.exp %569 : vector<2x32xf32>
    %cst_161 = arith.constant 1.000000e+00 : f32
    %571 = vector.broadcast %cst_161 : f32 to vector<2x32xf32>
    %572 = arith.addf %571, %570 : vector<2x32xf32>
    %573 = arith.divf %571, %572 : vector<2x32xf32>
    %574 = arith.mulf %565, %509 : vector<2x32xf32>
    %575 = arith.mulf %559, %567 : vector<2x32xf32>
    %576 = arith.addf %574, %575 : vector<2x32xf32>
    %577 = math.tanh %576 : vector<2x32xf32>
    %578 = arith.mulf %573, %577 : vector<2x32xf32>
    %579 = arith.index_cast %c7_i32 : i32 to index
    %c0_162 = arith.constant 0 : index
    %c0_163 = arith.constant 0 : index
    %580 = vector.load %arg13[%579, %c0_162, %c0_163] : memref<8x2x32xf32, #tpu.memory_space<vmem>>, vector<1x2x32xf32>
    %581 = vector.shape_cast %580 : vector<1x2x32xf32> to vector<2x32xf32>
    %582 = vector.shape_cast %578 : vector<2x32xf32> to vector<1x2x32xf32>
    tpu.vector_store %arg13[%579, %c0_162, %c0_163], %582 {strides = array<i32>} : memref<8x2x32xf32, #tpu.memory_space<vmem>>, vector<1x2x32xf32>,
    %c8_i32 = arith.constant 8 : i32
    %c0_164 = arith.constant 0 : index
    %c0_165 = arith.constant 0 : index
    %583 = vector.load %arg8[%c0_164, %c0_165] : memref<32x2xf32, #tpu.memory_space<vmem>>, vector<32x2xf32>
    %c0_166 = arith.constant 0 : index
    %c0_167 = arith.constant 0 : index
    %584 = vector.load %arg9[%c0_166, %c0_167] : memref<1x2xf32, #tpu.memory_space<vmem>>, vector<1x2xf32>
    %c0_168 = arith.constant 0 : index
    %c0_169 = arith.constant 0 : index
    %c0_170 = arith.constant 0 : index
    %585 = vector.load %arg13[%c0_168, %c0_169, %c0_170] : memref<8x2x32xf32, #tpu.memory_space<vmem>>, vector<1x2x32xf32>
    %586 = vector.shape_cast %585 : vector<1x2x32xf32> to vector<2x32xf32>
    %c0_171 = arith.constant 0 : index
    %c0_172 = arith.constant 0 : index
    %c0_173 = arith.constant 0 : index
    %587 = vector.load %arg11[%c0_171, %c0_172, %c0_173] : memref<2x8x32xf32, #tpu.memory_space<vmem>>, vector<2x1x32xf32>
    %588 = vector.shape_cast %587 : vector<2x1x32xf32> to vector<2x32xf32>
    %589 = vector.shape_cast %586 : vector<2x32xf32> to vector<2x1x32xf32>
    tpu.vector_store %arg11[%c0_171, %c0_172, %c0_173], %589 {strides = array<i32>} : memref<2x8x32xf32, #tpu.memory_space<vmem>>, vector<2x1x32xf32>,
    %cst_174 = arith.constant dense<0.000000e+00> : vector<2x2xf32>
    %590 = tpu.matmul %586, %583, %cst_174 {dimension_numbers = #tpu.dot_dimension_numbers<[1], [0], [0], [1], [0, 0, 1, 1], [], []>} : vector<2x32xf32>, vector<32x2xf32>, vector<2x2xf32> -> vector<2x2xf32>
    %591 = vector.broadcast %584 : vector<1x2xf32> to vector<2x2xf32>
    %592 = arith.addf %590, %591 : vector<2x2xf32>
    %c0_175 = arith.constant 0 : index
    %c0_176 = arith.constant 0 : index
    %c0_177 = arith.constant 0 : index
    %593 = vector.load %arg10[%c0_175, %c0_176, %c0_177] : memref<2x8x2xf32, #tpu.memory_space<vmem>>, vector<2x1x2xf32>
    %594 = vector.shape_cast %593 : vector<2x1x2xf32> to vector<2x2xf32>
    %595 = vector.shape_cast %592 : vector<2x2xf32> to vector<2x1x2xf32>
    tpu.vector_store %arg10[%c0_175, %c0_176, %c0_177], %595 {strides = array<i32>} : memref<2x8x2xf32, #tpu.memory_space<vmem>>, vector<2x1x2xf32>,
    %c1_178 = arith.constant 1 : index
    %c0_179 = arith.constant 0 : index
    %c0_180 = arith.constant 0 : index
    %596 = vector.load %arg13[%c1_178, %c0_179, %c0_180] : memref<8x2x32xf32, #tpu.memory_space<vmem>>, vector<1x2x32xf32>
    %597 = vector.shape_cast %596 : vector<1x2x32xf32> to vector<2x32xf32>
    %c0_181 = arith.constant 0 : index
    %c1_182 = arith.constant 1 : index
    %c0_183 = arith.constant 0 : index
    %598 = vector.load %arg11[%c0_181, %c1_182, %c0_183] : memref<2x8x32xf32, #tpu.memory_space<vmem>>, vector<2x1x32xf32>
    %599 = vector.shape_cast %598 : vector<2x1x32xf32> to vector<2x32xf32>
    %600 = vector.shape_cast %597 : vector<2x32xf32> to vector<2x1x32xf32>
    tpu.vector_store %arg11[%c0_181, %c1_182, %c0_183], %600 {strides = array<i32>} : memref<2x8x32xf32, #tpu.memory_space<vmem>>, vector<2x1x32xf32>,
    %cst_184 = arith.constant dense<0.000000e+00> : vector<2x2xf32>
    %601 = tpu.matmul %597, %583, %cst_184 {dimension_numbers = #tpu.dot_dimension_numbers<[1], [0], [0], [1], [0, 0, 1, 1], [], []>} : vector<2x32xf32>, vector<32x2xf32>, vector<2x2xf32> -> vector<2x2xf32>
    %602 = vector.broadcast %584 : vector<1x2xf32> to vector<2x2xf32>
    %603 = arith.addf %601, %602 : vector<2x2xf32>
    %c0_185 = arith.constant 0 : index
    %c1_186 = arith.constant 1 : index
    %c0_187 = arith.constant 0 : index
    %604 = vector.load %arg10[%c0_185, %c1_186, %c0_187] : memref<2x8x2xf32, #tpu.memory_space<vmem>>, vector<2x1x2xf32>
    %605 = vector.shape_cast %604 : vector<2x1x2xf32> to vector<2x2xf32>
    %606 = vector.shape_cast %603 : vector<2x2xf32> to vector<2x1x2xf32>
    tpu.vector_store %arg10[%c0_185, %c1_186, %c0_187], %606 {strides = array<i32>} : memref<2x8x2xf32, #tpu.memory_space<vmem>>, vector<2x1x2xf32>,
    %c2_188 = arith.constant 2 : index
    %c0_189 = arith.constant 0 : index
    %c0_190 = arith.constant 0 : index
    %607 = vector.load %arg13[%c2_188, %c0_189, %c0_190] : memref<8x2x32xf32, #tpu.memory_space<vmem>>, vector<1x2x32xf32>
    %608 = vector.shape_cast %607 : vector<1x2x32xf32> to vector<2x32xf32>
    %c0_191 = arith.constant 0 : index
    %c2_192 = arith.constant 2 : index
    %c0_193 = arith.constant 0 : index
    %609 = vector.load %arg11[%c0_191, %c2_192, %c0_193] : memref<2x8x32xf32, #tpu.memory_space<vmem>>, vector<2x1x32xf32>
    %610 = vector.shape_cast %609 : vector<2x1x32xf32> to vector<2x32xf32>
    %611 = vector.shape_cast %608 : vector<2x32xf32> to vector<2x1x32xf32>
    tpu.vector_store %arg11[%c0_191, %c2_192, %c0_193], %611 {strides = array<i32>} : memref<2x8x32xf32, #tpu.memory_space<vmem>>, vector<2x1x32xf32>,
    %cst_194 = arith.constant dense<0.000000e+00> : vector<2x2xf32>
    %612 = tpu.matmul %608, %583, %cst_194 {dimension_numbers = #tpu.dot_dimension_numbers<[1], [0], [0], [1], [0, 0, 1, 1], [], []>} : vector<2x32xf32>, vector<32x2xf32>, vector<2x2xf32> -> vector<2x2xf32>
    %613 = vector.broadcast %584 : vector<1x2xf32> to vector<2x2xf32>
    %614 = arith.addf %612, %613 : vector<2x2xf32>
    %c0_195 = arith.constant 0 : index
    %c2_196 = arith.constant 2 : index
    %c0_197 = arith.constant 0 : index
    %615 = vector.load %arg10[%c0_195, %c2_196, %c0_197] : memref<2x8x2xf32, #tpu.memory_space<vmem>>, vector<2x1x2xf32>
    %616 = vector.shape_cast %615 : vector<2x1x2xf32> to vector<2x2xf32>
    %617 = vector.shape_cast %614 : vector<2x2xf32> to vector<2x1x2xf32>
    tpu.vector_store %arg10[%c0_195, %c2_196, %c0_197], %617 {strides = array<i32>} : memref<2x8x2xf32, #tpu.memory_space<vmem>>, vector<2x1x2xf32>,
    %c3_198 = arith.constant 3 : index
    %c0_199 = arith.constant 0 : index
    %c0_200 = arith.constant 0 : index
    %618 = vector.load %arg13[%c3_198, %c0_199, %c0_200] : memref<8x2x32xf32, #tpu.memory_space<vmem>>, vector<1x2x32xf32>
    %619 = vector.shape_cast %618 : vector<1x2x32xf32> to vector<2x32xf32>
    %c0_201 = arith.constant 0 : index
    %c3_202 = arith.constant 3 : index
    %c0_203 = arith.constant 0 : index
    %620 = vector.load %arg11[%c0_201, %c3_202, %c0_203] : memref<2x8x32xf32, #tpu.memory_space<vmem>>, vector<2x1x32xf32>
    %621 = vector.shape_cast %620 : vector<2x1x32xf32> to vector<2x32xf32>
    %622 = vector.shape_cast %619 : vector<2x32xf32> to vector<2x1x32xf32>
    tpu.vector_store %arg11[%c0_201, %c3_202, %c0_203], %622 {strides = array<i32>} : memref<2x8x32xf32, #tpu.memory_space<vmem>>, vector<2x1x32xf32>,
    %cst_204 = arith.constant dense<0.000000e+00> : vector<2x2xf32>
    %623 = tpu.matmul %619, %583, %cst_204 {dimension_numbers = #tpu.dot_dimension_numbers<[1], [0], [0], [1], [0, 0, 1, 1], [], []>} : vector<2x32xf32>, vector<32x2xf32>, vector<2x2xf32> -> vector<2x2xf32>
    %624 = vector.broadcast %584 : vector<1x2xf32> to vector<2x2xf32>
    %625 = arith.addf %623, %624 : vector<2x2xf32>
    %c0_205 = arith.constant 0 : index
    %c3_206 = arith.constant 3 : index
    %c0_207 = arith.constant 0 : index
    %626 = vector.load %arg10[%c0_205, %c3_206, %c0_207] : memref<2x8x2xf32, #tpu.memory_space<vmem>>, vector<2x1x2xf32>
    %627 = vector.shape_cast %626 : vector<2x1x2xf32> to vector<2x2xf32>
    %628 = vector.shape_cast %625 : vector<2x2xf32> to vector<2x1x2xf32>
    tpu.vector_store %arg10[%c0_205, %c3_206, %c0_207], %628 {strides = array<i32>} : memref<2x8x2xf32, #tpu.memory_space<vmem>>, vector<2x1x2xf32>,
    %c4_208 = arith.constant 4 : index
    %c0_209 = arith.constant 0 : index
    %c0_210 = arith.constant 0 : index
    %629 = vector.load %arg13[%c4_208, %c0_209, %c0_210] : memref<8x2x32xf32, #tpu.memory_space<vmem>>, vector<1x2x32xf32>
    %630 = vector.shape_cast %629 : vector<1x2x32xf32> to vector<2x32xf32>
    %c0_211 = arith.constant 0 : index
    %c4_212 = arith.constant 4 : index
    %c0_213 = arith.constant 0 : index
    %631 = vector.load %arg11[%c0_211, %c4_212, %c0_213] : memref<2x8x32xf32, #tpu.memory_space<vmem>>, vector<2x1x32xf32>
    %632 = vector.shape_cast %631 : vector<2x1x32xf32> to vector<2x32xf32>
    %633 = vector.shape_cast %630 : vector<2x32xf32> to vector<2x1x32xf32>
    tpu.vector_store %arg11[%c0_211, %c4_212, %c0_213], %633 {strides = array<i32>} : memref<2x8x32xf32, #tpu.memory_space<vmem>>, vector<2x1x32xf32>,
    %cst_214 = arith.constant dense<0.000000e+00> : vector<2x2xf32>
    %634 = tpu.matmul %630, %583, %cst_214 {dimension_numbers = #tpu.dot_dimension_numbers<[1], [0], [0], [1], [0, 0, 1, 1], [], []>} : vector<2x32xf32>, vector<32x2xf32>, vector<2x2xf32> -> vector<2x2xf32>
    %635 = vector.broadcast %584 : vector<1x2xf32> to vector<2x2xf32>
    %636 = arith.addf %634, %635 : vector<2x2xf32>
    %c0_215 = arith.constant 0 : index
    %c4_216 = arith.constant 4 : index
    %c0_217 = arith.constant 0 : index
    %637 = vector.load %arg10[%c0_215, %c4_216, %c0_217] : memref<2x8x2xf32, #tpu.memory_space<vmem>>, vector<2x1x2xf32>
    %638 = vector.shape_cast %637 : vector<2x1x2xf32> to vector<2x2xf32>
    %639 = vector.shape_cast %636 : vector<2x2xf32> to vector<2x1x2xf32>
    tpu.vector_store %arg10[%c0_215, %c4_216, %c0_217], %639 {strides = array<i32>} : memref<2x8x2xf32, #tpu.memory_space<vmem>>, vector<2x1x2xf32>,
    %c5_218 = arith.constant 5 : index
    %c0_219 = arith.constant 0 : index
    %c0_220 = arith.constant 0 : index
    %640 = vector.load %arg13[%c5_218, %c0_219, %c0_220] : memref<8x2x32xf32, #tpu.memory_space<vmem>>, vector<1x2x32xf32>
    %641 = vector.shape_cast %640 : vector<1x2x32xf32> to vector<2x32xf32>
    %c0_221 = arith.constant 0 : index
    %c5_222 = arith.constant 5 : index
    %c0_223 = arith.constant 0 : index
    %642 = vector.load %arg11[%c0_221, %c5_222, %c0_223] : memref<2x8x32xf32, #tpu.memory_space<vmem>>, vector<2x1x32xf32>
    %643 = vector.shape_cast %642 : vector<2x1x32xf32> to vector<2x32xf32>
    %644 = vector.shape_cast %641 : vector<2x32xf32> to vector<2x1x32xf32>
    tpu.vector_store %arg11[%c0_221, %c5_222, %c0_223], %644 {strides = array<i32>} : memref<2x8x32xf32, #tpu.memory_space<vmem>>, vector<2x1x32xf32>,
    %cst_224 = arith.constant dense<0.000000e+00> : vector<2x2xf32>
    %645 = tpu.matmul %641, %583, %cst_224 {dimension_numbers = #tpu.dot_dimension_numbers<[1], [0], [0], [1], [0, 0, 1, 1], [], []>} : vector<2x32xf32>, vector<32x2xf32>, vector<2x2xf32> -> vector<2x2xf32>
    %646 = vector.broadcast %584 : vector<1x2xf32> to vector<2x2xf32>
    %647 = arith.addf %645, %646 : vector<2x2xf32>
    %c0_225 = arith.constant 0 : index
    %c5_226 = arith.constant 5 : index
    %c0_227 = arith.constant 0 : index
    %648 = vector.load %arg10[%c0_225, %c5_226, %c0_227] : memref<2x8x2xf32, #tpu.memory_space<vmem>>, vector<2x1x2xf32>
    %649 = vector.shape_cast %648 : vector<2x1x2xf32> to vector<2x2xf32>
    %650 = vector.shape_cast %647 : vector<2x2xf32> to vector<2x1x2xf32>
    tpu.vector_store %arg10[%c0_225, %c5_226, %c0_227], %650 {strides = array<i32>} : memref<2x8x2xf32, #tpu.memory_space<vmem>>, vector<2x1x2xf32>,
    %c6_228 = arith.constant 6 : index
    %c0_229 = arith.constant 0 : index
    %c0_230 = arith.constant 0 : index
    %651 = vector.load %arg13[%c6_228, %c0_229, %c0_230] : memref<8x2x32xf32, #tpu.memory_space<vmem>>, vector<1x2x32xf32>
    %652 = vector.shape_cast %651 : vector<1x2x32xf32> to vector<2x32xf32>
    %c0_231 = arith.constant 0 : index
    %c6_232 = arith.constant 6 : index
    %c0_233 = arith.constant 0 : index
    %653 = vector.load %arg11[%c0_231, %c6_232, %c0_233] : memref<2x8x32xf32, #tpu.memory_space<vmem>>, vector<2x1x32xf32>
    %654 = vector.shape_cast %653 : vector<2x1x32xf32> to vector<2x32xf32>
    %655 = vector.shape_cast %652 : vector<2x32xf32> to vector<2x1x32xf32>
    tpu.vector_store %arg11[%c0_231, %c6_232, %c0_233], %655 {strides = array<i32>} : memref<2x8x32xf32, #tpu.memory_space<vmem>>, vector<2x1x32xf32>,
    %cst_234 = arith.constant dense<0.000000e+00> : vector<2x2xf32>
    %656 = tpu.matmul %652, %583, %cst_234 {dimension_numbers = #tpu.dot_dimension_numbers<[1], [0], [0], [1], [0, 0, 1, 1], [], []>} : vector<2x32xf32>, vector<32x2xf32>, vector<2x2xf32> -> vector<2x2xf32>
    %657 = vector.broadcast %584 : vector<1x2xf32> to vector<2x2xf32>
    %658 = arith.addf %656, %657 : vector<2x2xf32>
    %c0_235 = arith.constant 0 : index
    %c6_236 = arith.constant 6 : index
    %c0_237 = arith.constant 0 : index
    %659 = vector.load %arg10[%c0_235, %c6_236, %c0_237] : memref<2x8x2xf32, #tpu.memory_space<vmem>>, vector<2x1x2xf32>
    %660 = vector.shape_cast %659 : vector<2x1x2xf32> to vector<2x2xf32>
    %661 = vector.shape_cast %658 : vector<2x2xf32> to vector<2x1x2xf32>
    tpu.vector_store %arg10[%c0_235, %c6_236, %c0_237], %661 {strides = array<i32>} : memref<2x8x2xf32, #tpu.memory_space<vmem>>, vector<2x1x2xf32>,
    %c7_238 = arith.constant 7 : index
    %c0_239 = arith.constant 0 : index
    %c0_240 = arith.constant 0 : index
    %662 = vector.load %arg13[%c7_238, %c0_239, %c0_240] : memref<8x2x32xf32, #tpu.memory_space<vmem>>, vector<1x2x32xf32>
    %663 = vector.shape_cast %662 : vector<1x2x32xf32> to vector<2x32xf32>
    %c0_241 = arith.constant 0 : index
    %c7_242 = arith.constant 7 : index
    %c0_243 = arith.constant 0 : index
    %664 = vector.load %arg11[%c0_241, %c7_242, %c0_243] : memref<2x8x32xf32, #tpu.memory_space<vmem>>, vector<2x1x32xf32>
    %665 = vector.shape_cast %664 : vector<2x1x32xf32> to vector<2x32xf32>
    %666 = vector.shape_cast %663 : vector<2x32xf32> to vector<2x1x32xf32>
    tpu.vector_store %arg11[%c0_241, %c7_242, %c0_243], %666 {strides = array<i32>} : memref<2x8x32xf32, #tpu.memory_space<vmem>>, vector<2x1x32xf32>,
    %cst_244 = arith.constant dense<0.000000e+00> : vector<2x2xf32>
    %667 = tpu.matmul %663, %583, %cst_244 {dimension_numbers = #tpu.dot_dimension_numbers<[1], [0], [0], [1], [0, 0, 1, 1], [], []>} : vector<2x32xf32>, vector<32x2xf32>, vector<2x2xf32> -> vector<2x2xf32>
    %668 = vector.broadcast %584 : vector<1x2xf32> to vector<2x2xf32>
    %669 = arith.addf %667, %668 : vector<2x2xf32>
    %c0_245 = arith.constant 0 : index
    %c7_246 = arith.constant 7 : index
    %c0_247 = arith.constant 0 : index
    %670 = vector.load %arg10[%c0_245, %c7_246, %c0_247] : memref<2x8x2xf32, #tpu.memory_space<vmem>>, vector<2x1x2xf32>
    %671 = vector.shape_cast %670 : vector<2x1x2xf32> to vector<2x2xf32>
    %672 = vector.shape_cast %669 : vector<2x2xf32> to vector<2x1x2xf32>
    tpu.vector_store %arg10[%c0_245, %c7_246, %c0_247], %672 {strides = array<i32>} : memref<2x8x2xf32, #tpu.memory_space<vmem>>, vector<2x1x2xf32>,
    return
  }
  func.func @transform_0(%arg0: i32) -> (i32, i32, i32) {
    %c0_i32 = arith.constant 0 : i32
    %c0_i32_0 = arith.constant 0 : i32
    %c0_i32_1 = arith.constant 0 : i32
    %c0_i32_2 = arith.constant 0 : i32
    return %c0_i32, %c0_i32_0, %c0_i32_1 : i32, i32, i32
  }
  func.func @transform_1(%arg0: i32) -> (i32, i32) {
    %c0_i32 = arith.constant 0 : i32
    %c0_i32_0 = arith.constant 0 : i32
    %c0_i32_1 = arith.constant 0 : i32
    return %c0_i32, %c0_i32_0 : i32, i32
  }
  func.func @transform_2(%arg0: i32) -> (i32, i32) {
    %c0_i32 = arith.constant 0 : i32
    %c0_i32_0 = arith.constant 0 : i32
    %c0_i32_1 = arith.constant 0 : i32
    return %c0_i32, %c0_i32_0 : i32, i32
  }
  func.func @transform_3(%arg0: i32) -> (i32, i32) {
    %c0_i32 = arith.constant 0 : i32
    %c0_i32_0 = arith.constant 0 : i32
    %c0_i32_1 = arith.constant 0 : i32
    return %c0_i32, %c0_i32_0 : i32, i32
  }
  func.func @transform_4(%arg0: i32) -> (i32, i32) {
    %c0_i32 = arith.constant 0 : i32
    %c0_i32_0 = arith.constant 0 : i32
    %c0_i32_1 = arith.constant 0 : i32
    return %c0_i32, %c0_i32_0 : i32, i32
  }
  func.func @transform_5(%arg0: i32) -> (i32, i32) {
    %c0_i32 = arith.constant 0 : i32
    %c0_i32_0 = arith.constant 0 : i32
    %c0_i32_1 = arith.constant 0 : i32
    return %c0_i32, %c0_i32_0 : i32, i32
  }
  func.func @transform_6(%arg0: i32) -> (i32, i32) {
    %c0_i32 = arith.constant 0 : i32
    %c0_i32_0 = arith.constant 0 : i32
    %c0_i32_1 = arith.constant 0 : i32
    return %c0_i32, %c0_i32_0 : i32, i32
  }
  func.func @transform_7(%arg0: i32) -> (i32, i32) {
    %c0_i32 = arith.constant 0 : i32
    %c0_i32_0 = arith.constant 0 : i32
    %c0_i32_1 = arith.constant 0 : i32
    return %c0_i32, %c0_i32_0 : i32, i32
  }
  func.func @transform_8(%arg0: i32) -> (i32, i32) {
    %c0_i32 = arith.constant 0 : i32
    %c0_i32_0 = arith.constant 0 : i32
    %c0_i32_1 = arith.constant 0 : i32
    return %c0_i32, %c0_i32_0 : i32, i32
  }
  func.func @transform_9(%arg0: i32) -> (i32, i32, i32) {
    %c0_i32 = arith.constant 0 : i32
    %c0_i32_0 = arith.constant 0 : i32
    %c0_i32_1 = arith.constant 0 : i32
    %c0_i32_2 = arith.constant 0 : i32
    return %c0_i32, %c0_i32_0, %c0_i32_1 : i32, i32, i32
  }
  func.func @transform_10(%arg0: i32) -> (i32, i32, i32) {
    %c0_i32 = arith.constant 0 : i32
    %c0_i32_0 = arith.constant 0 : i32
    %c0_i32_1 = arith.constant 0 : i32
    %c0_i32_2 = arith.constant 0 : i32
    return %c0_i32, %c0_i32_0, %c0_i32_1 : i32, i32, i32
  }
}

</mosaic_0001>

<llo_original>
// kernel: lstm_model_forward.1
$region0: #{lstm_model_forward.1}
  #allocation0 [shape = 'u32[]', space=smem, size = 0x4, offset = 0x4, fixed_abs, tag = 'smem constant byte address 0x4 - core index']
  #allocation1 [shape = 'u32[144,128]{1,0:T(1,128)}', space=vmem, size = 0x12000, scoped, tag = 'internal scratch']
  #allocation2 [shape = 'f32[8,2,16]{2,1,0:T(2,128)}', space=vmem, size = 0x2000, scoped, tag = 'scratch operand']
  #allocation3 [shape = 'f32[8,2,32]{2,1,0:T(2,128)}', space=vmem, size = 0x2000, scoped, tag = 'scratch operand']
  %s0 = inlined_call_operand.hbm [shape: f32[2,8,16], index: 0, kind: input, shape index: {}]
  %s1 = inlined_call_operand.hbm [shape: f32[16,128], index: 1, kind: input, shape index: {}]
  %s2 = inlined_call_operand.vmem [shape: f32[32,128], index: 2, kind: input, shape index: {}]
  %s3 = inlined_call_operand.vmem [shape: f32[1,128], index: 3, kind: input, shape index: {}]
  %s4 = inlined_call_operand.vmem [shape: f32[32,128], index: 4, kind: input, shape index: {}]
  %s5 = inlined_call_operand.vmem [shape: f32[32,128], index: 5, kind: input, shape index: {}]
  %s6 = inlined_call_operand.vmem [shape: f32[1,128], index: 6, kind: input, shape index: {}]
  %s7 = inlined_call_operand.vmem [shape: f32[32,2], index: 7, kind: input, shape index: {}]
  %s8 = inlined_call_operand.hbm [shape: f32[1,2], index: 8, kind: input, shape index: {}]
  %s9 = inlined_call_operand.vmem [shape: f32[2,8,2], index: 9, kind: output, shape index: {0}]
  %s10 = inlined_call_operand.hbm [shape: f32[2,8,32], index: 10, kind: output, shape index: {1}]
  %11 = xla_tuple %s9, %s10
  %s12 = sld [smem:[#allocation0]]
  $region66: #{lstm_model_forward.1} parent=0
    _
  %s14 = ssub.s32 1, %s12
  %s15 = scalar_select 0, %s14, %s12
  $region1: #{lstm_model_forward.1} parent=0
    #allocation4 [shape = 'u8[8192]{0}', space=vmem, size = 0x2000, scoped, tag = 'input window, operand 0, single buffered']
    #allocation5 [shape = 's32[1]{0}', space=sflag, size = 0x4, scoped, tag = 'scoped memory for lstm_model_forward.1']
    #allocation6 [shape = 's32[1]{0}', space=sflag, size = 0x4, scoped, tag = 'scoped memory for lstm_model_forward.1']
    #allocation7 [shape = 'u8[8192]{0}', space=vmem, size = 0x2000, scoped, tag = 'input window, operand 1, single buffered']
    #allocation8 [shape = 's32[1]{0}', space=sflag, size = 0x4, scoped, tag = 'scoped memory for lstm_model_forward.1']
    #allocation9 [shape = 'u8[512]{0}', space=vmem, size = 0x400, scoped, tag = 'input window, operand 8, single buffered']
    #allocation10 [shape = 'u8[8192]{0}', space=vmem, size = 0x2000, scoped, tag = 'output window, operand 1, single buffered']
    %16 = vsyncpa [#allocation5], 0
    %17 = vsyncpa [#allocation8], 0
    %18 = vsyncpa [#allocation6], 0
    // Predicated region
    $region2: #{lstm_model_forward.1} parent=1 // pred_check
      _
    $region3: #{lstm_model_forward.1} parent=1 // pred_check_branch
      %20 = sbr.rel (0) target = $region5
    $region4: #{lstm_model_forward.1} parent=1 // pred_region
      %s22 = ssub.s32 256, 256
      %23 = vsyncadd [#allocation5], %s22
      %s24 = sshll.u32 [#allocation4], 4
      %s25 = int_to_ptr.vmem [resolvable:$true] %s24
      %30 = dma.hbm_to_vmem [thread:$0]  %s0, 256, %s25, [#allocation5], 128, 128, 8
    $region5: #{lstm_model_forward.1} parent=1 // pred_fallthru
      _
    // Predicated region
    $region6: #{lstm_model_forward.1} parent=1 // pred_check
      _
    $region7: #{lstm_model_forward.1} parent=1 // pred_check_branch
      %32 = sbr.rel (0) target = $region9
    $region8: #{lstm_model_forward.1} parent=1 // pred_region
      %s34 = ssub.s32 256, 256
      %35 = vsyncadd [#allocation8], %s34
      %s36 = sshll.u32 [#allocation7], 4
      %s37 = int_to_ptr.vmem [resolvable:$true] %s36
      %42 = dma.hbm_to_vmem [thread:$0]  %s1, 256, %s37, [#allocation8], 128, 128, 8
    $region9: #{lstm_model_forward.1} parent=1 // pred_fallthru
      _
    // Predicated region
    $region10: #{lstm_model_forward.1} parent=1 // pred_check
      _
    $region11: #{lstm_model_forward.1} parent=1 // pred_check_branch
      %44 = sbr.rel (0) target = $region13
    $region12: #{lstm_model_forward.1} parent=1 // pred_region
      _
    $region13: #{lstm_model_forward.1} parent=1 // pred_fallthru
      _
    // Predicated region
    $region14: #{lstm_model_forward.1} parent=1 // pred_check
      _
    $region15: #{lstm_model_forward.1} parent=1 // pred_check_branch
      %46 = sbr.rel (0) target = $region17
    $region16: #{lstm_model_forward.1} parent=1 // pred_region
      _
    $region17: #{lstm_model_forward.1} parent=1 // pred_fallthru
      _
    // Predicated region
    $region18: #{lstm_model_forward.1} parent=1 // pred_check
      _
    $region19: #{lstm_model_forward.1} parent=1 // pred_check_branch
      %48 = sbr.rel (0) target = $region21
    $region20: #{lstm_model_forward.1} parent=1 // pred_region
      _
    $region21: #{lstm_model_forward.1} parent=1 // pred_fallthru
      _
    // Predicated region
    $region22: #{lstm_model_forward.1} parent=1 // pred_check
      _
    $region23: #{lstm_model_forward.1} parent=1 // pred_check_branch
      %50 = sbr.rel (0) target = $region25
    $region24: #{lstm_model_forward.1} parent=1 // pred_region
      _
    $region25: #{lstm_model_forward.1} parent=1 // pred_fallthru
      _
    // Predicated region
    $region26: #{lstm_model_forward.1} parent=1 // pred_check
      _
    $region27: #{lstm_model_forward.1} parent=1 // pred_check_branch
      %52 = sbr.rel (0) target = $region29
    $region28: #{lstm_model_forward.1} parent=1 // pred_region
      _
    $region29: #{lstm_model_forward.1} parent=1 // pred_fallthru
      _
    // Predicated region
    $region30: #{lstm_model_forward.1} parent=1 // pred_check
      _
    $region31: #{lstm_model_forward.1} parent=1 // pred_check_branch
      %54 = sbr.rel (0) target = $region33
    $region32: #{lstm_model_forward.1} parent=1 // pred_region
      _
    $region33: #{lstm_model_forward.1} parent=1 // pred_fallthru
      _
    // Predicated region
    $region34: #{lstm_model_forward.1} parent=1 // pred_check
      _
    $region35: #{lstm_model_forward.1} parent=1 // pred_check_branch
      %56 = sbr.rel (0) target = $region37
    $region36: #{lstm_model_forward.1} parent=1 // pred_region
      %s58 = ssub.s32 16, 16
      %59 = vsyncadd [#allocation8], %s58
      %s61 = sshll.u32 [#allocation9], 4
      %s62 = int_to_ptr.vmem [resolvable:$true] %s61
      %64 = dma.hbm_to_vmem [thread:$0]  %s8, 16, %s62, [#allocation8]
    $region37: #{lstm_model_forward.1} parent=1 // pred_fallthru
      _
    // Predicated region
    $region38: #{lstm_model_forward.1} parent=1 // pred_check
      _
    $region39: #{lstm_model_forward.1} parent=1 // pred_check_branch
      %66 = sbr.rel (0) target = $region41
    $region40: #{lstm_model_forward.1} parent=1 // pred_region
      %67 = dma.done [#allocation5], 256
    $region41: #{lstm_model_forward.1} parent=1 // pred_fallthru
      _
    // Predicated region
    $region42: #{lstm_model_forward.1} parent=1 // pred_check
      _
    $region43: #{lstm_model_forward.1} parent=1 // pred_check_branch
      %69 = sbr.rel (0) target = $region45
    $region44: #{lstm_model_forward.1} parent=1 // pred_region
      %70 = dma.done [#allocation8], 256
    $region45: #{lstm_model_forward.1} parent=1 // pred_fallthru
      _
    // Predicated region
    $region46: #{lstm_model_forward.1} parent=1 // pred_check
      _
    $region47: #{lstm_model_forward.1} parent=1 // pred_check_branch
      %72 = sbr.rel (0) target = $region49
    $region48: #{lstm_model_forward.1} parent=1 // pred_region
      %73 = dma.done [#allocation8], 16
    $region49: #{lstm_model_forward.1} parent=1 // pred_fallthru
      _
    %v74 = vld [vmem:[#allocation4] sm:$0x1]
    %v75 = vld [vmem:[#allocation4 + $0x8] sm:$0x1]
    %v78 = vrot.slane %v75, 7
    %vm79 = vcmask 1041409
    %v80 = vsel %vm79, %v78, %v74
    %vm82 = vcmask 123904
    %83 = vst.msk [vmem:[#allocation2] sm:$0x3] %vm82, %v80
    %v84 = vld [vmem:[#allocation4 + $0x1] sm:$0x1]
    %v85 = vld [vmem:[#allocation4 + $0x9] sm:$0x1]
    %v88 = vrot.slane %v85, 7
    %v89 = vsel %vm79, %v88, %v84
    %s91 = scalar_lea.vmem [#allocation2], 2
    %92 = vst.msk [vmem:[%s91] sm:$0x3] %vm82, %v89
    %v93 = vld [vmem:[#allocation4 + $0x2] sm:$0x1]
    %v94 = vld [vmem:[#allocation4 + $0xa] sm:$0x1]
    %v97 = vrot.slane %v94, 7
    %v98 = vsel %vm79, %v97, %v93
    %s100 = scalar_lea.vmem [#allocation2], 4
    %101 = vst.msk [vmem:[%s100] sm:$0x3] %vm82, %v98
    %v102 = vld [vmem:[#allocation4 + $0x3] sm:$0x1]
    %v103 = vld [vmem:[#allocation4 + $0xb] sm:$0x1]
    %v106 = vrot.slane %v103, 7
    %v107 = vsel %vm79, %v106, %v102
    %s109 = scalar_lea.vmem [#allocation2], 6
    %110 = vst.msk [vmem:[%s109] sm:$0x3] %vm82, %v107
    %v111 = vld [vmem:[#allocation4 + $0x4] sm:$0x1]
    %v112 = vld [vmem:[#allocation4 + $0xc] sm:$0x1]
    %v115 = vrot.slane %v112, 7
    %v116 = vsel %vm79, %v115, %v111
    %s118 = scalar_lea.vmem [#allocation2], 8
    %119 = vst.msk [vmem:[%s118] sm:$0x3] %vm82, %v116
    %v120 = vld [vmem:[#allocation4 + $0x5] sm:$0x1]
    %v121 = vld [vmem:[#allocation4 + $0xd] sm:$0x1]
    %v124 = vrot.slane %v121, 7
    %v125 = vsel %vm79, %v124, %v120
    %s127 = scalar_lea.vmem [#allocation2], 10
    %128 = vst.msk [vmem:[%s127] sm:$0x3] %vm82, %v125
    %v129 = vld [vmem:[#allocation4 + $0x6] sm:$0x1]
    %v130 = vld [vmem:[#allocation4 + $0xe] sm:$0x1]
    %v133 = vrot.slane %v130, 7
    %v134 = vsel %vm79, %v133, %v129
    %s136 = scalar_lea.vmem [#allocation2], 12
    %137 = vst.msk [vmem:[%s136] sm:$0x3] %vm82, %v134
    %v138 = vld [vmem:[#allocation4 + $0x7] sm:$0x1]
    %v139 = vld [vmem:[#allocation4 + $0xf] sm:$0x1]
    %v142 = vrot.slane %v139, 7
    %v143 = vsel %vm79, %v142, %v138
    %s145 = scalar_lea.vmem [#allocation2], 14
    %146 = vst.msk [vmem:[%s145] sm:$0x3] %vm82, %v143
    %v147 = vld [vmem:[#allocation7] sm:$0xff]
    %v148 = vld [vmem:[#allocation7 + $0x8] sm:$0xff]
    %v149 = vld [vmem:[%s2] sm:$0xff]
    %v150 = vld [vmem:[%s2 + $0x8] sm:$0xff]
    %v151 = vld [vmem:[%s2 + $0x10] sm:$0xff]
    %v152 = vld [vmem:[%s2 + $0x18] sm:$0xff]
    %v153 = vld [vmem:[%s3] sm:$0x1]
    %v154 = vld [vmem:[%s4] sm:$0xff]
    %v155 = vld [vmem:[%s4 + $0x8] sm:$0xff]
    %v156 = vld [vmem:[%s4 + $0x10] sm:$0xff]
    %v157 = vld [vmem:[%s4 + $0x18] sm:$0xff]
    %v158 = vld [vmem:[%s5] sm:$0xff]
    %v159 = vld [vmem:[%s5 + $0x8] sm:$0xff]
    %v160 = vld [vmem:[%s5 + $0x10] sm:$0xff]
    %v161 = vld [vmem:[%s5 + $0x18] sm:$0xff]
    %v162 = vld [vmem:[%s6] sm:$0x1]
    %v163 = vld [vmem:[#allocation2] sm:$0x3]
    %vm164 = vcmask 261120
    %v166 = vsel %vm164, 0.0, 0
    %168 = vmatprep.subr.mxu0 0.0
    %169 = vmatpush1.msra.mxu0 %v149
    %170 = vmatprep.subr.mxu0 0.0
    %171 = vmatpush1.msra.mxu0 %v150
    %172 = vmatprep.subr.mxu0 0.0
    %173 = vmatpush1.msra.mxu0 %v151
    %174 = vmatprep.subr.mxu0 0.0
    %175 = vmatpush1.msra.mxu0 %v152
    %176 = vmatprep.subr.mxu0 0.0
    %177 = vmatpush1.msra.mxu0 0.0
    %178 = vmatprep.subr.mxu0 0.0
    %179 = vmatpush1.msra.mxu0 0.0
    %180 = vmatprep.subr.mxu0 0.0
    %181 = vmatpush1.msra.mxu0 0.0
    %182 = vmatprep.subr.mxu0 0.0
    %183 = vmatpush1.msra.mxu0 0.0
    %184 = vmatprep.subr.mxu0 0.0
    %185 = vmatpush1.msra.mxu0 0.0
    %186 = vmatprep.subr.mxu0 0.0
    %187 = vmatpush1.msra.mxu0 0.0
    %188 = vmatprep.subr.mxu0 0.0
    %189 = vmatpush1.msra.mxu0 0.0
    %190 = vmatprep.subr.mxu0 0.0
    %191 = vmatpush1.msra.mxu0 0.0
    %192 = vmatprep.subr.mxu0 0.0
    %193 = vmatpush1.msra.mxu0 0.0
    %194 = vmatprep.subr.mxu0 0.0
    %195 = vmatpush1.msra.mxu0 0.0
    %196 = vmatprep.subr.mxu0 0.0
    %197 = vmatpush1.msra.mxu0 0.0
    %198 = vmatprep.subr.mxu0 0.0
    %199 = vmatpush1.msra.mxu0 0.0
    %200 = vmatprep.subr.mxu0 0.0
    %201 = vmatpush1.msra.mxu0 0.0
    %202 = vmatprep.subr.mxu0 0.0
    %203 = vmatpush1.msra.mxu0 0.0
    %204 = vmatprep.subr.mxu0 0.0
    %205 = vmatpush1.msra.mxu0 0.0
    %206 = vmatprep.subr.mxu0 0.0
    %207 = vmatpush1.msra.mxu0 0.0
    %208 = vmatprep.subr.mxu0 0.0
    %209 = vmatpush1.msra.mxu0 0.0
    %210 = vmatprep.subr.mxu0 0.0
    %211 = vmatpush1.msra.mxu0 0.0
    %212 = vmatprep.subr.mxu0 0.0
    %213 = vmatpush1.msra.mxu0 0.0
    %214 = vmatprep.subr.mxu0 0.0
    %215 = vmatpush1.msra.mxu0 0.0
    %216 = vmatprep.subr.mxu0 0.0
    %217 = vmatpush1.msra.mxu0 0.0
    %218 = vmatprep.subr.mxu0 0.0
    %219 = vmatpush1.msra.mxu0 0.0
    %220 = vmatprep.subr.mxu0 0.0
    %221 = vmatpush1.msra.mxu0 0.0
    %222 = vmatprep.subr.mxu0 0.0
    %223 = vmatpush1.msra.mxu0 0.0
    %224 = vmatprep.subr.mxu0 0.0
    %225 = vmatpush1.msra.mxu0 0.0
    %226 = vmatprep.subr.mxu0 0.0
    %227 = vmatpush1.msra.mxu0 0.0
    %228 = vmatprep.subr.mxu0 0.0
    %229 = vmatpush1.msra.mxu0 0.0
    %230 = vmatprep.subr.mxu0 0.0
    %231 = vmatpush1.msra.mxu0 0.0
    %232 = vmatprep.mubr.f32.mxu0 0.0
    %233 = vmatmul.mubr.f32.gmra.mrb[0].mxu0 %v166
    %v234 = vpop.f32.mrb[0].mxu0
    %v235 = vadd.f32 0.0, %v234
    %v236 = vpop.f32.mrb[0].mxu0
    %237 = vdwg.mxu0
    %vm238 = vcmask 130048
    %v240 = vsel %vm238, %v163, 0
    %242 = vmatprep.subr.mxu0 0.0
    %243 = vmatpush1.msra.mxu0 %v147
    %244 = vmatprep.subr.mxu0 0.0
    %245 = vmatpush1.msra.mxu0 %v148
    %246 = vmatprep.subr.mxu0 0.0
    %247 = vmatpush1.msra.mxu0 0.0
    %248 = vmatprep.subr.mxu0 0.0
    %249 = vmatpush1.msra.mxu0 0.0
    %250 = vmatprep.subr.mxu0 0.0
    %251 = vmatpush1.msra.mxu0 0.0
    %252 = vmatprep.subr.mxu0 0.0
    %253 = vmatpush1.msra.mxu0 0.0
    %254 = vmatprep.subr.mxu0 0.0
    %255 = vmatpush1.msra.mxu0 0.0
    %256 = vmatprep.subr.mxu0 0.0
    %257 = vmatpush1.msra.mxu0 0.0
    %258 = vmatprep.subr.mxu0 0.0
    %259 = vmatpush1.msra.mxu0 0.0
    %260 = vmatprep.subr.mxu0 0.0
    %261 = vmatpush1.msra.mxu0 0.0
    %262 = vmatprep.subr.mxu0 0.0
    %263 = vmatpush1.msra.mxu0 0.0
    %264 = vmatprep.subr.mxu0 0.0
    %265 = vmatpush1.msra.mxu0 0.0
    %266 = vmatprep.subr.mxu0 0.0
    %267 = vmatpush1.msra.mxu0 0.0
    %268 = vmatprep.subr.mxu0 0.0
    %269 = vmatpush1.msra.mxu0 0.0
    %270 = vmatprep.subr.mxu0 0.0
    %271 = vmatpush1.msra.mxu0 0.0
    %272 = vmatprep.subr.mxu0 0.0
    %273 = vmatpush1.msra.mxu0 0.0
    %274 = vmatprep.subr.mxu0 0.0
    %275 = vmatpush1.msra.mxu0 0.0
    %276 = vmatprep.subr.mxu0 0.0
    %277 = vmatpush1.msra.mxu0 0.0
    %278 = vmatprep.subr.mxu0 0.0
    %279 = vmatpush1.msra.mxu0 0.0
    %280 = vmatprep.subr.mxu0 0.0
    %281 = vmatpush1.msra.mxu0 0.0
    %282 = vmatprep.subr.mxu0 0.0
    %283 = vmatpush1.msra.mxu0 0.0
    %284 = vmatprep.subr.mxu0 0.0
    %285 = vmatpush1.msra.mxu0 0.0
    %286 = vmatprep.subr.mxu0 0.0
    %287 = vmatpush1.msra.mxu0 0.0
    %288 = vmatprep.subr.mxu0 0.0
    %289 = vmatpush1.msra.mxu0 0.0
    %290 = vmatprep.subr.mxu0 0.0
    %291 = vmatpush1.msra.mxu0 0.0
    %292 = vmatprep.subr.mxu0 0.0
    %293 = vmatpush1.msra.mxu0 0.0
    %294 = vmatprep.subr.mxu0 0.0
    %295 = vmatpush1.msra.mxu0 0.0
    %296 = vmatprep.subr.mxu0 0.0
    %297 = vmatpush1.msra.mxu0 0.0
    %298 = vmatprep.subr.mxu0 0.0
    %299 = vmatpush1.msra.mxu0 0.0
    %300 = vmatprep.subr.mxu0 0.0
    %301 = vmatpush1.msra.mxu0 0.0
    %302 = vmatprep.subr.mxu0 0.0
    %303 = vmatpush1.msra.mxu0 0.0
    %304 = vmatprep.subr.mxu0 0.0
    %305 = vmatpush1.msra.mxu0 0.0
    %306 = vmatprep.mubr.f32.mxu0 0.0
    %307 = vmatmul.mubr.f32.gmra.mrb[0].mxu0 %v240
    %v308 = vpop.f32.mrb[0].mxu0
    %v309 = vadd.f32 %v235, %v308
    %v310 = vpop.f32.mrb[0].mxu0
    %311 = vdwg.mxu0
    %v313 = vlaneseq
    %v314 = vshrl.u32 %v313, 7
    %v315 = vsub.s32 0, %v314
    %v316 = vrot.slane %v153, %v315
    %v318 = vadd.f32 %v309, %v316
    %v319 = vxor.u32 %v318, 2147483648
    %v320 = vmul.f32 %v319, 1.442695
    %v321 = vpow.pop %v320
    %v322 = vadd.f32 %v321, 1.0
    %v323 = vrcp.pop %v322
    %v324 = vmul.f32 1.0, %v323
    %v325 = vtanh.pop %v318
    %v326 = vmul.f32 %v324, 0.0
    %328 = vrot.lane.b32.xlu0 %v325, 64
    %v329 = vpop.permute.xlu0 %328
    %v331 = vmul.f32 %v324, %v329
    %333 = vrot.lane.b32.xlu0 %v331, 32
    %v334 = vpop.permute.xlu0 %333
    %v336 = vadd.f32 %v326, %v334
    %v337 = vtanh.pop %v336
    %339 = vrot.lane.b32.xlu0 %v337, 64
    %v340 = vpop.permute.xlu0 %339
    %v342 = vmul.f32 %v324, %v340
    %343 = vmatprep.subr.mxu0 0.0
    %344 = vmatpush1.msra.mxu0 %v158
    %345 = vmatprep.subr.mxu0 0.0
    %346 = vmatpush1.msra.mxu0 %v159
    %347 = vmatprep.subr.mxu0 0.0
    %348 = vmatpush1.msra.mxu0 %v160
    %349 = vmatprep.subr.mxu0 0.0
    %350 = vmatpush1.msra.mxu0 %v161
    %351 = vmatprep.subr.mxu0 0.0
    %352 = vmatpush1.msra.mxu0 0.0
    %353 = vmatprep.subr.mxu0 0.0
    %354 = vmatpush1.msra.mxu0 0.0
    %355 = vmatprep.subr.mxu0 0.0
    %356 = vmatpush1.msra.mxu0 0.0
    %357 = vmatprep.subr.mxu0 0.0
    %358 = vmatpush1.msra.mxu0 0.0
    %359 = vmatprep.subr.mxu0 0.0
    %360 = vmatpush1.msra.mxu0 0.0
    %361 = vmatprep.subr.mxu0 0.0
    %362 = vmatpush1.msra.mxu0 0.0
    %363 = vmatprep.subr.mxu0 0.0
    %364 = vmatpush1.msra.mxu0 0.0
    %365 = vmatprep.subr.mxu0 0.0
    %366 = vmatpush1.msra.mxu0 0.0
    %367 = vmatprep.subr.mxu0 0.0
    %368 = vmatpush1.msra.mxu0 0.0
    %369 = vmatprep.subr.mxu0 0.0
    %370 = vmatpush1.msra.mxu0 0.0
    %371 = vmatprep.subr.mxu0 0.0
    %372 = vmatpush1.msra.mxu0 0.0
    %373 = vmatprep.subr.mxu0 0.0
    %374 = vmatpush1.msra.mxu0 0.0
    %375 = vmatprep.subr.mxu0 0.0
    %376 = vmatpush1.msra.mxu0 0.0
    %377 = vmatprep.subr.mxu0 0.0
    %378 = vmatpush1.msra.mxu0 0.0
    %379 = vmatprep.subr.mxu0 0.0
    %380 = vmatpush1.msra.mxu0 0.0
    %381 = vmatprep.subr.mxu0 0.0
    %382 = vmatpush1.msra.mxu0 0.0
    %383 = vmatprep.subr.mxu0 0.0
    %384 = vmatpush1.msra.mxu0 0.0
    %385 = vmatprep.subr.mxu0 0.0
    %386 = vmatpush1.msra.mxu0 0.0
    %387 = vmatprep.subr.mxu0 0.0
    %388 = vmatpush1.msra.mxu0 0.0
    %389 = vmatprep.subr.mxu0 0.0
    %390 = vmatpush1.msra.mxu0 0.0
    %391 = vmatprep.subr.mxu0 0.0
    %392 = vmatpush1.msra.mxu0 0.0
    %393 = vmatprep.subr.mxu0 0.0
    %394 = vmatpush1.msra.mxu0 0.0
    %395 = vmatprep.subr.mxu0 0.0
    %396 = vmatpush1.msra.mxu0 0.0
    %397 = vmatprep.subr.mxu0 0.0
    %398 = vmatpush1.msra.mxu0 0.0
    %399 = vmatprep.subr.mxu0 0.0
    %400 = vmatpush1.msra.mxu0 0.0
    %401 = vmatprep.subr.mxu0 0.0
    %402 = vmatpush1.msra.mxu0 0.0
    %403 = vmatprep.subr.mxu0 0.0
    %404 = vmatpush1.msra.mxu0 0.0
    %405 = vmatprep.subr.mxu0 0.0
    %406 = vmatpush1.msra.mxu0 0.0
    %407 = vmatprep.mubr.f32.mxu0 0.0
    %408 = vmatmul.mubr.f32.gmra.mrb[0].mxu0 %v166
    %v409 = vpop.f32.mrb[0].mxu0
    %v410 = vadd.f32 0.0, %v409
    %v411 = vpop.f32.mrb[0].mxu0
    %412 = vdwg.mxu0
    %414 = vrot.lane.b32.xlu0 %v342, 32
    %v415 = vpop.permute.xlu0 %414
    %v416 = vsel %vm164, %v415, 0
    %418 = vmatprep.subr.mxu0 0.0
    %419 = vmatpush1.msra.mxu0 %v154
    %420 = vmatprep.subr.mxu0 0.0
    %421 = vmatpush1.msra.mxu0 %v155
    %422 = vmatprep.subr.mxu0 0.0
    %423 = vmatpush1.msra.mxu0 %v156
    %424 = vmatprep.subr.mxu0 0.0
    %425 = vmatpush1.msra.mxu0 %v157
    %426 = vmatprep.subr.mxu0 0.0
    %427 = vmatpush1.msra.mxu0 0.0
    %428 = vmatprep.subr.mxu0 0.0
    %429 = vmatpush1.msra.mxu0 0.0
    %430 = vmatprep.subr.mxu0 0.0
    %431 = vmatpush1.msra.mxu0 0.0
    %432 = vmatprep.subr.mxu0 0.0
    %433 = vmatpush1.msra.mxu0 0.0
    %434 = vmatprep.subr.mxu0 0.0
    %435 = vmatpush1.msra.mxu0 0.0
    %436 = vmatprep.subr.mxu0 0.0
    %437 = vmatpush1.msra.mxu0 0.0
    %438 = vmatprep.subr.mxu0 0.0
    %439 = vmatpush1.msra.mxu0 0.0
    %440 = vmatprep.subr.mxu0 0.0
    %441 = vmatpush1.msra.mxu0 0.0
    %442 = vmatprep.subr.mxu0 0.0
    %443 = vmatpush1.msra.mxu0 0.0
    %444 = vmatprep.subr.mxu0 0.0
    %445 = vmatpush1.msra.mxu0 0.0
    %446 = vmatprep.subr.mxu0 0.0
    %447 = vmatpush1.msra.mxu0 0.0
    %448 = vmatprep.subr.mxu0 0.0
    %449 = vmatpush1.msra.mxu0 0.0
    %450 = vmatprep.subr.mxu0 0.0
    %451 = vmatpush1.msra.mxu0 0.0
    %452 = vmatprep.subr.mxu0 0.0
    %453 = vmatpush1.msra.mxu0 0.0
    %454 = vmatprep.subr.mxu0 0.0
    %455 = vmatpush1.msra.mxu0 0.0
    %456 = vmatprep.subr.mxu0 0.0
    %457 = vmatpush1.msra.mxu0 0.0
    %458 = vmatprep.subr.mxu0 0.0
    %459 = vmatpush1.msra.mxu0 0.0
    %460 = vmatprep.subr.mxu0 0.0
    %461 = vmatpush1.msra.mxu0 0.0
    %462 = vmatprep.subr.mxu0 0.0
    %463 = vmatpush1.msra.mxu0 0.0
    %464 = vmatprep.subr.mxu0 0.0
    %465 = vmatpush1.msra.mxu0 0.0
    %466 = vmatprep.subr.mxu0 0.0
    %467 = vmatpush1.msra.mxu0 0.0
    %468 = vmatprep.subr.mxu0 0.0
    %469 = vmatpush1.msra.mxu0 0.0
    %470 = vmatprep.subr.mxu0 0.0
    %471 = vmatpush1.msra.mxu0 0.0
    %472 = vmatprep.subr.mxu0 0.0
    %473 = vmatpush1.msra.mxu0 0.0
    %474 = vmatprep.subr.mxu0 0.0
    %475 = vmatpush1.msra.mxu0 0.0
    %476 = vmatprep.subr.mxu0 0.0
    %477 = vmatpush1.msra.mxu0 0.0
    %478 = vmatprep.subr.mxu0 0.0
    %479 = vmatpush1.msra.mxu0 0.0
    %480 = vmatprep.subr.mxu0 0.0
    %481 = vmatpush1.msra.mxu0 0.0
    %482 = vmatprep.mubr.f32.mxu0 0.0
    %483 = vmatmul.mubr.f32.gmra.mrb[0].mxu0 %v416
    %v484 = vpop.f32.mrb[0].mxu0
    %v485 = vadd.f32 %v410, %v484
    %v486 = vpop.f32.mrb[0].mxu0
    %487 = vdwg.mxu0
    %v489 = vlaneseq
    %v490 = vshrl.u32 %v489, 7
    %v491 = vsub.s32 0, %v490
    %v492 = vrot.slane %v162, %v491
    %v494 = vadd.f32 %v485, %v492
    %v495 = vxor.u32 %v494, 2147483648
    %v496 = vmul.f32 %v495, 1.442695
    %v497 = vpow.pop %v496
    %v498 = vadd.f32 %v497, 1.0
    %v499 = vrcp.pop %v498
    %v500 = vmul.f32 1.0, %v499
    %v501 = vtanh.pop %v494
    %v502 = vmul.f32 %v500, 0.0
    %504 = vrot.lane.b32.xlu0 %v501, 64
    %v505 = vpop.permute.xlu0 %504
    %v507 = vmul.f32 %v500, %v505
    %509 = vrot.lane.b32.xlu0 %v507, 32
    %v510 = vpop.permute.xlu0 %509
    %v512 = vadd.f32 %v502, %v510
    %v513 = vtanh.pop %v512
    %515 = vrot.lane.b32.xlu0 %v513, 64
    %v516 = vpop.permute.xlu0 %515
    %v518 = vmul.f32 %v500, %v516
    %520 = vrot.lane.b32.xlu0 %v518, 32
    %v521 = vpop.permute.xlu0 %520
    %vm523 = vcmask 254976
    %524 = vst.msk [vmem:[#allocation3] sm:$0x3] %vm523, %v521
    %v525 = vld [vmem:[%s91] sm:$0x3]
    %526 = vmatprep.subr.mxu0 0.0
    %527 = vmatpush1.msra.mxu0 %v149
    %528 = vmatprep.subr.mxu0 0.0
    %529 = vmatpush1.msra.mxu0 %v150
    %530 = vmatprep.subr.mxu0 0.0
    %531 = vmatpush1.msra.mxu0 %v151
    %532 = vmatprep.subr.mxu0 0.0
    %533 = vmatpush1.msra.mxu0 %v152
    %534 = vmatprep.subr.mxu0 0.0
    %535 = vmatpush1.msra.mxu0 0.0
    %536 = vmatprep.subr.mxu0 0.0
    %537 = vmatpush1.msra.mxu0 0.0
    %538 = vmatprep.subr.mxu0 0.0
    %539 = vmatpush1.msra.mxu0 0.0
    %540 = vmatprep.subr.mxu0 0.0
    %541 = vmatpush1.msra.mxu0 0.0
    %542 = vmatprep.subr.mxu0 0.0
    %543 = vmatpush1.msra.mxu0 0.0
    %544 = vmatprep.subr.mxu0 0.0
    %545 = vmatpush1.msra.mxu0 0.0
    %546 = vmatprep.subr.mxu0 0.0
    %547 = vmatpush1.msra.mxu0 0.0
    %548 = vmatprep.subr.mxu0 0.0
    %549 = vmatpush1.msra.mxu0 0.0
    %550 = vmatprep.subr.mxu0 0.0
    %551 = vmatpush1.msra.mxu0 0.0
    %552 = vmatprep.subr.mxu0 0.0
    %553 = vmatpush1.msra.mxu0 0.0
    %554 = vmatprep.subr.mxu0 0.0
    %555 = vmatpush1.msra.mxu0 0.0
    %556 = vmatprep.subr.mxu0 0.0
    %557 = vmatpush1.msra.mxu0 0.0
    %558 = vmatprep.subr.mxu0 0.0
    %559 = vmatpush1.msra.mxu0 0.0
    %560 = vmatprep.subr.mxu0 0.0
    %561 = vmatpush1.msra.mxu0 0.0
    %562 = vmatprep.subr.mxu0 0.0
    %563 = vmatpush1.msra.mxu0 0.0
    %564 = vmatprep.subr.mxu0 0.0
    %565 = vmatpush1.msra.mxu0 0.0
    %566 = vmatprep.subr.mxu0 0.0
    %567 = vmatpush1.msra.mxu0 0.0
    %568 = vmatprep.subr.mxu0 0.0
    %569 = vmatpush1.msra.mxu0 0.0
    %570 = vmatprep.subr.mxu0 0.0
    %571 = vmatpush1.msra.mxu0 0.0
    %572 = vmatprep.subr.mxu0 0.0
    %573 = vmatpush1.msra.mxu0 0.0
    %574 = vmatprep.subr.mxu0 0.0
    %575 = vmatpush1.msra.mxu0 0.0
    %576 = vmatprep.subr.mxu0 0.0
    %577 = vmatpush1.msra.mxu0 0.0
    %578 = vmatprep.subr.mxu0 0.0
    %579 = vmatpush1.msra.mxu0 0.0
    %580 = vmatprep.subr.mxu0 0.0
    %581 = vmatpush1.msra.mxu0 0.0
    %582 = vmatprep.subr.mxu0 0.0
    %583 = vmatpush1.msra.mxu0 0.0
    %584 = vmatprep.subr.mxu0 0.0
    %585 = vmatpush1.msra.mxu0 0.0
    %586 = vmatprep.subr.mxu0 0.0
    %587 = vmatpush1.msra.mxu0 0.0
    %588 = vmatprep.subr.mxu0 0.0
    %589 = vmatpush1.msra.mxu0 0.0
    %590 = vmatprep.mubr.f32.mxu0 0.0
    %591 = vmatmul.mubr.f32.gmra.mrb[0].mxu0 %v416
    %v592 = vpop.f32.mrb[0].mxu0
    %v593 = vadd.f32 0.0, %v592
    %v594 = vpop.f32.mrb[0].mxu0
    %595 = vdwg.mxu0
    %v597 = vsel %vm238, %v525, 0
    %599 = vmatprep.subr.mxu0 0.0
    %600 = vmatpush1.msra.mxu0 %v147
    %601 = vmatprep.subr.mxu0 0.0
    %602 = vmatpush1.msra.mxu0 %v148
    %603 = vmatprep.subr.mxu0 0.0
    %604 = vmatpush1.msra.mxu0 0.0
    %605 = vmatprep.subr.mxu0 0.0
    %606 = vmatpush1.msra.mxu0 0.0
    %607 = vmatprep.subr.mxu0 0.0
    %608 = vmatpush1.msra.mxu0 0.0
    %609 = vmatprep.subr.mxu0 0.0
    %610 = vmatpush1.msra.mxu0 0.0
    %611 = vmatprep.subr.mxu0 0.0
    %612 = vmatpush1.msra.mxu0 0.0
    %613 = vmatprep.subr.mxu0 0.0
    %614 = vmatpush1.msra.mxu0 0.0
    %615 = vmatprep.subr.mxu0 0.0
    %616 = vmatpush1.msra.mxu0 0.0
    %617 = vmatprep.subr.mxu0 0.0
    %618 = vmatpush1.msra.mxu0 0.0
    %619 = vmatprep.subr.mxu0 0.0
    %620 = vmatpush1.msra.mxu0 0.0
    %621 = vmatprep.subr.mxu0 0.0
    %622 = vmatpush1.msra.mxu0 0.0
    %623 = vmatprep.subr.mxu0 0.0
    %624 = vmatpush1.msra.mxu0 0.0
    %625 = vmatprep.subr.mxu0 0.0
    %626 = vmatpush1.msra.mxu0 0.0
    %627 = vmatprep.subr.mxu0 0.0
    %628 = vmatpush1.msra.mxu0 0.0
    %629 = vmatprep.subr.mxu0 0.0
    %630 = vmatpush1.msra.mxu0 0.0
    %631 = vmatprep.subr.mxu0 0.0
    %632 = vmatpush1.msra.mxu0 0.0
    %633 = vmatprep.subr.mxu0 0.0
    %634 = vmatpush1.msra.mxu0 0.0
    %635 = vmatprep.subr.mxu0 0.0
    %636 = vmatpush1.msra.mxu0 0.0
    %637 = vmatprep.subr.mxu0 0.0
    %638 = vmatpush1.msra.mxu0 0.0
    %639 = vmatprep.subr.mxu0 0.0
    %640 = vmatpush1.msra.mxu0 0.0
    %641 = vmatprep.subr.mxu0 0.0
    %642 = vmatpush1.msra.mxu0 0.0
    %643 = vmatprep.subr.mxu0 0.0
    %644 = vmatpush1.msra.mxu0 0.0
    %645 = vmatprep.subr.mxu0 0.0
    %646 = vmatpush1.msra.mxu0 0.0
    %647 = vmatprep.subr.mxu0 0.0
    %648 = vmatpush1.msra.mxu0 0.0
    %649 = vmatprep.subr.mxu0 0.0
    %650 = vmatpush1.msra.mxu0 0.0
    %651 = vmatprep.subr.mxu0 0.0
    %652 = vmatpush1.msra.mxu0 0.0
    %653 = vmatprep.subr.mxu0 0.0
    %654 = vmatpush1.msra.mxu0 0.0
    %655 = vmatprep.subr.mxu0 0.0
    %656 = vmatpush1.msra.mxu0 0.0
    %657 = vmatprep.subr.mxu0 0.0
    %658 = vmatpush1.msra.mxu0 0.0
    %659 = vmatprep.subr.mxu0 0.0
    %660 = vmatpush1.msra.mxu0 0.0
    %661 = vmatprep.subr.mxu0 0.0
    %662 = vmatpush1.msra.mxu0 0.0
    %663 = vmatprep.mubr.f32.mxu0 0.0
    %664 = vmatmul.mubr.f32.gmra.mrb[0].mxu0 %v597
    %v665 = vpop.f32.mrb[0].mxu0
    %v666 = vadd.f32 %v593, %v665
    %v667 = vpop.f32.mrb[0].mxu0
    %668 = vdwg.mxu0
    %v669 = vadd.f32 %v666, %v316
    %v670 = vxor.u32 %v669, 2147483648
    %v671 = vmul.f32 %v670, 1.442695
    %v672 = vpow.pop %v671
    %v673 = vadd.f32 %v672, 1.0
    %v674 = vrcp.pop %v673
    %v675 = vmul.f32 1.0, %v674
    %v676 = vtanh.pop %v669
    %v677 = vmul.f32 %v675, %v336
    %679 = vrot.lane.b32.xlu0 %v676, 64
    %v680 = vpop.permute.xlu0 %679
    %v682 = vmul.f32 %v675, %v680
    %684 = vrot.lane.b32.xlu0 %v682, 32
    %v685 = vpop.permute.xlu0 %684
    %v687 = vadd.f32 %v677, %v685
    %v688 = vtanh.pop %v687
    %690 = vrot.lane.b32.xlu0 %v688, 64
    %v691 = vpop.permute.xlu0 %690
    %v693 = vmul.f32 %v675, %v691
    %v694 = vsel %vm164, %v521, 0
    %696 = vmatprep.subr.mxu0 0.0
    %697 = vmatpush1.msra.mxu0 %v158
    %698 = vmatprep.subr.mxu0 0.0
    %699 = vmatpush1.msra.mxu0 %v159
    %700 = vmatprep.subr.mxu0 0.0
    %701 = vmatpush1.msra.mxu0 %v160
    %702 = vmatprep.subr.mxu0 0.0
    %703 = vmatpush1.msra.mxu0 %v161
    %704 = vmatprep.subr.mxu0 0.0
    %705 = vmatpush1.msra.mxu0 0.0
    %706 = vmatprep.subr.mxu0 0.0
    %707 = vmatpush1.msra.mxu0 0.0
    %708 = vmatprep.subr.mxu0 0.0
    %709 = vmatpush1.msra.mxu0 0.0
    %710 = vmatprep.subr.mxu0 0.0
    %711 = vmatpush1.msra.mxu0 0.0
    %712 = vmatprep.subr.mxu0 0.0
    %713 = vmatpush1.msra.mxu0 0.0
    %714 = vmatprep.subr.mxu0 0.0
    %715 = vmatpush1.msra.mxu0 0.0
    %716 = vmatprep.subr.mxu0 0.0
    %717 = vmatpush1.msra.mxu0 0.0
    %718 = vmatprep.subr.mxu0 0.0
    %719 = vmatpush1.msra.mxu0 0.0
    %720 = vmatprep.subr.mxu0 0.0
    %721 = vmatpush1.msra.mxu0 0.0
    %722 = vmatprep.subr.mxu0 0.0
    %723 = vmatpush1.msra.mxu0 0.0
    %724 = vmatprep.subr.mxu0 0.0
    %725 = vmatpush1.msra.mxu0 0.0
    %726 = vmatprep.subr.mxu0 0.0
    %727 = vmatpush1.msra.mxu0 0.0
    %728 = vmatprep.subr.mxu0 0.0
    %729 = vmatpush1.msra.mxu0 0.0
    %730 = vmatprep.subr.mxu0 0.0
    %731 = vmatpush1.msra.mxu0 0.0
    %732 = vmatprep.subr.mxu0 0.0
    %733 = vmatpush1.msra.mxu0 0.0
    %734 = vmatprep.subr.mxu0 0.0
    %735 = vmatpush1.msra.mxu0 0.0
    %736 = vmatprep.subr.mxu0 0.0
    %737 = vmatpush1.msra.mxu0 0.0
    %738 = vmatprep.subr.mxu0 0.0
    %739 = vmatpush1.msra.mxu0 0.0
    %740 = vmatprep.subr.mxu0 0.0
    %741 = vmatpush1.msra.mxu0 0.0
    %742 = vmatprep.subr.mxu0 0.0
    %743 = vmatpush1.msra.mxu0 0.0
    %744 = vmatprep.subr.mxu0 0.0
    %745 = vmatpush1.msra.mxu0 0.0
    %746 = vmatprep.subr.mxu0 0.0
    %747 = vmatpush1.msra.mxu0 0.0
    %748 = vmatprep.subr.mxu0 0.0
    %749 = vmatpush1.msra.mxu0 0.0
    %750 = vmatprep.subr.mxu0 0.0
    %751 = vmatpush1.msra.mxu0 0.0
    %752 = vmatprep.subr.mxu0 0.0
    %753 = vmatpush1.msra.mxu0 0.0
    %754 = vmatprep.subr.mxu0 0.0
    %755 = vmatpush1.msra.mxu0 0.0
    %756 = vmatprep.subr.mxu0 0.0
    %757 = vmatpush1.msra.mxu0 0.0
    %758 = vmatprep.subr.mxu0 0.0
    %759 = vmatpush1.msra.mxu0 0.0
    %760 = vmatprep.mubr.f32.mxu0 0.0
    %761 = vmatmul.mubr.f32.gmra.mrb[0].mxu0 %v694
    %v762 = vpop.f32.mrb[0].mxu0
    %v763 = vadd.f32 0.0, %v762
    %v764 = vpop.f32.mrb[0].mxu0
    %765 = vdwg.mxu0
    %767 = vrot.lane.b32.xlu0 %v693, 32
    %v768 = vpop.permute.xlu0 %767
    %v769 = vsel %vm164, %v768, 0
    %771 = vmatprep.subr.mxu0 0.0
    %772 = vmatpush1.msra.mxu0 %v154
    %773 = vmatprep.subr.mxu0 0.0
    %774 = vmatpush1.msra.mxu0 %v155
    %775 = vmatprep.subr.mxu0 0.0
    %776 = vmatpush1.msra.mxu0 %v156
    %777 = vmatprep.subr.mxu0 0.0
    %778 = vmatpush1.msra.mxu0 %v157
    %779 = vmatprep.subr.mxu0 0.0
    %780 = vmatpush1.msra.mxu0 0.0
    %781 = vmatprep.subr.mxu0 0.0
    %782 = vmatpush1.msra.mxu0 0.0
    %783 = vmatprep.subr.mxu0 0.0
    %784 = vmatpush1.msra.mxu0 0.0
    %785 = vmatprep.subr.mxu0 0.0
    %786 = vmatpush1.msra.mxu0 0.0
    %787 = vmatprep.subr.mxu0 0.0
    %788 = vmatpush1.msra.mxu0 0.0
    %789 = vmatprep.subr.mxu0 0.0
    %790 = vmatpush1.msra.mxu0 0.0
    %791 = vmatprep.subr.mxu0 0.0
    %792 = vmatpush1.msra.mxu0 0.0
    %793 = vmatprep.subr.mxu0 0.0
    %794 = vmatpush1.msra.mxu0 0.0
    %795 = vmatprep.subr.mxu0 0.0
    %796 = vmatpush1.msra.mxu0 0.0
    %797 = vmatprep.subr.mxu0 0.0
    %798 = vmatpush1.msra.mxu0 0.0
    %799 = vmatprep.subr.mxu0 0.0
    %800 = vmatpush1.msra.mxu0 0.0
    %801 = vmatprep.subr.mxu0 0.0
    %802 = vmatpush1.msra.mxu0 0.0
    %803 = vmatprep.subr.mxu0 0.0
    %804 = vmatpush1.msra.mxu0 0.0
    %805 = vmatprep.subr.mxu0 0.0
    %806 = vmatpush1.msra.mxu0 0.0
    %807 = vmatprep.subr.mxu0 0.0
    %808 = vmatpush1.msra.mxu0 0.0
    %809 = vmatprep.subr.mxu0 0.0
    %810 = vmatpush1.msra.mxu0 0.0
    %811 = vmatprep.subr.mxu0 0.0
    %812 = vmatpush1.msra.mxu0 0.0
    %813 = vmatprep.subr.mxu0 0.0
    %814 = vmatpush1.msra.mxu0 0.0
    %815 = vmatprep.subr.mxu0 0.0
    %816 = vmatpush1.msra.mxu0 0.0
    %817 = vmatprep.subr.mxu0 0.0
    %818 = vmatpush1.msra.mxu0 0.0
    %819 = vmatprep.subr.mxu0 0.0
    %820 = vmatpush1.msra.mxu0 0.0
    %821 = vmatprep.subr.mxu0 0.0
    %822 = vmatpush1.msra.mxu0 0.0
    %823 = vmatprep.subr.mxu0 0.0
    %824 = vmatpush1.msra.mxu0 0.0
    %825 = vmatprep.subr.mxu0 0.0
    %826 = vmatpush1.msra.mxu0 0.0
    %827 = vmatprep.subr.mxu0 0.0
    %828 = vmatpush1.msra.mxu0 0.0
    %829 = vmatprep.subr.mxu0 0.0
    %830 = vmatpush1.msra.mxu0 0.0
    %831 = vmatprep.subr.mxu0 0.0
    %832 = vmatpush1.msra.mxu0 0.0
    %833 = vmatprep.subr.mxu0 0.0
    %834 = vmatpush1.msra.mxu0 0.0
    %835 = vmatprep.mubr.f32.mxu0 0.0
    %836 = vmatmul.mubr.f32.gmra.mrb[0].mxu0 %v769
    %v837 = vpop.f32.mrb[0].mxu0
    %v838 = vadd.f32 %v763, %v837
    %v839 = vpop.f32.mrb[0].mxu0
    %840 = vdwg.mxu0
    %v841 = vadd.f32 %v838, %v492
    %v842 = vxor.u32 %v841, 2147483648
    %v843 = vmul.f32 %v842, 1.442695
    %v844 = vpow.pop %v843
    %v845 = vadd.f32 %v844, 1.0
    %v846 = vrcp.pop %v845
    %v847 = vmul.f32 1.0, %v846
    %v848 = vtanh.pop %v841
    %v849 = vmul.f32 %v847, %v512
    %851 = vrot.lane.b32.xlu0 %v848, 64
    %v852 = vpop.permute.xlu0 %851
    %v854 = vmul.f32 %v847, %v852
    %856 = vrot.lane.b32.xlu0 %v854, 32
    %v857 = vpop.permute.xlu0 %856
    %v859 = vadd.f32 %v849, %v857
    %v860 = vtanh.pop %v859
    %862 = vrot.lane.b32.xlu0 %v860, 64
    %v863 = vpop.permute.xlu0 %862
    %v865 = vmul.f32 %v847, %v863
    %867 = vrot.lane.b32.xlu0 %v865, 32
    %v868 = vpop.permute.xlu0 %867
    %s870 = scalar_lea.vmem [#allocation3], 2
    %871 = vst.msk [vmem:[%s870] sm:$0x3] %vm523, %v868
    %v872 = vld [vmem:[%s100] sm:$0x3]
    %873 = vmatprep.subr.mxu0 0.0
    %874 = vmatpush1.msra.mxu0 %v149
    %875 = vmatprep.subr.mxu0 0.0
    %876 = vmatpush1.msra.mxu0 %v150
    %877 = vmatprep.subr.mxu0 0.0
    %878 = vmatpush1.msra.mxu0 %v151
    %879 = vmatprep.subr.mxu0 0.0
    %880 = vmatpush1.msra.mxu0 %v152
    %881 = vmatprep.subr.mxu0 0.0
    %882 = vmatpush1.msra.mxu0 0.0
    %883 = vmatprep.subr.mxu0 0.0
    %884 = vmatpush1.msra.mxu0 0.0
    %885 = vmatprep.subr.mxu0 0.0
    %886 = vmatpush1.msra.mxu0 0.0
    %887 = vmatprep.subr.mxu0 0.0
    %888 = vmatpush1.msra.mxu0 0.0
    %889 = vmatprep.subr.mxu0 0.0
    %890 = vmatpush1.msra.mxu0 0.0
    %891 = vmatprep.subr.mxu0 0.0
    %892 = vmatpush1.msra.mxu0 0.0
    %893 = vmatprep.subr.mxu0 0.0
    %894 = vmatpush1.msra.mxu0 0.0
    %895 = vmatprep.subr.mxu0 0.0
    %896 = vmatpush1.msra.mxu0 0.0
    %897 = vmatprep.subr.mxu0 0.0
    %898 = vmatpush1.msra.mxu0 0.0
    %899 = vmatprep.subr.mxu0 0.0
    %900 = vmatpush1.msra.mxu0 0.0
    %901 = vmatprep.subr.mxu0 0.0
    %902 = vmatpush1.msra.mxu0 0.0
    %903 = vmatprep.subr.mxu0 0.0
    %904 = vmatpush1.msra.mxu0 0.0
    %905 = vmatprep.subr.mxu0 0.0
    %906 = vmatpush1.msra.mxu0 0.0
    %907 = vmatprep.subr.mxu0 0.0
    %908 = vmatpush1.msra.mxu0 0.0
    %909 = vmatprep.subr.mxu0 0.0
    %910 = vmatpush1.msra.mxu0 0.0
    %911 = vmatprep.subr.mxu0 0.0
    %912 = vmatpush1.msra.mxu0 0.0
    %913 = vmatprep.subr.mxu0 0.0
    %914 = vmatpush1.msra.mxu0 0.0
    %915 = vmatprep.subr.mxu0 0.0
    %916 = vmatpush1.msra.mxu0 0.0
    %917 = vmatprep.subr.mxu0 0.0
    %918 = vmatpush1.msra.mxu0 0.0
    %919 = vmatprep.subr.mxu0 0.0
    %920 = vmatpush1.msra.mxu0 0.0
    %921 = vmatprep.subr.mxu0 0.0
    %922 = vmatpush1.msra.mxu0 0.0
    %923 = vmatprep.subr.mxu0 0.0
    %924 = vmatpush1.msra.mxu0 0.0
    %925 = vmatprep.subr.mxu0 0.0
    %926 = vmatpush1.msra.mxu0 0.0
    %927 = vmatprep.subr.mxu0 0.0
    %928 = vmatpush1.msra.mxu0 0.0
    %929 = vmatprep.subr.mxu0 0.0
    %930 = vmatpush1.msra.mxu0 0.0
    %931 = vmatprep.subr.mxu0 0.0
    %932 = vmatpush1.msra.mxu0 0.0
    %933 = vmatprep.subr.mxu0 0.0
    %934 = vmatpush1.msra.mxu0 0.0
    %935 = vmatprep.subr.mxu0 0.0
    %936 = vmatpush1.msra.mxu0 0.0
    %937 = vmatprep.mubr.f32.mxu0 0.0
    %938 = vmatmul.mubr.f32.gmra.mrb[0].mxu0 %v769
    %v939 = vpop.f32.mrb[0].mxu0
    %v940 = vadd.f32 0.0, %v939
    %v941 = vpop.f32.mrb[0].mxu0
    %942 = vdwg.mxu0
    %v944 = vsel %vm238, %v872, 0
    %946 = vmatprep.subr.mxu0 0.0
    %947 = vmatpush1.msra.mxu0 %v147
    %948 = vmatprep.subr.mxu0 0.0
    %949 = vmatpush1.msra.mxu0 %v148
    %950 = vmatprep.subr.mxu0 0.0
    %951 = vmatpush1.msra.mxu0 0.0
    %952 = vmatprep.subr.mxu0 0.0
    %953 = vmatpush1.msra.mxu0 0.0
    %954 = vmatprep.subr.mxu0 0.0
    %955 = vmatpush1.msra.mxu0 0.0
    %956 = vmatprep.subr.mxu0 0.0
    %957 = vmatpush1.msra.mxu0 0.0
    %958 = vmatprep.subr.mxu0 0.0
    %959 = vmatpush1.msra.mxu0 0.0
    %960 = vmatprep.subr.mxu0 0.0
    %961 = vmatpush1.msra.mxu0 0.0
    %962 = vmatprep.subr.mxu0 0.0
    %963 = vmatpush1.msra.mxu0 0.0
    %964 = vmatprep.subr.mxu0 0.0
    %965 = vmatpush1.msra.mxu0 0.0
    %966 = vmatprep.subr.mxu0 0.0
    %967 = vmatpush1.msra.mxu0 0.0
    %968 = vmatprep.subr.mxu0 0.0
    %969 = vmatpush1.msra.mxu0 0.0
    %970 = vmatprep.subr.mxu0 0.0
    %971 = vmatpush1.msra.mxu0 0.0
    %972 = vmatprep.subr.mxu0 0.0
    %973 = vmatpush1.msra.mxu0 0.0
    %974 = vmatprep.subr.mxu0 0.0
    %975 = vmatpush1.msra.mxu0 0.0
    %976 = vmatprep.subr.mxu0 0.0
    %977 = vmatpush1.msra.mxu0 0.0
    %978 = vmatprep.subr.mxu0 0.0
    %979 = vmatpush1.msra.mxu0 0.0
    %980 = vmatprep.subr.mxu0 0.0
    %981 = vmatpush1.msra.mxu0 0.0
    %982 = vmatprep.subr.mxu0 0.0
    %983 = vmatpush1.msra.mxu0 0.0
    %984 = vmatprep.subr.mxu0 0.0
    %985 = vmatpush1.msra.mxu0 0.0
    %986 = vmatprep.subr.mxu0 0.0
    %987 = vmatpush1.msra.mxu0 0.0
    %988 = vmatprep.subr.mxu0 0.0
    %989 = vmatpush1.msra.mxu0 0.0
    %990 = vmatprep.subr.mxu0 0.0
    %991 = vmatpush1.msra.mxu0 0.0
    %992 = vmatprep.subr.mxu0 0.0
    %993 = vmatpush1.msra.mxu0 0.0
    %994 = vmatprep.subr.mxu0 0.0
    %995 = vmatpush1.msra.mxu0 0.0
    %996 = vmatprep.subr.mxu0 0.0
    %997 = vmatpush1.msra.mxu0 0.0
    %998 = vmatprep.subr.mxu0 0.0
    %999 = vmatpush1.msra.mxu0 0.0
    %1000 = vmatprep.subr.mxu0 0.0
    %1001 = vmatpush1.msra.mxu0 0.0
    %1002 = vmatprep.subr.mxu0 0.0
    %1003 = vmatpush1.msra.mxu0 0.0
    %1004 = vmatprep.subr.mxu0 0.0
    %1005 = vmatpush1.msra.mxu0 0.0
    %1006 = vmatprep.subr.mxu0 0.0
    %1007 = vmatpush1.msra.mxu0 0.0
    %1008 = vmatprep.subr.mxu0 0.0
    %1009 = vmatpush1.msra.mxu0 0.0
    %1010 = vmatprep.mubr.f32.mxu0 0.0
    %1011 = vmatmul.mubr.f32.gmra.mrb[0].mxu0 %v944
    %v1012 = vpop.f32.mrb[0].mxu0
    %v1013 = vadd.f32 %v940, %v1012
    %v1014 = vpop.f32.mrb[0].mxu0
    %1015 = vdwg.mxu0
    %v1016 = vadd.f32 %v1013, %v316
    %v1017 = vxor.u32 %v1016, 2147483648
    %v1018 = vmul.f32 %v1017, 1.442695
    %v1019 = vpow.pop %v1018
    %v1020 = vadd.f32 %v1019, 1.0
    %v1021 = vrcp.pop %v1020
    %v1022 = vmul.f32 1.0, %v1021
    %v1023 = vtanh.pop %v1016
    %v1024 = vmul.f32 %v1022, %v687
    %1026 = vrot.lane.b32.xlu0 %v1023, 64
    %v1027 = vpop.permute.xlu0 %1026
    %v1029 = vmul.f32 %v1022, %v1027
    %1031 = vrot.lane.b32.xlu0 %v1029, 32
    %v1032 = vpop.permute.xlu0 %1031
    %v1034 = vadd.f32 %v1024, %v1032
    %v1035 = vtanh.pop %v1034
    %1037 = vrot.lane.b32.xlu0 %v1035, 64
    %v1038 = vpop.permute.xlu0 %1037
    %v1040 = vmul.f32 %v1022, %v1038
    %v1041 = vsel %vm164, %v868, 0
    %1043 = vmatprep.subr.mxu0 0.0
    %1044 = vmatpush1.msra.mxu0 %v158
    %1045 = vmatprep.subr.mxu0 0.0
    %1046 = vmatpush1.msra.mxu0 %v159
    %1047 = vmatprep.subr.mxu0 0.0
    %1048 = vmatpush1.msra.mxu0 %v160
    %1049 = vmatprep.subr.mxu0 0.0
    %1050 = vmatpush1.msra.mxu0 %v161
    %1051 = vmatprep.subr.mxu0 0.0
    %1052 = vmatpush1.msra.mxu0 0.0
    %1053 = vmatprep.subr.mxu0 0.0
    %1054 = vmatpush1.msra.mxu0 0.0
    %1055 = vmatprep.subr.mxu0 0.0
    %1056 = vmatpush1.msra.mxu0 0.0
    %1057 = vmatprep.subr.mxu0 0.0
    %1058 = vmatpush1.msra.mxu0 0.0
    %1059 = vmatprep.subr.mxu0 0.0
    %1060 = vmatpush1.msra.mxu0 0.0
    %1061 = vmatprep.subr.mxu0 0.0
    %1062 = vmatpush1.msra.mxu0 0.0
    %1063 = vmatprep.subr.mxu0 0.0
    %1064 = vmatpush1.msra.mxu0 0.0
    %1065 = vmatprep.subr.mxu0 0.0
    %1066 = vmatpush1.msra.mxu0 0.0
    %1067 = vmatprep.subr.mxu0 0.0
    %1068 = vmatpush1.msra.mxu0 0.0
    %1069 = vmatprep.subr.mxu0 0.0
    %1070 = vmatpush1.msra.mxu0 0.0
    %1071 = vmatprep.subr.mxu0 0.0
    %1072 = vmatpush1.msra.mxu0 0.0
    %1073 = vmatprep.subr.mxu0 0.0
    %1074 = vmatpush1.msra.mxu0 0.0
    %1075 = vmatprep.subr.mxu0 0.0
    %1076 = vmatpush1.msra.mxu0 0.0
    %1077 = vmatprep.subr.mxu0 0.0
    %1078 = vmatpush1.msra.mxu0 0.0
    %1079 = vmatprep.subr.mxu0 0.0
    %1080 = vmatpush1.msra.mxu0 0.0
    %1081 = vmatprep.subr.mxu0 0.0
    %1082 = vmatpush1.msra.mxu0 0.0
    %1083 = vmatprep.subr.mxu0 0.0
    %1084 = vmatpush1.msra.mxu0 0.0
    %1085 = vmatprep.subr.mxu0 0.0
    %1086 = vmatpush1.msra.mxu0 0.0
    %1087 = vmatprep.subr.mxu0 0.0
    %1088 = vmatpush1.msra.mxu0 0.0
    %1089 = vmatprep.subr.mxu0 0.0
    %1090 = vmatpush1.msra.mxu0 0.0
    %1091 = vmatprep.subr.mxu0 0.0
    %1092 = vmatpush1.msra.mxu0 0.0
    %1093 = vmatprep.subr.mxu0 0.0
    %1094 = vmatpush1.msra.mxu0 0.0
    %1095 = vmatprep.subr.mxu0 0.0
    %1096 = vmatpush1.msra.mxu0 0.0
    %1097 = vmatprep.subr.mxu0 0.0
    %1098 = vmatpush1.msra.mxu0 0.0
    %1099 = vmatprep.subr.mxu0 0.0
    %1100 = vmatpush1.msra.mxu0 0.0
    %1101 = vmatprep.subr.mxu0 0.0
    %1102 = vmatpush1.msra.mxu0 0.0
    %1103 = vmatprep.subr.mxu0 0.0
    %1104 = vmatpush1.msra.mxu0 0.0
    %1105 = vmatprep.subr.mxu0 0.0
    %1106 = vmatpush1.msra.mxu0 0.0
    %1107 = vmatprep.mubr.f32.mxu0 0.0
    %1108 = vmatmul.mubr.f32.gmra.mrb[0].mxu0 %v1041
    %v1109 = vpop.f32.mrb[0].mxu0
    %v1110 = vadd.f32 0.0, %v1109
    %v1111 = vpop.f32.mrb[0].mxu0
    %1112 = vdwg.mxu0
    %1114 = vrot.lane.b32.xlu0 %v1040, 32
    %v1115 = vpop.permute.xlu0 %1114
    %v1116 = vsel %vm164, %v1115, 0
    %1118 = vmatprep.subr.mxu0 0.0
    %1119 = vmatpush1.msra.mxu0 %v154
    %1120 = vmatprep.subr.mxu0 0.0
    %1121 = vmatpush1.msra.mxu0 %v155
    %1122 = vmatprep.subr.mxu0 0.0
    %1123 = vmatpush1.msra.mxu0 %v156
    %1124 = vmatprep.subr.mxu0 0.0
    %1125 = vmatpush1.msra.mxu0 %v157
    %1126 = vmatprep.subr.mxu0 0.0
    %1127 = vmatpush1.msra.mxu0 0.0
    %1128 = vmatprep.subr.mxu0 0.0
    %1129 = vmatpush1.msra.mxu0 0.0
    %1130 = vmatprep.subr.mxu0 0.0
    %1131 = vmatpush1.msra.mxu0 0.0
    %1132 = vmatprep.subr.mxu0 0.0
    %1133 = vmatpush1.msra.mxu0 0.0
    %1134 = vmatprep.subr.mxu0 0.0
    %1135 = vmatpush1.msra.mxu0 0.0
    %1136 = vmatprep.subr.mxu0 0.0
    %1137 = vmatpush1.msra.mxu0 0.0
    %1138 = vmatprep.subr.mxu0 0.0
    %1139 = vmatpush1.msra.mxu0 0.0
    %1140 = vmatprep.subr.mxu0 0.0
    %1141 = vmatpush1.msra.mxu0 0.0
    %1142 = vmatprep.subr.mxu0 0.0
    %1143 = vmatpush1.msra.mxu0 0.0
    %1144 = vmatprep.subr.mxu0 0.0
    %1145 = vmatpush1.msra.mxu0 0.0
    %1146 = vmatprep.subr.mxu0 0.0
    %1147 = vmatpush1.msra.mxu0 0.0
    %1148 = vmatprep.subr.mxu0 0.0
    %1149 = vmatpush1.msra.mxu0 0.0
    %1150 = vmatprep.subr.mxu0 0.0
    %1151 = vmatpush1.msra.mxu0 0.0
    %1152 = vmatprep.subr.mxu0 0.0
    %1153 = vmatpush1.msra.mxu0 0.0
    %1154 = vmatprep.subr.mxu0 0.0
    %1155 = vmatpush1.msra.mxu0 0.0
    %1156 = vmatprep.subr.mxu0 0.0
    %1157 = vmatpush1.msra.mxu0 0.0
    %1158 = vmatprep.subr.mxu0 0.0
    %1159 = vmatpush1.msra.mxu0 0.0
    %1160 = vmatprep.subr.mxu0 0.0
    %1161 = vmatpush1.msra.mxu0 0.0
    %1162 = vmatprep.subr.mxu0 0.0
    %1163 = vmatpush1.msra.mxu0 0.0
    %1164 = vmatprep.subr.mxu0 0.0
    %1165 = vmatpush1.msra.mxu0 0.0
    %1166 = vmatprep.subr.mxu0 0.0
    %1167 = vmatpush1.msra.mxu0 0.0
    %1168 = vmatprep.subr.mxu0 0.0
    %1169 = vmatpush1.msra.mxu0 0.0
    %1170 = vmatprep.subr.mxu0 0.0
    %1171 = vmatpush1.msra.mxu0 0.0
    %1172 = vmatprep.subr.mxu0 0.0
    %1173 = vmatpush1.msra.mxu0 0.0
    %1174 = vmatprep.subr.mxu0 0.0
    %1175 = vmatpush1.msra.mxu0 0.0
    %1176 = vmatprep.subr.mxu0 0.0
    %1177 = vmatpush1.msra.mxu0 0.0
    %1178 = vmatprep.subr.mxu0 0.0
    %1179 = vmatpush1.msra.mxu0 0.0
    %1180 = vmatprep.subr.mxu0 0.0
    %1181 = vmatpush1.msra.mxu0 0.0
    %1182 = vmatprep.mubr.f32.mxu0 0.0
    %1183 = vmatmul.mubr.f32.gmra.mrb[0].mxu0 %v1116
    %v1184 = vpop.f32.mrb[0].mxu0
    %v1185 = vadd.f32 %v1110, %v1184
    %v1186 = vpop.f32.mrb[0].mxu0
    %1187 = vdwg.mxu0
    %v1188 = vadd.f32 %v1185, %v492
    %v1189 = vxor.u32 %v1188, 2147483648
    %v1190 = vmul.f32 %v1189, 1.442695
    %v1191 = vpow.pop %v1190
    %v1192 = vadd.f32 %v1191, 1.0
    %v1193 = vrcp.pop %v1192
    %v1194 = vmul.f32 1.0, %v1193
    %v1195 = vtanh.pop %v1188
    %v1196 = vmul.f32 %v1194, %v859
    %1198 = vrot.lane.b32.xlu0 %v1195, 64
    %v1199 = vpop.permute.xlu0 %1198
    %v1201 = vmul.f32 %v1194, %v1199
    %1203 = vrot.lane.b32.xlu0 %v1201, 32
    %v1204 = vpop.permute.xlu0 %1203
    %v1206 = vadd.f32 %v1196, %v1204
    %v1207 = vtanh.pop %v1206
    %1209 = vrot.lane.b32.xlu0 %v1207, 64
    %v1210 = vpop.permute.xlu0 %1209
    %v1212 = vmul.f32 %v1194, %v1210
    %1214 = vrot.lane.b32.xlu0 %v1212, 32
    %v1215 = vpop.permute.xlu0 %1214
    %s1217 = scalar_lea.vmem [#allocation3], 4
    %1218 = vst.msk [vmem:[%s1217] sm:$0x3] %vm523, %v1215
    %v1219 = vld [vmem:[%s109] sm:$0x3]
    %1220 = vmatprep.subr.mxu0 0.0
    %1221 = vmatpush1.msra.mxu0 %v149
    %1222 = vmatprep.subr.mxu0 0.0
    %1223 = vmatpush1.msra.mxu0 %v150
    %1224 = vmatprep.subr.mxu0 0.0
    %1225 = vmatpush1.msra.mxu0 %v151
    %1226 = vmatprep.subr.mxu0 0.0
    %1227 = vmatpush1.msra.mxu0 %v152
    %1228 = vmatprep.subr.mxu0 0.0
    %1229 = vmatpush1.msra.mxu0 0.0
    %1230 = vmatprep.subr.mxu0 0.0
    %1231 = vmatpush1.msra.mxu0 0.0
    %1232 = vmatprep.subr.mxu0 0.0
    %1233 = vmatpush1.msra.mxu0 0.0
    %1234 = vmatprep.subr.mxu0 0.0
    %1235 = vmatpush1.msra.mxu0 0.0
    %1236 = vmatprep.subr.mxu0 0.0
    %1237 = vmatpush1.msra.mxu0 0.0
    %1238 = vmatprep.subr.mxu0 0.0
    %1239 = vmatpush1.msra.mxu0 0.0
    %1240 = vmatprep.subr.mxu0 0.0
    %1241 = vmatpush1.msra.mxu0 0.0
    %1242 = vmatprep.subr.mxu0 0.0
    %1243 = vmatpush1.msra.mxu0 0.0
    %1244 = vmatprep.subr.mxu0 0.0
    %1245 = vmatpush1.msra.mxu0 0.0
    %1246 = vmatprep.subr.mxu0 0.0
    %1247 = vmatpush1.msra.mxu0 0.0
    %1248 = vmatprep.subr.mxu0 0.0
    %1249 = vmatpush1.msra.mxu0 0.0
    %1250 = vmatprep.subr.mxu0 0.0
    %1251 = vmatpush1.msra.mxu0 0.0
    %1252 = vmatprep.subr.mxu0 0.0
    %1253 = vmatpush1.msra.mxu0 0.0
    %1254 = vmatprep.subr.mxu0 0.0
    %1255 = vmatpush1.msra.mxu0 0.0
    %1256 = vmatprep.subr.mxu0 0.0
    %1257 = vmatpush1.msra.mxu0 0.0
    %1258 = vmatprep.subr.mxu0 0.0
    %1259 = vmatpush1.msra.mxu0 0.0
    %1260 = vmatprep.subr.mxu0 0.0
    %1261 = vmatpush1.msra.mxu0 0.0
    %1262 = vmatprep.subr.mxu0 0.0
    %1263 = vmatpush1.msra.mxu0 0.0
    %1264 = vmatprep.subr.mxu0 0.0
    %1265 = vmatpush1.msra.mxu0 0.0
    %1266 = vmatprep.subr.mxu0 0.0
    %1267 = vmatpush1.msra.mxu0 0.0
    %1268 = vmatprep.subr.mxu0 0.0
    %1269 = vmatpush1.msra.mxu0 0.0
    %1270 = vmatprep.subr.mxu0 0.0
    %1271 = vmatpush1.msra.mxu0 0.0
    %1272 = vmatprep.subr.mxu0 0.0
    %1273 = vmatpush1.msra.mxu0 0.0
    %1274 = vmatprep.subr.mxu0 0.0
    %1275 = vmatpush1.msra.mxu0 0.0
    %1276 = vmatprep.subr.mxu0 0.0
    %1277 = vmatpush1.msra.mxu0 0.0
    %1278 = vmatprep.subr.mxu0 0.0
    %1279 = vmatpush1.msra.mxu0 0.0
    %1280 = vmatprep.subr.mxu0 0.0
    %1281 = vmatpush1.msra.mxu0 0.0
    %1282 = vmatprep.subr.mxu0 0.0
    %1283 = vmatpush1.msra.mxu0 0.0
    %1284 = vmatprep.mubr.f32.mxu0 0.0
    %1285 = vmatmul.mubr.f32.gmra.mrb[0].mxu0 %v1116
    %v1286 = vpop.f32.mrb[0].mxu0
    %v1287 = vadd.f32 0.0, %v1286
    %v1288 = vpop.f32.mrb[0].mxu0
    %1289 = vdwg.mxu0
    %v1291 = vsel %vm238, %v1219, 0
    %1293 = vmatprep.subr.mxu0 0.0
    %1294 = vmatpush1.msra.mxu0 %v147
    %1295 = vmatprep.subr.mxu0 0.0
    %1296 = vmatpush1.msra.mxu0 %v148
    %1297 = vmatprep.subr.mxu0 0.0
    %1298 = vmatpush1.msra.mxu0 0.0
    %1299 = vmatprep.subr.mxu0 0.0
    %1300 = vmatpush1.msra.mxu0 0.0
    %1301 = vmatprep.subr.mxu0 0.0
    %1302 = vmatpush1.msra.mxu0 0.0
    %1303 = vmatprep.subr.mxu0 0.0
    %1304 = vmatpush1.msra.mxu0 0.0
    %1305 = vmatprep.subr.mxu0 0.0
    %1306 = vmatpush1.msra.mxu0 0.0
    %1307 = vmatprep.subr.mxu0 0.0
    %1308 = vmatpush1.msra.mxu0 0.0
    %1309 = vmatprep.subr.mxu0 0.0
    %1310 = vmatpush1.msra.mxu0 0.0
    %1311 = vmatprep.subr.mxu0 0.0
    %1312 = vmatpush1.msra.mxu0 0.0
    %1313 = vmatprep.subr.mxu0 0.0
    %1314 = vmatpush1.msra.mxu0 0.0
    %1315 = vmatprep.subr.mxu0 0.0
    %1316 = vmatpush1.msra.mxu0 0.0
    %1317 = vmatprep.subr.mxu0 0.0
    %1318 = vmatpush1.msra.mxu0 0.0
    %1319 = vmatprep.subr.mxu0 0.0
    %1320 = vmatpush1.msra.mxu0 0.0
    %1321 = vmatprep.subr.mxu0 0.0
    %1322 = vmatpush1.msra.mxu0 0.0
    %1323 = vmatprep.subr.mxu0 0.0
    %1324 = vmatpush1.msra.mxu0 0.0
    %1325 = vmatprep.subr.mxu0 0.0
    %1326 = vmatpush1.msra.mxu0 0.0
    %1327 = vmatprep.subr.mxu0 0.0
    %1328 = vmatpush1.msra.mxu0 0.0
    %1329 = vmatprep.subr.mxu0 0.0
    %1330 = vmatpush1.msra.mxu0 0.0
    %1331 = vmatprep.subr.mxu0 0.0
    %1332 = vmatpush1.msra.mxu0 0.0
    %1333 = vmatprep.subr.mxu0 0.0
    %1334 = vmatpush1.msra.mxu0 0.0
    %1335 = vmatprep.subr.mxu0 0.0
    %1336 = vmatpush1.msra.mxu0 0.0
    %1337 = vmatprep.subr.mxu0 0.0
    %1338 = vmatpush1.msra.mxu0 0.0
    %1339 = vmatprep.subr.mxu0 0.0
    %1340 = vmatpush1.msra.mxu0 0.0
    %1341 = vmatprep.subr.mxu0 0.0
    %1342 = vmatpush1.msra.mxu0 0.0
    %1343 = vmatprep.subr.mxu0 0.0
    %1344 = vmatpush1.msra.mxu0 0.0
    %1345 = vmatprep.subr.mxu0 0.0
    %1346 = vmatpush1.msra.mxu0 0.0
    %1347 = vmatprep.subr.mxu0 0.0
    %1348 = vmatpush1.msra.mxu0 0.0
    %1349 = vmatprep.subr.mxu0 0.0
    %1350 = vmatpush1.msra.mxu0 0.0
    %1351 = vmatprep.subr.mxu0 0.0
    %1352 = vmatpush1.msra.mxu0 0.0
    %1353 = vmatprep.subr.mxu0 0.0
    %1354 = vmatpush1.msra.mxu0 0.0
    %1355 = vmatprep.subr.mxu0 0.0
    %1356 = vmatpush1.msra.mxu0 0.0
    %1357 = vmatprep.mubr.f32.mxu0 0.0
    %1358 = vmatmul.mubr.f32.gmra.mrb[0].mxu0 %v1291
    %v1359 = vpop.f32.mrb[0].mxu0
    %v1360 = vadd.f32 %v1287, %v1359
    %v1361 = vpop.f32.mrb[0].mxu0
    %1362 = vdwg.mxu0
    %v1363 = vadd.f32 %v1360, %v316
    %v1364 = vxor.u32 %v1363, 2147483648
    %v1365 = vmul.f32 %v1364, 1.442695
    %v1366 = vpow.pop %v1365
    %v1367 = vadd.f32 %v1366, 1.0
    %v1368 = vrcp.pop %v1367
    %v1369 = vmul.f32 1.0, %v1368
    %v1370 = vtanh.pop %v1363
    %v1371 = vmul.f32 %v1369, %v1034
    %1373 = vrot.lane.b32.xlu0 %v1370, 64
    %v1374 = vpop.permute.xlu0 %1373
    %v1376 = vmul.f32 %v1369, %v1374
    %1378 = vrot.lane.b32.xlu0 %v1376, 32
    %v1379 = vpop.permute.xlu0 %1378
    %v1381 = vadd.f32 %v1371, %v1379
    %v1382 = vtanh.pop %v1381
    %1384 = vrot.lane.b32.xlu0 %v1382, 64
    %v1385 = vpop.permute.xlu0 %1384
    %v1387 = vmul.f32 %v1369, %v1385
    %v1388 = vsel %vm164, %v1215, 0
    %1390 = vmatprep.subr.mxu0 0.0
    %1391 = vmatpush1.msra.mxu0 %v158
    %1392 = vmatprep.subr.mxu0 0.0
    %1393 = vmatpush1.msra.mxu0 %v159
    %1394 = vmatprep.subr.mxu0 0.0
    %1395 = vmatpush1.msra.mxu0 %v160
    %1396 = vmatprep.subr.mxu0 0.0
    %1397 = vmatpush1.msra.mxu0 %v161
    %1398 = vmatprep.subr.mxu0 0.0
    %1399 = vmatpush1.msra.mxu0 0.0
    %1400 = vmatprep.subr.mxu0 0.0
    %1401 = vmatpush1.msra.mxu0 0.0
    %1402 = vmatprep.subr.mxu0 0.0
    %1403 = vmatpush1.msra.mxu0 0.0
    %1404 = vmatprep.subr.mxu0 0.0
    %1405 = vmatpush1.msra.mxu0 0.0
    %1406 = vmatprep.subr.mxu0 0.0
    %1407 = vmatpush1.msra.mxu0 0.0
    %1408 = vmatprep.subr.mxu0 0.0
    %1409 = vmatpush1.msra.mxu0 0.0
    %1410 = vmatprep.subr.mxu0 0.0
    %1411 = vmatpush1.msra.mxu0 0.0
    %1412 = vmatprep.subr.mxu0 0.0
    %1413 = vmatpush1.msra.mxu0 0.0
    %1414 = vmatprep.subr.mxu0 0.0
    %1415 = vmatpush1.msra.mxu0 0.0
    %1416 = vmatprep.subr.mxu0 0.0
    %1417 = vmatpush1.msra.mxu0 0.0
    %1418 = vmatprep.subr.mxu0 0.0
    %1419 = vmatpush1.msra.mxu0 0.0
    %1420 = vmatprep.subr.mxu0 0.0
    %1421 = vmatpush1.msra.mxu0 0.0
    %1422 = vmatprep.subr.mxu0 0.0
    %1423 = vmatpush1.msra.mxu0 0.0
    %1424 = vmatprep.subr.mxu0 0.0
    %1425 = vmatpush1.msra.mxu0 0.0
    %1426 = vmatprep.subr.mxu0 0.0
    %1427 = vmatpush1.msra.mxu0 0.0
    %1428 = vmatprep.subr.mxu0 0.0
    %1429 = vmatpush1.msra.mxu0 0.0
    %1430 = vmatprep.subr.mxu0 0.0
    %1431 = vmatpush1.msra.mxu0 0.0
    %1432 = vmatprep.subr.mxu0 0.0
    %1433 = vmatpush1.msra.mxu0 0.0
    %1434 = vmatprep.subr.mxu0 0.0
    %1435 = vmatpush1.msra.mxu0 0.0
    %1436 = vmatprep.subr.mxu0 0.0
    %1437 = vmatpush1.msra.mxu0 0.0
    %1438 = vmatprep.subr.mxu0 0.0
    %1439 = vmatpush1.msra.mxu0 0.0
    %1440 = vmatprep.subr.mxu0 0.0
    %1441 = vmatpush1.msra.mxu0 0.0
    %1442 = vmatprep.subr.mxu0 0.0
    %1443 = vmatpush1.msra.mxu0 0.0
    %1444 = vmatprep.subr.mxu0 0.0
    %1445 = vmatpush1.msra.mxu0 0.0
    %1446 = vmatprep.subr.mxu0 0.0
    %1447 = vmatpush1.msra.mxu0 0.0
    %1448 = vmatprep.subr.mxu0 0.0
    %1449 = vmatpush1.msra.mxu0 0.0
    %1450 = vmatprep.subr.mxu0 0.0
    %1451 = vmatpush1.msra.mxu0 0.0
    %1452 = vmatprep.subr.mxu0 0.0
    %1453 = vmatpush1.msra.mxu0 0.0
    %1454 = vmatprep.mubr.f32.mxu0 0.0
    %1455 = vmatmul.mubr.f32.gmra.mrb[0].mxu0 %v1388
    %v1456 = vpop.f32.mrb[0].mxu0
    %v1457 = vadd.f32 0.0, %v1456
    %v1458 = vpop.f32.mrb[0].mxu0
    %1459 = vdwg.mxu0
    %1461 = vrot.lane.b32.xlu0 %v1387, 32
    %v1462 = vpop.permute.xlu0 %1461
    %v1463 = vsel %vm164, %v1462, 0
    %1465 = vmatprep.subr.mxu0 0.0
    %1466 = vmatpush1.msra.mxu0 %v154
    %1467 = vmatprep.subr.mxu0 0.0
    %1468 = vmatpush1.msra.mxu0 %v155
    %1469 = vmatprep.subr.mxu0 0.0
    %1470 = vmatpush1.msra.mxu0 %v156
    %1471 = vmatprep.subr.mxu0 0.0
    %1472 = vmatpush1.msra.mxu0 %v157
    %1473 = vmatprep.subr.mxu0 0.0
    %1474 = vmatpush1.msra.mxu0 0.0
    %1475 = vmatprep.subr.mxu0 0.0
    %1476 = vmatpush1.msra.mxu0 0.0
    %1477 = vmatprep.subr.mxu0 0.0
    %1478 = vmatpush1.msra.mxu0 0.0
    %1479 = vmatprep.subr.mxu0 0.0
    %1480 = vmatpush1.msra.mxu0 0.0
    %1481 = vmatprep.subr.mxu0 0.0
    %1482 = vmatpush1.msra.mxu0 0.0
    %1483 = vmatprep.subr.mxu0 0.0
    %1484 = vmatpush1.msra.mxu0 0.0
    %1485 = vmatprep.subr.mxu0 0.0
    %1486 = vmatpush1.msra.mxu0 0.0
    %1487 = vmatprep.subr.mxu0 0.0
    %1488 = vmatpush1.msra.mxu0 0.0
    %1489 = vmatprep.subr.mxu0 0.0
    %1490 = vmatpush1.msra.mxu0 0.0
    %1491 = vmatprep.subr.mxu0 0.0
    %1492 = vmatpush1.msra.mxu0 0.0
    %1493 = vmatprep.subr.mxu0 0.0
    %1494 = vmatpush1.msra.mxu0 0.0
    %1495 = vmatprep.subr.mxu0 0.0
    %1496 = vmatpush1.msra.mxu0 0.0
    %1497 = vmatprep.subr.mxu0 0.0
    %1498 = vmatpush1.msra.mxu0 0.0
    %1499 = vmatprep.subr.mxu0 0.0
    %1500 = vmatpush1.msra.mxu0 0.0
    %1501 = vmatprep.subr.mxu0 0.0
    %1502 = vmatpush1.msra.mxu0 0.0
    %1503 = vmatprep.subr.mxu0 0.0
    %1504 = vmatpush1.msra.mxu0 0.0
    %1505 = vmatprep.subr.mxu0 0.0
    %1506 = vmatpush1.msra.mxu0 0.0
    %1507 = vmatprep.subr.mxu0 0.0
    %1508 = vmatpush1.msra.mxu0 0.0
    %1509 = vmatprep.subr.mxu0 0.0
    %1510 = vmatpush1.msra.mxu0 0.0
    %1511 = vmatprep.subr.mxu0 0.0
    %1512 = vmatpush1.msra.mxu0 0.0
    %1513 = vmatprep.subr.mxu0 0.0
    %1514 = vmatpush1.msra.mxu0 0.0
    %1515 = vmatprep.subr.mxu0 0.0
    %1516 = vmatpush1.msra.mxu0 0.0
    %1517 = vmatprep.subr.mxu0 0.0
    %1518 = vmatpush1.msra.mxu0 0.0
    %1519 = vmatprep.subr.mxu0 0.0
    %1520 = vmatpush1.msra.mxu0 0.0
    %1521 = vmatprep.subr.mxu0 0.0
    %1522 = vmatpush1.msra.mxu0 0.0
    %1523 = vmatprep.subr.mxu0 0.0
    %1524 = vmatpush1.msra.mxu0 0.0
    %1525 = vmatprep.subr.mxu0 0.0
    %1526 = vmatpush1.msra.mxu0 0.0
    %1527 = vmatprep.subr.mxu0 0.0
    %1528 = vmatpush1.msra.mxu0 0.0
    %1529 = vmatprep.mubr.f32.mxu0 0.0
    %1530 = vmatmul.mubr.f32.gmra.mrb[0].mxu0 %v1463
    %v1531 = vpop.f32.mrb[0].mxu0
    %v1532 = vadd.f32 %v1457, %v1531
    %v1533 = vpop.f32.mrb[0].mxu0
    %1534 = vdwg.mxu0
    %v1535 = vadd.f32 %v1532, %v492
    %v1536 = vxor.u32 %v1535, 2147483648
    %v1537 = vmul.f32 %v1536, 1.442695
    %v1538 = vpow.pop %v1537
    %v1539 = vadd.f32 %v1538, 1.0
    %v1540 = vrcp.pop %v1539
    %v1541 = vmul.f32 1.0, %v1540
    %v1542 = vtanh.pop %v1535
    %v1543 = vmul.f32 %v1541, %v1206
    %1545 = vrot.lane.b32.xlu0 %v1542, 64
    %v1546 = vpop.permute.xlu0 %1545
    %v1548 = vmul.f32 %v1541, %v1546
    %1550 = vrot.lane.b32.xlu0 %v1548, 32
    %v1551 = vpop.permute.xlu0 %1550
    %v1553 = vadd.f32 %v1543, %v1551
    %v1554 = vtanh.pop %v1553
    %1556 = vrot.lane.b32.xlu0 %v1554, 64
    %v1557 = vpop.permute.xlu0 %1556
    %v1559 = vmul.f32 %v1541, %v1557
    %1561 = vrot.lane.b32.xlu0 %v1559, 32
    %v1562 = vpop.permute.xlu0 %1561
    %s1564 = scalar_lea.vmem [#allocation3], 6
    %1565 = vst.msk [vmem:[%s1564] sm:$0x3] %vm523, %v1562
    %v1566 = vld [vmem:[%s118] sm:$0x3]
    %1567 = vmatprep.subr.mxu0 0.0
    %1568 = vmatpush1.msra.mxu0 %v149
    %1569 = vmatprep.subr.mxu0 0.0
    %1570 = vmatpush1.msra.mxu0 %v150
    %1571 = vmatprep.subr.mxu0 0.0
    %1572 = vmatpush1.msra.mxu0 %v151
    %1573 = vmatprep.subr.mxu0 0.0
    %1574 = vmatpush1.msra.mxu0 %v152
    %1575 = vmatprep.subr.mxu0 0.0
    %1576 = vmatpush1.msra.mxu0 0.0
    %1577 = vmatprep.subr.mxu0 0.0
    %1578 = vmatpush1.msra.mxu0 0.0
    %1579 = vmatprep.subr.mxu0 0.0
    %1580 = vmatpush1.msra.mxu0 0.0
    %1581 = vmatprep.subr.mxu0 0.0
    %1582 = vmatpush1.msra.mxu0 0.0
    %1583 = vmatprep.subr.mxu0 0.0
    %1584 = vmatpush1.msra.mxu0 0.0
    %1585 = vmatprep.subr.mxu0 0.0
    %1586 = vmatpush1.msra.mxu0 0.0
    %1587 = vmatprep.subr.mxu0 0.0
    %1588 = vmatpush1.msra.mxu0 0.0
    %1589 = vmatprep.subr.mxu0 0.0
    %1590 = vmatpush1.msra.mxu0 0.0
    %1591 = vmatprep.subr.mxu0 0.0
    %1592 = vmatpush1.msra.mxu0 0.0
    %1593 = vmatprep.subr.mxu0 0.0
    %1594 = vmatpush1.msra.mxu0 0.0
    %1595 = vmatprep.subr.mxu0 0.0
    %1596 = vmatpush1.msra.mxu0 0.0
    %1597 = vmatprep.subr.mxu0 0.0
    %1598 = vmatpush1.msra.mxu0 0.0
    %1599 = vmatprep.subr.mxu0 0.0
    %1600 = vmatpush1.msra.mxu0 0.0
    %1601 = vmatprep.subr.mxu0 0.0
    %1602 = vmatpush1.msra.mxu0 0.0
    %1603 = vmatprep.subr.mxu0 0.0
    %1604 = vmatpush1.msra.mxu0 0.0
    %1605 = vmatprep.subr.mxu0 0.0
    %1606 = vmatpush1.msra.mxu0 0.0
    %1607 = vmatprep.subr.mxu0 0.0
    %1608 = vmatpush1.msra.mxu0 0.0
    %1609 = vmatprep.subr.mxu0 0.0
    %1610 = vmatpush1.msra.mxu0 0.0
    %1611 = vmatprep.subr.mxu0 0.0
    %1612 = vmatpush1.msra.mxu0 0.0
    %1613 = vmatprep.subr.mxu0 0.0
    %1614 = vmatpush1.msra.mxu0 0.0
    %1615 = vmatprep.subr.mxu0 0.0
    %1616 = vmatpush1.msra.mxu0 0.0
    %1617 = vmatprep.subr.mxu0 0.0
    %1618 = vmatpush1.msra.mxu0 0.0
    %1619 = vmatprep.subr.mxu0 0.0
    %1620 = vmatpush1.msra.mxu0 0.0
    %1621 = vmatprep.subr.mxu0 0.0
    %1622 = vmatpush1.msra.mxu0 0.0
    %1623 = vmatprep.subr.mxu0 0.0
    %1624 = vmatpush1.msra.mxu0 0.0
    %1625 = vmatprep.subr.mxu0 0.0
    %1626 = vmatpush1.msra.mxu0 0.0
    %1627 = vmatprep.subr.mxu0 0.0
    %1628 = vmatpush1.msra.mxu0 0.0
    %1629 = vmatprep.subr.mxu0 0.0
    %1630 = vmatpush1.msra.mxu0 0.0
    %1631 = vmatprep.mubr.f32.mxu0 0.0
    %1632 = vmatmul.mubr.f32.gmra.mrb[0].mxu0 %v1463
    %v1633 = vpop.f32.mrb[0].mxu0
    %v1634 = vadd.f32 0.0, %v1633
    %v1635 = vpop.f32.mrb[0].mxu0
    %1636 = vdwg.mxu0
    %v1638 = vsel %vm238, %v1566, 0
    %1640 = vmatprep.subr.mxu0 0.0
    %1641 = vmatpush1.msra.mxu0 %v147
    %1642 = vmatprep.subr.mxu0 0.0
    %1643 = vmatpush1.msra.mxu0 %v148
    %1644 = vmatprep.subr.mxu0 0.0
    %1645 = vmatpush1.msra.mxu0 0.0
    %1646 = vmatprep.subr.mxu0 0.0
    %1647 = vmatpush1.msra.mxu0 0.0
    %1648 = vmatprep.subr.mxu0 0.0
    %1649 = vmatpush1.msra.mxu0 0.0
    %1650 = vmatprep.subr.mxu0 0.0
    %1651 = vmatpush1.msra.mxu0 0.0
    %1652 = vmatprep.subr.mxu0 0.0
    %1653 = vmatpush1.msra.mxu0 0.0
    %1654 = vmatprep.subr.mxu0 0.0
    %1655 = vmatpush1.msra.mxu0 0.0
    %1656 = vmatprep.subr.mxu0 0.0
    %1657 = vmatpush1.msra.mxu0 0.0
    %1658 = vmatprep.subr.mxu0 0.0
    %1659 = vmatpush1.msra.mxu0 0.0
    %1660 = vmatprep.subr.mxu0 0.0
    %1661 = vmatpush1.msra.mxu0 0.0
    %1662 = vmatprep.subr.mxu0 0.0
    %1663 = vmatpush1.msra.mxu0 0.0
    %1664 = vmatprep.subr.mxu0 0.0
    %1665 = vmatpush1.msra.mxu0 0.0
    %1666 = vmatprep.subr.mxu0 0.0
    %1667 = vmatpush1.msra.mxu0 0.0
    %1668 = vmatprep.subr.mxu0 0.0
    %1669 = vmatpush1.msra.mxu0 0.0
    %1670 = vmatprep.subr.mxu0 0.0
    %1671 = vmatpush1.msra.mxu0 0.0
    %1672 = vmatprep.subr.mxu0 0.0
    %1673 = vmatpush1.msra.mxu0 0.0
    %1674 = vmatprep.subr.mxu0 0.0
    %1675 = vmatpush1.msra.mxu0 0.0
    %1676 = vmatprep.subr.mxu0 0.0
    %1677 = vmatpush1.msra.mxu0 0.0
    %1678 = vmatprep.subr.mxu0 0.0
    %1679 = vmatpush1.msra.mxu0 0.0
    %1680 = vmatprep.subr.mxu0 0.0
    %1681 = vmatpush1.msra.mxu0 0.0
    %1682 = vmatprep.subr.mxu0 0.0
    %1683 = vmatpush1.msra.mxu0 0.0
    %1684 = vmatprep.subr.mxu0 0.0
    %1685 = vmatpush1.msra.mxu0 0.0
    %1686 = vmatprep.subr.mxu0 0.0
    %1687 = vmatpush1.msra.mxu0 0.0
    %1688 = vmatprep.subr.mxu0 0.0
    %1689 = vmatpush1.msra.mxu0 0.0
    %1690 = vmatprep.subr.mxu0 0.0
    %1691 = vmatpush1.msra.mxu0 0.0
    %1692 = vmatprep.subr.mxu0 0.0
    %1693 = vmatpush1.msra.mxu0 0.0
    %1694 = vmatprep.subr.mxu0 0.0
    %1695 = vmatpush1.msra.mxu0 0.0
    %1696 = vmatprep.subr.mxu0 0.0
    %1697 = vmatpush1.msra.mxu0 0.0
    %1698 = vmatprep.subr.mxu0 0.0
    %1699 = vmatpush1.msra.mxu0 0.0
    %1700 = vmatprep.subr.mxu0 0.0
    %1701 = vmatpush1.msra.mxu0 0.0
    %1702 = vmatprep.subr.mxu0 0.0
    %1703 = vmatpush1.msra.mxu0 0.0
    %1704 = vmatprep.mubr.f32.mxu0 0.0
    %1705 = vmatmul.mubr.f32.gmra.mrb[0].mxu0 %v1638
    %v1706 = vpop.f32.mrb[0].mxu0
    %v1707 = vadd.f32 %v1634, %v1706
    %v1708 = vpop.f32.mrb[0].mxu0
    %1709 = vdwg.mxu0
    %v1710 = vadd.f32 %v1707, %v316
    %v1711 = vxor.u32 %v1710, 2147483648
    %v1712 = vmul.f32 %v1711, 1.442695
    %v1713 = vpow.pop %v1712
    %v1714 = vadd.f32 %v1713, 1.0
    %v1715 = vrcp.pop %v1714
    %v1716 = vmul.f32 1.0, %v1715
    %v1717 = vtanh.pop %v1710
    %v1718 = vmul.f32 %v1716, %v1381
    %1720 = vrot.lane.b32.xlu0 %v1717, 64
    %v1721 = vpop.permute.xlu0 %1720
    %v1723 = vmul.f32 %v1716, %v1721
    %1725 = vrot.lane.b32.xlu0 %v1723, 32
    %v1726 = vpop.permute.xlu0 %1725
    %v1728 = vadd.f32 %v1718, %v1726
    %v1729 = vtanh.pop %v1728
    %1731 = vrot.lane.b32.xlu0 %v1729, 64
    %v1732 = vpop.permute.xlu0 %1731
    %v1734 = vmul.f32 %v1716, %v1732
    %v1735 = vsel %vm164, %v1562, 0
    %1737 = vmatprep.subr.mxu0 0.0
    %1738 = vmatpush1.msra.mxu0 %v158
    %1739 = vmatprep.subr.mxu0 0.0
    %1740 = vmatpush1.msra.mxu0 %v159
    %1741 = vmatprep.subr.mxu0 0.0
    %1742 = vmatpush1.msra.mxu0 %v160
    %1743 = vmatprep.subr.mxu0 0.0
    %1744 = vmatpush1.msra.mxu0 %v161
    %1745 = vmatprep.subr.mxu0 0.0
    %1746 = vmatpush1.msra.mxu0 0.0
    %1747 = vmatprep.subr.mxu0 0.0
    %1748 = vmatpush1.msra.mxu0 0.0
    %1749 = vmatprep.subr.mxu0 0.0
    %1750 = vmatpush1.msra.mxu0 0.0
    %1751 = vmatprep.subr.mxu0 0.0
    %1752 = vmatpush1.msra.mxu0 0.0
    %1753 = vmatprep.subr.mxu0 0.0
    %1754 = vmatpush1.msra.mxu0 0.0
    %1755 = vmatprep.subr.mxu0 0.0
    %1756 = vmatpush1.msra.mxu0 0.0
    %1757 = vmatprep.subr.mxu0 0.0
    %1758 = vmatpush1.msra.mxu0 0.0
    %1759 = vmatprep.subr.mxu0 0.0
    %1760 = vmatpush1.msra.mxu0 0.0
    %1761 = vmatprep.subr.mxu0 0.0
    %1762 = vmatpush1.msra.mxu0 0.0
    %1763 = vmatprep.subr.mxu0 0.0
    %1764 = vmatpush1.msra.mxu0 0.0
    %1765 = vmatprep.subr.mxu0 0.0
    %1766 = vmatpush1.msra.mxu0 0.0
    %1767 = vmatprep.subr.mxu0 0.0
    %1768 = vmatpush1.msra.mxu0 0.0
    %1769 = vmatprep.subr.mxu0 0.0
    %1770 = vmatpush1.msra.mxu0 0.0
    %1771 = vmatprep.subr.mxu0 0.0
    %1772 = vmatpush1.msra.mxu0 0.0
    %1773 = vmatprep.subr.mxu0 0.0
    %1774 = vmatpush1.msra.mxu0 0.0
    %1775 = vmatprep.subr.mxu0 0.0
    %1776 = vmatpush1.msra.mxu0 0.0
    %1777 = vmatprep.subr.mxu0 0.0
    %1778 = vmatpush1.msra.mxu0 0.0
    %1779 = vmatprep.subr.mxu0 0.0
    %1780 = vmatpush1.msra.mxu0 0.0
    %1781 = vmatprep.subr.mxu0 0.0
    %1782 = vmatpush1.msra.mxu0 0.0
    %1783 = vmatprep.subr.mxu0 0.0
    %1784 = vmatpush1.msra.mxu0 0.0
    %1785 = vmatprep.subr.mxu0 0.0
    %1786 = vmatpush1.msra.mxu0 0.0
    %1787 = vmatprep.subr.mxu0 0.0
    %1788 = vmatpush1.msra.mxu0 0.0
    %1789 = vmatprep.subr.mxu0 0.0
    %1790 = vmatpush1.msra.mxu0 0.0
    %1791 = vmatprep.subr.mxu0 0.0
    %1792 = vmatpush1.msra.mxu0 0.0
    %1793 = vmatprep.subr.mxu0 0.0
    %1794 = vmatpush1.msra.mxu0 0.0
    %1795 = vmatprep.subr.mxu0 0.0
    %1796 = vmatpush1.msra.mxu0 0.0
    %1797 = vmatprep.subr.mxu0 0.0
    %1798 = vmatpush1.msra.mxu0 0.0
    %1799 = vmatprep.subr.mxu0 0.0
    %1800 = vmatpush1.msra.mxu0 0.0
    %1801 = vmatprep.mubr.f32.mxu0 0.0
    %1802 = vmatmul.mubr.f32.gmra.mrb[0].mxu0 %v1735
    %v1803 = vpop.f32.mrb[0].mxu0
    %v1804 = vadd.f32 0.0, %v1803
    %v1805 = vpop.f32.mrb[0].mxu0
    %1806 = vdwg.mxu0
    %1808 = vrot.lane.b32.xlu0 %v1734, 32
    %v1809 = vpop.permute.xlu0 %1808
    %v1810 = vsel %vm164, %v1809, 0
    %1812 = vmatprep.subr.mxu0 0.0
    %1813 = vmatpush1.msra.mxu0 %v154
    %1814 = vmatprep.subr.mxu0 0.0
    %1815 = vmatpush1.msra.mxu0 %v155
    %1816 = vmatprep.subr.mxu0 0.0
    %1817 = vmatpush1.msra.mxu0 %v156
    %1818 = vmatprep.subr.mxu0 0.0
    %1819 = vmatpush1.msra.mxu0 %v157
    %1820 = vmatprep.subr.mxu0 0.0
    %1821 = vmatpush1.msra.mxu0 0.0
    %1822 = vmatprep.subr.mxu0 0.0
    %1823 = vmatpush1.msra.mxu0 0.0
    %1824 = vmatprep.subr.mxu0 0.0
    %1825 = vmatpush1.msra.mxu0 0.0
    %1826 = vmatprep.subr.mxu0 0.0
    %1827 = vmatpush1.msra.mxu0 0.0
    %1828 = vmatprep.subr.mxu0 0.0
    %1829 = vmatpush1.msra.mxu0 0.0
    %1830 = vmatprep.subr.mxu0 0.0
    %1831 = vmatpush1.msra.mxu0 0.0
    %1832 = vmatprep.subr.mxu0 0.0
    %1833 = vmatpush1.msra.mxu0 0.0
    %1834 = vmatprep.subr.mxu0 0.0
    %1835 = vmatpush1.msra.mxu0 0.0
    %1836 = vmatprep.subr.mxu0 0.0
    %1837 = vmatpush1.msra.mxu0 0.0
    %1838 = vmatprep.subr.mxu0 0.0
    %1839 = vmatpush1.msra.mxu0 0.0
    %1840 = vmatprep.subr.mxu0 0.0
    %1841 = vmatpush1.msra.mxu0 0.0
    %1842 = vmatprep.subr.mxu0 0.0
    %1843 = vmatpush1.msra.mxu0 0.0
    %1844 = vmatprep.subr.mxu0 0.0
    %1845 = vmatpush1.msra.mxu0 0.0
    %1846 = vmatprep.subr.mxu0 0.0
    %1847 = vmatpush1.msra.mxu0 0.0
    %1848 = vmatprep.subr.mxu0 0.0
    %1849 = vmatpush1.msra.mxu0 0.0
    %1850 = vmatprep.subr.mxu0 0.0
    %1851 = vmatpush1.msra.mxu0 0.0
    %1852 = vmatprep.subr.mxu0 0.0
    %1853 = vmatpush1.msra.mxu0 0.0
    %1854 = vmatprep.subr.mxu0 0.0
    %1855 = vmatpush1.msra.mxu0 0.0
    %1856 = vmatprep.subr.mxu0 0.0
    %1857 = vmatpush1.msra.mxu0 0.0
    %1858 = vmatprep.subr.mxu0 0.0
    %1859 = vmatpush1.msra.mxu0 0.0
    %1860 = vmatprep.subr.mxu0 0.0
    %1861 = vmatpush1.msra.mxu0 0.0
    %1862 = vmatprep.subr.mxu0 0.0
    %1863 = vmatpush1.msra.mxu0 0.0
    %1864 = vmatprep.subr.mxu0 0.0
    %1865 = vmatpush1.msra.mxu0 0.0
    %1866 = vmatprep.subr.mxu0 0.0
    %1867 = vmatpush1.msra.mxu0 0.0
    %1868 = vmatprep.subr.mxu0 0.0
    %1869 = vmatpush1.msra.mxu0 0.0
    %1870 = vmatprep.subr.mxu0 0.0
    %1871 = vmatpush1.msra.mxu0 0.0
    %1872 = vmatprep.subr.mxu0 0.0
    %1873 = vmatpush1.msra.mxu0 0.0
    %1874 = vmatprep.subr.mxu0 0.0
    %1875 = vmatpush1.msra.mxu0 0.0
    %1876 = vmatprep.mubr.f32.mxu0 0.0
    %1877 = vmatmul.mubr.f32.gmra.mrb[0].mxu0 %v1810
    %v1878 = vpop.f32.mrb[0].mxu0
    %v1879 = vadd.f32 %v1804, %v1878
    %v1880 = vpop.f32.mrb[0].mxu0
    %1881 = vdwg.mxu0
    %v1882 = vadd.f32 %v1879, %v492
    %v1883 = vxor.u32 %v1882, 2147483648
    %v1884 = vmul.f32 %v1883, 1.442695
    %v1885 = vpow.pop %v1884
    %v1886 = vadd.f32 %v1885, 1.0
    %v1887 = vrcp.pop %v1886
    %v1888 = vmul.f32 1.0, %v1887
    %v1889 = vtanh.pop %v1882
    %v1890 = vmul.f32 %v1888, %v1553
    %1892 = vrot.lane.b32.xlu0 %v1889, 64
    %v1893 = vpop.permute.xlu0 %1892
    %v1895 = vmul.f32 %v1888, %v1893
    %1897 = vrot.lane.b32.xlu0 %v1895, 32
    %v1898 = vpop.permute.xlu0 %1897
    %v1900 = vadd.f32 %v1890, %v1898
    %v1901 = vtanh.pop %v1900
    %1903 = vrot.lane.b32.xlu0 %v1901, 64
    %v1904 = vpop.permute.xlu0 %1903
    %v1906 = vmul.f32 %v1888, %v1904
    %1908 = vrot.lane.b32.xlu0 %v1906, 32
    %v1909 = vpop.permute.xlu0 %1908
    %s1911 = scalar_lea.vmem [#allocation3], 8
    %1912 = vst.msk [vmem:[%s1911] sm:$0x3] %vm523, %v1909
    %v1913 = vld [vmem:[%s127] sm:$0x3]
    %1914 = vmatprep.subr.mxu0 0.0
    %1915 = vmatpush1.msra.mxu0 %v149
    %1916 = vmatprep.subr.mxu0 0.0
    %1917 = vmatpush1.msra.mxu0 %v150
    %1918 = vmatprep.subr.mxu0 0.0
    %1919 = vmatpush1.msra.mxu0 %v151
    %1920 = vmatprep.subr.mxu0 0.0
    %1921 = vmatpush1.msra.mxu0 %v152
    %1922 = vmatprep.subr.mxu0 0.0
    %1923 = vmatpush1.msra.mxu0 0.0
    %1924 = vmatprep.subr.mxu0 0.0
    %1925 = vmatpush1.msra.mxu0 0.0
    %1926 = vmatprep.subr.mxu0 0.0
    %1927 = vmatpush1.msra.mxu0 0.0
    %1928 = vmatprep.subr.mxu0 0.0
    %1929 = vmatpush1.msra.mxu0 0.0
    %1930 = vmatprep.subr.mxu0 0.0
    %1931 = vmatpush1.msra.mxu0 0.0
    %1932 = vmatprep.subr.mxu0 0.0
    %1933 = vmatpush1.msra.mxu0 0.0
    %1934 = vmatprep.subr.mxu0 0.0
    %1935 = vmatpush1.msra.mxu0 0.0
    %1936 = vmatprep.subr.mxu0 0.0
    %1937 = vmatpush1.msra.mxu0 0.0
    %1938 = vmatprep.subr.mxu0 0.0
    %1939 = vmatpush1.msra.mxu0 0.0
    %1940 = vmatprep.subr.mxu0 0.0
    %1941 = vmatpush1.msra.mxu0 0.0
    %1942 = vmatprep.subr.mxu0 0.0
    %1943 = vmatpush1.msra.mxu0 0.0
    %1944 = vmatprep.subr.mxu0 0.0
    %1945 = vmatpush1.msra.mxu0 0.0
    %1946 = vmatprep.subr.mxu0 0.0
    %1947 = vmatpush1.msra.mxu0 0.0
    %1948 = vmatprep.subr.mxu0 0.0
    %1949 = vmatpush1.msra.mxu0 0.0
    %1950 = vmatprep.subr.mxu0 0.0
    %1951 = vmatpush1.msra.mxu0 0.0
    %1952 = vmatprep.subr.mxu0 0.0
    %1953 = vmatpush1.msra.mxu0 0.0
    %1954 = vmatprep.subr.mxu0 0.0
    %1955 = vmatpush1.msra.mxu0 0.0
    %1956 = vmatprep.subr.mxu0 0.0
    %1957 = vmatpush1.msra.mxu0 0.0
    %1958 = vmatprep.subr.mxu0 0.0
    %1959 = vmatpush1.msra.mxu0 0.0
    %1960 = vmatprep.subr.mxu0 0.0
    %1961 = vmatpush1.msra.mxu0 0.0
    %1962 = vmatprep.subr.mxu0 0.0
    %1963 = vmatpush1.msra.mxu0 0.0
    %1964 = vmatprep.subr.mxu0 0.0
    %1965 = vmatpush1.msra.mxu0 0.0
    %1966 = vmatprep.subr.mxu0 0.0
    %1967 = vmatpush1.msra.mxu0 0.0
    %1968 = vmatprep.subr.mxu0 0.0
    %1969 = vmatpush1.msra.mxu0 0.0
    %1970 = vmatprep.subr.mxu0 0.0
    %1971 = vmatpush1.msra.mxu0 0.0
    %1972 = vmatprep.subr.mxu0 0.0
    %1973 = vmatpush1.msra.mxu0 0.0
    %1974 = vmatprep.subr.mxu0 0.0
    %1975 = vmatpush1.msra.mxu0 0.0
    %1976 = vmatprep.subr.mxu0 0.0
    %1977 = vmatpush1.msra.mxu0 0.0
    %1978 = vmatprep.mubr.f32.mxu0 0.0
    %1979 = vmatmul.mubr.f32.gmra.mrb[0].mxu0 %v1810
    %v1980 = vpop.f32.mrb[0].mxu0
    %v1981 = vadd.f32 0.0, %v1980
    %v1982 = vpop.f32.mrb[0].mxu0
    %1983 = vdwg.mxu0
    %v1985 = vsel %vm238, %v1913, 0
    %1987 = vmatprep.subr.mxu0 0.0
    %1988 = vmatpush1.msra.mxu0 %v147
    %1989 = vmatprep.subr.mxu0 0.0
    %1990 = vmatpush1.msra.mxu0 %v148
    %1991 = vmatprep.subr.mxu0 0.0
    %1992 = vmatpush1.msra.mxu0 0.0
    %1993 = vmatprep.subr.mxu0 0.0
    %1994 = vmatpush1.msra.mxu0 0.0
    %1995 = vmatprep.subr.mxu0 0.0
    %1996 = vmatpush1.msra.mxu0 0.0
    %1997 = vmatprep.subr.mxu0 0.0
    %1998 = vmatpush1.msra.mxu0 0.0
    %1999 = vmatprep.subr.mxu0 0.0
    %2000 = vmatpush1.msra.mxu0 0.0
    %2001 = vmatprep.subr.mxu0 0.0
    %2002 = vmatpush1.msra.mxu0 0.0
    %2003 = vmatprep.subr.mxu0 0.0
    %2004 = vmatpush1.msra.mxu0 0.0
    %2005 = vmatprep.subr.mxu0 0.0
    %2006 = vmatpush1.msra.mxu0 0.0
    %2007 = vmatprep.subr.mxu0 0.0
    %2008 = vmatpush1.msra.mxu0 0.0
    %2009 = vmatprep.subr.mxu0 0.0
    %2010 = vmatpush1.msra.mxu0 0.0
    %2011 = vmatprep.subr.mxu0 0.0
    %2012 = vmatpush1.msra.mxu0 0.0
    %2013 = vmatprep.subr.mxu0 0.0
    %2014 = vmatpush1.msra.mxu0 0.0
    %2015 = vmatprep.subr.mxu0 0.0
    %2016 = vmatpush1.msra.mxu0 0.0
    %2017 = vmatprep.subr.mxu0 0.0
    %2018 = vmatpush1.msra.mxu0 0.0
    %2019 = vmatprep.subr.mxu0 0.0
    %2020 = vmatpush1.msra.mxu0 0.0
    %2021 = vmatprep.subr.mxu0 0.0
    %2022 = vmatpush1.msra.mxu0 0.0
    %2023 = vmatprep.subr.mxu0 0.0
    %2024 = vmatpush1.msra.mxu0 0.0
    %2025 = vmatprep.subr.mxu0 0.0
    %2026 = vmatpush1.msra.mxu0 0.0
    %2027 = vmatprep.subr.mxu0 0.0
    %2028 = vmatpush1.msra.mxu0 0.0
    %2029 = vmatprep.subr.mxu0 0.0
    %2030 = vmatpush1.msra.mxu0 0.0
    %2031 = vmatprep.subr.mxu0 0.0
    %2032 = vmatpush1.msra.mxu0 0.0
    %2033 = vmatprep.subr.mxu0 0.0
    %2034 = vmatpush1.msra.mxu0 0.0
    %2035 = vmatprep.subr.mxu0 0.0
    %2036 = vmatpush1.msra.mxu0 0.0
    %2037 = vmatprep.subr.mxu0 0.0
    %2038 = vmatpush1.msra.mxu0 0.0
    %2039 = vmatprep.subr.mxu0 0.0
    %2040 = vmatpush1.msra.mxu0 0.0
    %2041 = vmatprep.subr.mxu0 0.0
    %2042 = vmatpush1.msra.mxu0 0.0
    %2043 = vmatprep.subr.mxu0 0.0
    %2044 = vmatpush1.msra.mxu0 0.0
    %2045 = vmatprep.subr.mxu0 0.0
    %2046 = vmatpush1.msra.mxu0 0.0
    %2047 = vmatprep.subr.mxu0 0.0
    %2048 = vmatpush1.msra.mxu0 0.0
    %2049 = vmatprep.subr.mxu0 0.0
    %2050 = vmatpush1.msra.mxu0 0.0
    %2051 = vmatprep.mubr.f32.mxu0 0.0
    %2052 = vmatmul.mubr.f32.gmra.mrb[0].mxu0 %v1985
    %v2053 = vpop.f32.mrb[0].mxu0
    %v2054 = vadd.f32 %v1981, %v2053
    %v2055 = vpop.f32.mrb[0].mxu0
    %2056 = vdwg.mxu0
    %v2057 = vadd.f32 %v2054, %v316
    %v2058 = vxor.u32 %v2057, 2147483648
    %v2059 = vmul.f32 %v2058, 1.442695
    %v2060 = vpow.pop %v2059
    %v2061 = vadd.f32 %v2060, 1.0
    %v2062 = vrcp.pop %v2061
    %v2063 = vmul.f32 1.0, %v2062
    %v2064 = vtanh.pop %v2057
    %v2065 = vmul.f32 %v2063, %v1728
    %2067 = vrot.lane.b32.xlu0 %v2064, 64
    %v2068 = vpop.permute.xlu0 %2067
    %v2070 = vmul.f32 %v2063, %v2068
    %2072 = vrot.lane.b32.xlu0 %v2070, 32
    %v2073 = vpop.permute.xlu0 %2072
    %v2075 = vadd.f32 %v2065, %v2073
    %v2076 = vtanh.pop %v2075
    %2078 = vrot.lane.b32.xlu0 %v2076, 64
    %v2079 = vpop.permute.xlu0 %2078
    %v2081 = vmul.f32 %v2063, %v2079
    %v2082 = vsel %vm164, %v1909, 0
    %2084 = vmatprep.subr.mxu0 0.0
    %2085 = vmatpush1.msra.mxu0 %v158
    %2086 = vmatprep.subr.mxu0 0.0
    %2087 = vmatpush1.msra.mxu0 %v159
    %2088 = vmatprep.subr.mxu0 0.0
    %2089 = vmatpush1.msra.mxu0 %v160
    %2090 = vmatprep.subr.mxu0 0.0
    %2091 = vmatpush1.msra.mxu0 %v161
    %2092 = vmatprep.subr.mxu0 0.0
    %2093 = vmatpush1.msra.mxu0 0.0
    %2094 = vmatprep.subr.mxu0 0.0
    %2095 = vmatpush1.msra.mxu0 0.0
    %2096 = vmatprep.subr.mxu0 0.0
    %2097 = vmatpush1.msra.mxu0 0.0
    %2098 = vmatprep.subr.mxu0 0.0
    %2099 = vmatpush1.msra.mxu0 0.0
    %2100 = vmatprep.subr.mxu0 0.0
    %2101 = vmatpush1.msra.mxu0 0.0
    %2102 = vmatprep.subr.mxu0 0.0
    %2103 = vmatpush1.msra.mxu0 0.0
    %2104 = vmatprep.subr.mxu0 0.0
    %2105 = vmatpush1.msra.mxu0 0.0
    %2106 = vmatprep.subr.mxu0 0.0
    %2107 = vmatpush1.msra.mxu0 0.0
    %2108 = vmatprep.subr.mxu0 0.0
    %2109 = vmatpush1.msra.mxu0 0.0
    %2110 = vmatprep.subr.mxu0 0.0
    %2111 = vmatpush1.msra.mxu0 0.0
    %2112 = vmatprep.subr.mxu0 0.0
    %2113 = vmatpush1.msra.mxu0 0.0
    %2114 = vmatprep.subr.mxu0 0.0
    %2115 = vmatpush1.msra.mxu0 0.0
    %2116 = vmatprep.subr.mxu0 0.0
    %2117 = vmatpush1.msra.mxu0 0.0
    %2118 = vmatprep.subr.mxu0 0.0
    %2119 = vmatpush1.msra.mxu0 0.0
    %2120 = vmatprep.subr.mxu0 0.0
    %2121 = vmatpush1.msra.mxu0 0.0
    %2122 = vmatprep.subr.mxu0 0.0
    %2123 = vmatpush1.msra.mxu0 0.0
    %2124 = vmatprep.subr.mxu0 0.0
    %2125 = vmatpush1.msra.mxu0 0.0
    %2126 = vmatprep.subr.mxu0 0.0
    %2127 = vmatpush1.msra.mxu0 0.0
    %2128 = vmatprep.subr.mxu0 0.0
    %2129 = vmatpush1.msra.mxu0 0.0
    %2130 = vmatprep.subr.mxu0 0.0
    %2131 = vmatpush1.msra.mxu0 0.0
    %2132 = vmatprep.subr.mxu0 0.0
    %2133 = vmatpush1.msra.mxu0 0.0
    %2134 = vmatprep.subr.mxu0 0.0
    %2135 = vmatpush1.msra.mxu0 0.0
    %2136 = vmatprep.subr.mxu0 0.0
    %2137 = vmatpush1.msra.mxu0 0.0
    %2138 = vmatprep.subr.mxu0 0.0
    %2139 = vmatpush1.msra.mxu0 0.0
    %2140 = vmatprep.subr.mxu0 0.0
    %2141 = vmatpush1.msra.mxu0 0.0
    %2142 = vmatprep.subr.mxu0 0.0
    %2143 = vmatpush1.msra.mxu0 0.0
    %2144 = vmatprep.subr.mxu0 0.0
    %2145 = vmatpush1.msra.mxu0 0.0
    %2146 = vmatprep.subr.mxu0 0.0
    %2147 = vmatpush1.msra.mxu0 0.0
    %2148 = vmatprep.mubr.f32.mxu0 0.0
    %2149 = vmatmul.mubr.f32.gmra.mrb[0].mxu0 %v2082
    %v2150 = vpop.f32.mrb[0].mxu0
    %v2151 = vadd.f32 0.0, %v2150
    %v2152 = vpop.f32.mrb[0].mxu0
    %2153 = vdwg.mxu0
    %2155 = vrot.lane.b32.xlu0 %v2081, 32
    %v2156 = vpop.permute.xlu0 %2155
    %v2157 = vsel %vm164, %v2156, 0
    %2159 = vmatprep.subr.mxu0 0.0
    %2160 = vmatpush1.msra.mxu0 %v154
    %2161 = vmatprep.subr.mxu0 0.0
    %2162 = vmatpush1.msra.mxu0 %v155
    %2163 = vmatprep.subr.mxu0 0.0
    %2164 = vmatpush1.msra.mxu0 %v156
    %2165 = vmatprep.subr.mxu0 0.0
    %2166 = vmatpush1.msra.mxu0 %v157
    %2167 = vmatprep.subr.mxu0 0.0
    %2168 = vmatpush1.msra.mxu0 0.0
    %2169 = vmatprep.subr.mxu0 0.0
    %2170 = vmatpush1.msra.mxu0 0.0
    %2171 = vmatprep.subr.mxu0 0.0
    %2172 = vmatpush1.msra.mxu0 0.0
    %2173 = vmatprep.subr.mxu0 0.0
    %2174 = vmatpush1.msra.mxu0 0.0
    %2175 = vmatprep.subr.mxu0 0.0
    %2176 = vmatpush1.msra.mxu0 0.0
    %2177 = vmatprep.subr.mxu0 0.0
    %2178 = vmatpush1.msra.mxu0 0.0
    %2179 = vmatprep.subr.mxu0 0.0
    %2180 = vmatpush1.msra.mxu0 0.0
    %2181 = vmatprep.subr.mxu0 0.0
    %2182 = vmatpush1.msra.mxu0 0.0
    %2183 = vmatprep.subr.mxu0 0.0
    %2184 = vmatpush1.msra.mxu0 0.0
    %2185 = vmatprep.subr.mxu0 0.0
    %2186 = vmatpush1.msra.mxu0 0.0
    %2187 = vmatprep.subr.mxu0 0.0
    %2188 = vmatpush1.msra.mxu0 0.0
    %2189 = vmatprep.subr.mxu0 0.0
    %2190 = vmatpush1.msra.mxu0 0.0
    %2191 = vmatprep.subr.mxu0 0.0
    %2192 = vmatpush1.msra.mxu0 0.0
    %2193 = vmatprep.subr.mxu0 0.0
    %2194 = vmatpush1.msra.mxu0 0.0
    %2195 = vmatprep.subr.mxu0 0.0
    %2196 = vmatpush1.msra.mxu0 0.0
    %2197 = vmatprep.subr.mxu0 0.0
    %2198 = vmatpush1.msra.mxu0 0.0
    %2199 = vmatprep.subr.mxu0 0.0
    %2200 = vmatpush1.msra.mxu0 0.0
    %2201 = vmatprep.subr.mxu0 0.0
    %2202 = vmatpush1.msra.mxu0 0.0
    %2203 = vmatprep.subr.mxu0 0.0
    %2204 = vmatpush1.msra.mxu0 0.0
    %2205 = vmatprep.subr.mxu0 0.0
    %2206 = vmatpush1.msra.mxu0 0.0
    %2207 = vmatprep.subr.mxu0 0.0
    %2208 = vmatpush1.msra.mxu0 0.0
    %2209 = vmatprep.subr.mxu0 0.0
    %2210 = vmatpush1.msra.mxu0 0.0
    %2211 = vmatprep.subr.mxu0 0.0
    %2212 = vmatpush1.msra.mxu0 0.0
    %2213 = vmatprep.subr.mxu0 0.0
    %2214 = vmatpush1.msra.mxu0 0.0
    %2215 = vmatprep.subr.mxu0 0.0
    %2216 = vmatpush1.msra.mxu0 0.0
    %2217 = vmatprep.subr.mxu0 0.0
    %2218 = vmatpush1.msra.mxu0 0.0
    %2219 = vmatprep.subr.mxu0 0.0
    %2220 = vmatpush1.msra.mxu0 0.0
    %2221 = vmatprep.subr.mxu0 0.0
    %2222 = vmatpush1.msra.mxu0 0.0
    %2223 = vmatprep.mubr.f32.mxu0 0.0
    %2224 = vmatmul.mubr.f32.gmra.mrb[0].mxu0 %v2157
    %v2225 = vpop.f32.mrb[0].mxu0
    %v2226 = vadd.f32 %v2151, %v2225
    %v2227 = vpop.f32.mrb[0].mxu0
    %2228 = vdwg.mxu0
    %v2229 = vadd.f32 %v2226, %v492
    %v2230 = vxor.u32 %v2229, 2147483648
    %v2231 = vmul.f32 %v2230, 1.442695
    %v2232 = vpow.pop %v2231
    %v2233 = vadd.f32 %v2232, 1.0
    %v2234 = vrcp.pop %v2233
    %v2235 = vmul.f32 1.0, %v2234
    %v2236 = vtanh.pop %v2229
    %v2237 = vmul.f32 %v2235, %v1900
    %2239 = vrot.lane.b32.xlu0 %v2236, 64
    %v2240 = vpop.permute.xlu0 %2239
    %v2242 = vmul.f32 %v2235, %v2240
    %2244 = vrot.lane.b32.xlu0 %v2242, 32
    %v2245 = vpop.permute.xlu0 %2244
    %v2247 = vadd.f32 %v2237, %v2245
    %v2248 = vtanh.pop %v2247
    %2250 = vrot.lane.b32.xlu0 %v2248, 64
    %v2251 = vpop.permute.xlu0 %2250
    %v2253 = vmul.f32 %v2235, %v2251
    %2255 = vrot.lane.b32.xlu0 %v2253, 32
    %v2256 = vpop.permute.xlu0 %2255
    %s2258 = scalar_lea.vmem [#allocation3], 10
    %2259 = vst.msk [vmem:[%s2258] sm:$0x3] %vm523, %v2256
    %v2260 = vld [vmem:[%s136] sm:$0x3]
    %2261 = vmatprep.subr.mxu0 0.0
    %2262 = vmatpush1.msra.mxu0 %v149
    %2263 = vmatprep.subr.mxu0 0.0
    %2264 = vmatpush1.msra.mxu0 %v150
    %2265 = vmatprep.subr.mxu0 0.0
    %2266 = vmatpush1.msra.mxu0 %v151
    %2267 = vmatprep.subr.mxu0 0.0
    %2268 = vmatpush1.msra.mxu0 %v152
    %2269 = vmatprep.subr.mxu0 0.0
    %2270 = vmatpush1.msra.mxu0 0.0
    %2271 = vmatprep.subr.mxu0 0.0
    %2272 = vmatpush1.msra.mxu0 0.0
    %2273 = vmatprep.subr.mxu0 0.0
    %2274 = vmatpush1.msra.mxu0 0.0
    %2275 = vmatprep.subr.mxu0 0.0
    %2276 = vmatpush1.msra.mxu0 0.0
    %2277 = vmatprep.subr.mxu0 0.0
    %2278 = vmatpush1.msra.mxu0 0.0
    %2279 = vmatprep.subr.mxu0 0.0
    %2280 = vmatpush1.msra.mxu0 0.0
    %2281 = vmatprep.subr.mxu0 0.0
    %2282 = vmatpush1.msra.mxu0 0.0
    %2283 = vmatprep.subr.mxu0 0.0
    %2284 = vmatpush1.msra.mxu0 0.0
    %2285 = vmatprep.subr.mxu0 0.0
    %2286 = vmatpush1.msra.mxu0 0.0
    %2287 = vmatprep.subr.mxu0 0.0
    %2288 = vmatpush1.msra.mxu0 0.0
    %2289 = vmatprep.subr.mxu0 0.0
    %2290 = vmatpush1.msra.mxu0 0.0
    %2291 = vmatprep.subr.mxu0 0.0
    %2292 = vmatpush1.msra.mxu0 0.0
    %2293 = vmatprep.subr.mxu0 0.0
    %2294 = vmatpush1.msra.mxu0 0.0
    %2295 = vmatprep.subr.mxu0 0.0
    %2296 = vmatpush1.msra.mxu0 0.0
    %2297 = vmatprep.subr.mxu0 0.0
    %2298 = vmatpush1.msra.mxu0 0.0
    %2299 = vmatprep.subr.mxu0 0.0
    %2300 = vmatpush1.msra.mxu0 0.0
    %2301 = vmatprep.subr.mxu0 0.0
    %2302 = vmatpush1.msra.mxu0 0.0
    %2303 = vmatprep.subr.mxu0 0.0
    %2304 = vmatpush1.msra.mxu0 0.0
    %2305 = vmatprep.subr.mxu0 0.0
    %2306 = vmatpush1.msra.mxu0 0.0
    %2307 = vmatprep.subr.mxu0 0.0
    %2308 = vmatpush1.msra.mxu0 0.0
    %2309 = vmatprep.subr.mxu0 0.0
    %2310 = vmatpush1.msra.mxu0 0.0
    %2311 = vmatprep.subr.mxu0 0.0
    %2312 = vmatpush1.msra.mxu0 0.0
    %2313 = vmatprep.subr.mxu0 0.0
    %2314 = vmatpush1.msra.mxu0 0.0
    %2315 = vmatprep.subr.mxu0 0.0
    %2316 = vmatpush1.msra.mxu0 0.0
    %2317 = vmatprep.subr.mxu0 0.0
    %2318 = vmatpush1.msra.mxu0 0.0
    %2319 = vmatprep.subr.mxu0 0.0
    %2320 = vmatpush1.msra.mxu0 0.0
    %2321 = vmatprep.subr.mxu0 0.0
    %2322 = vmatpush1.msra.mxu0 0.0
    %2323 = vmatprep.subr.mxu0 0.0
    %2324 = vmatpush1.msra.mxu0 0.0
    %2325 = vmatprep.mubr.f32.mxu0 0.0
    %2326 = vmatmul.mubr.f32.gmra.mrb[0].mxu0 %v2157
    %v2327 = vpop.f32.mrb[0].mxu0
    %v2328 = vadd.f32 0.0, %v2327
    %v2329 = vpop.f32.mrb[0].mxu0
    %2330 = vdwg.mxu0
    %v2332 = vsel %vm238, %v2260, 0
    %2334 = vmatprep.subr.mxu0 0.0
    %2335 = vmatpush1.msra.mxu0 %v147
    %2336 = vmatprep.subr.mxu0 0.0
    %2337 = vmatpush1.msra.mxu0 %v148
    %2338 = vmatprep.subr.mxu0 0.0
    %2339 = vmatpush1.msra.mxu0 0.0
    %2340 = vmatprep.subr.mxu0 0.0
    %2341 = vmatpush1.msra.mxu0 0.0
    %2342 = vmatprep.subr.mxu0 0.0
    %2343 = vmatpush1.msra.mxu0 0.0
    %2344 = vmatprep.subr.mxu0 0.0
    %2345 = vmatpush1.msra.mxu0 0.0
    %2346 = vmatprep.subr.mxu0 0.0
    %2347 = vmatpush1.msra.mxu0 0.0
    %2348 = vmatprep.subr.mxu0 0.0
    %2349 = vmatpush1.msra.mxu0 0.0
    %2350 = vmatprep.subr.mxu0 0.0
    %2351 = vmatpush1.msra.mxu0 0.0
    %2352 = vmatprep.subr.mxu0 0.0
    %2353 = vmatpush1.msra.mxu0 0.0
    %2354 = vmatprep.subr.mxu0 0.0
    %2355 = vmatpush1.msra.mxu0 0.0
    %2356 = vmatprep.subr.mxu0 0.0
    %2357 = vmatpush1.msra.mxu0 0.0
    %2358 = vmatprep.subr.mxu0 0.0
    %2359 = vmatpush1.msra.mxu0 0.0
    %2360 = vmatprep.subr.mxu0 0.0
    %2361 = vmatpush1.msra.mxu0 0.0
    %2362 = vmatprep.subr.mxu0 0.0
    %2363 = vmatpush1.msra.mxu0 0.0
    %2364 = vmatprep.subr.mxu0 0.0
    %2365 = vmatpush1.msra.mxu0 0.0
    %2366 = vmatprep.subr.mxu0 0.0
    %2367 = vmatpush1.msra.mxu0 0.0
    %2368 = vmatprep.subr.mxu0 0.0
    %2369 = vmatpush1.msra.mxu0 0.0
    %2370 = vmatprep.subr.mxu0 0.0
    %2371 = vmatpush1.msra.mxu0 0.0
    %2372 = vmatprep.subr.mxu0 0.0
    %2373 = vmatpush1.msra.mxu0 0.0
    %2374 = vmatprep.subr.mxu0 0.0
    %2375 = vmatpush1.msra.mxu0 0.0
    %2376 = vmatprep.subr.mxu0 0.0
    %2377 = vmatpush1.msra.mxu0 0.0
    %2378 = vmatprep.subr.mxu0 0.0
    %2379 = vmatpush1.msra.mxu0 0.0
    %2380 = vmatprep.subr.mxu0 0.0
    %2381 = vmatpush1.msra.mxu0 0.0
    %2382 = vmatprep.subr.mxu0 0.0
    %2383 = vmatpush1.msra.mxu0 0.0
    %2384 = vmatprep.subr.mxu0 0.0
    %2385 = vmatpush1.msra.mxu0 0.0
    %2386 = vmatprep.subr.mxu0 0.0
    %2387 = vmatpush1.msra.mxu0 0.0
    %2388 = vmatprep.subr.mxu0 0.0
    %2389 = vmatpush1.msra.mxu0 0.0
    %2390 = vmatprep.subr.mxu0 0.0
    %2391 = vmatpush1.msra.mxu0 0.0
    %2392 = vmatprep.subr.mxu0 0.0
    %2393 = vmatpush1.msra.mxu0 0.0
    %2394 = vmatprep.subr.mxu0 0.0
    %2395 = vmatpush1.msra.mxu0 0.0
    %2396 = vmatprep.subr.mxu0 0.0
    %2397 = vmatpush1.msra.mxu0 0.0
    %2398 = vmatprep.mubr.f32.mxu0 0.0
    %2399 = vmatmul.mubr.f32.gmra.mrb[0].mxu0 %v2332
    %v2400 = vpop.f32.mrb[0].mxu0
    %v2401 = vadd.f32 %v2328, %v2400
    %v2402 = vpop.f32.mrb[0].mxu0
    %2403 = vdwg.mxu0
    %v2404 = vadd.f32 %v2401, %v316
    %v2405 = vxor.u32 %v2404, 2147483648
    %v2406 = vmul.f32 %v2405, 1.442695
    %v2407 = vpow.pop %v2406
    %v2408 = vadd.f32 %v2407, 1.0
    %v2409 = vrcp.pop %v2408
    %v2410 = vmul.f32 1.0, %v2409
    %v2411 = vtanh.pop %v2404
    %v2412 = vmul.f32 %v2410, %v2075
    %2414 = vrot.lane.b32.xlu0 %v2411, 64
    %v2415 = vpop.permute.xlu0 %2414
    %v2417 = vmul.f32 %v2410, %v2415
    %2419 = vrot.lane.b32.xlu0 %v2417, 32
    %v2420 = vpop.permute.xlu0 %2419
    %v2422 = vadd.f32 %v2412, %v2420
    %v2423 = vtanh.pop %v2422
    %2425 = vrot.lane.b32.xlu0 %v2423, 64
    %v2426 = vpop.permute.xlu0 %2425
    %v2428 = vmul.f32 %v2410, %v2426
    %v2429 = vsel %vm164, %v2256, 0
    %2431 = vmatprep.subr.mxu0 0.0
    %2432 = vmatpush1.msra.mxu0 %v158
    %2433 = vmatprep.subr.mxu0 0.0
    %2434 = vmatpush1.msra.mxu0 %v159
    %2435 = vmatprep.subr.mxu0 0.0
    %2436 = vmatpush1.msra.mxu0 %v160
    %2437 = vmatprep.subr.mxu0 0.0
    %2438 = vmatpush1.msra.mxu0 %v161
    %2439 = vmatprep.subr.mxu0 0.0
    %2440 = vmatpush1.msra.mxu0 0.0
    %2441 = vmatprep.subr.mxu0 0.0
    %2442 = vmatpush1.msra.mxu0 0.0
    %2443 = vmatprep.subr.mxu0 0.0
    %2444 = vmatpush1.msra.mxu0 0.0
    %2445 = vmatprep.subr.mxu0 0.0
    %2446 = vmatpush1.msra.mxu0 0.0
    %2447 = vmatprep.subr.mxu0 0.0
    %2448 = vmatpush1.msra.mxu0 0.0
    %2449 = vmatprep.subr.mxu0 0.0
    %2450 = vmatpush1.msra.mxu0 0.0
    %2451 = vmatprep.subr.mxu0 0.0
    %2452 = vmatpush1.msra.mxu0 0.0
    %2453 = vmatprep.subr.mxu0 0.0
    %2454 = vmatpush1.msra.mxu0 0.0
    %2455 = vmatprep.subr.mxu0 0.0
    %2456 = vmatpush1.msra.mxu0 0.0
    %2457 = vmatprep.subr.mxu0 0.0
    %2458 = vmatpush1.msra.mxu0 0.0
    %2459 = vmatprep.subr.mxu0 0.0
    %2460 = vmatpush1.msra.mxu0 0.0
    %2461 = vmatprep.subr.mxu0 0.0
    %2462 = vmatpush1.msra.mxu0 0.0
    %2463 = vmatprep.subr.mxu0 0.0
    %2464 = vmatpush1.msra.mxu0 0.0
    %2465 = vmatprep.subr.mxu0 0.0
    %2466 = vmatpush1.msra.mxu0 0.0
    %2467 = vmatprep.subr.mxu0 0.0
    %2468 = vmatpush1.msra.mxu0 0.0
    %2469 = vmatprep.subr.mxu0 0.0
    %2470 = vmatpush1.msra.mxu0 0.0
    %2471 = vmatprep.subr.mxu0 0.0
    %2472 = vmatpush1.msra.mxu0 0.0
    %2473 = vmatprep.subr.mxu0 0.0
    %2474 = vmatpush1.msra.mxu0 0.0
    %2475 = vmatprep.subr.mxu0 0.0
    %2476 = vmatpush1.msra.mxu0 0.0
    %2477 = vmatprep.subr.mxu0 0.0
    %2478 = vmatpush1.msra.mxu0 0.0
    %2479 = vmatprep.subr.mxu0 0.0
    %2480 = vmatpush1.msra.mxu0 0.0
    %2481 = vmatprep.subr.mxu0 0.0
    %2482 = vmatpush1.msra.mxu0 0.0
    %2483 = vmatprep.subr.mxu0 0.0
    %2484 = vmatpush1.msra.mxu0 0.0
    %2485 = vmatprep.subr.mxu0 0.0
    %2486 = vmatpush1.msra.mxu0 0.0
    %2487 = vmatprep.subr.mxu0 0.0
    %2488 = vmatpush1.msra.mxu0 0.0
    %2489 = vmatprep.subr.mxu0 0.0
    %2490 = vmatpush1.msra.mxu0 0.0
    %2491 = vmatprep.subr.mxu0 0.0
    %2492 = vmatpush1.msra.mxu0 0.0
    %2493 = vmatprep.subr.mxu0 0.0
    %2494 = vmatpush1.msra.mxu0 0.0
    %2495 = vmatprep.mubr.f32.mxu0 0.0
    %2496 = vmatmul.mubr.f32.gmra.mrb[0].mxu0 %v2429
    %v2497 = vpop.f32.mrb[0].mxu0
    %v2498 = vadd.f32 0.0, %v2497
    %v2499 = vpop.f32.mrb[0].mxu0
    %2500 = vdwg.mxu0
    %2502 = vrot.lane.b32.xlu0 %v2428, 32
    %v2503 = vpop.permute.xlu0 %2502
    %v2504 = vsel %vm164, %v2503, 0
    %2506 = vmatprep.subr.mxu0 0.0
    %2507 = vmatpush1.msra.mxu0 %v154
    %2508 = vmatprep.subr.mxu0 0.0
    %2509 = vmatpush1.msra.mxu0 %v155
    %2510 = vmatprep.subr.mxu0 0.0
    %2511 = vmatpush1.msra.mxu0 %v156
    %2512 = vmatprep.subr.mxu0 0.0
    %2513 = vmatpush1.msra.mxu0 %v157
    %2514 = vmatprep.subr.mxu0 0.0
    %2515 = vmatpush1.msra.mxu0 0.0
    %2516 = vmatprep.subr.mxu0 0.0
    %2517 = vmatpush1.msra.mxu0 0.0
    %2518 = vmatprep.subr.mxu0 0.0
    %2519 = vmatpush1.msra.mxu0 0.0
    %2520 = vmatprep.subr.mxu0 0.0
    %2521 = vmatpush1.msra.mxu0 0.0
    %2522 = vmatprep.subr.mxu0 0.0
    %2523 = vmatpush1.msra.mxu0 0.0
    %2524 = vmatprep.subr.mxu0 0.0
    %2525 = vmatpush1.msra.mxu0 0.0
    %2526 = vmatprep.subr.mxu0 0.0
    %2527 = vmatpush1.msra.mxu0 0.0
    %2528 = vmatprep.subr.mxu0 0.0
    %2529 = vmatpush1.msra.mxu0 0.0
    %2530 = vmatprep.subr.mxu0 0.0
    %2531 = vmatpush1.msra.mxu0 0.0
    %2532 = vmatprep.subr.mxu0 0.0
    %2533 = vmatpush1.msra.mxu0 0.0
    %2534 = vmatprep.subr.mxu0 0.0
    %2535 = vmatpush1.msra.mxu0 0.0
    %2536 = vmatprep.subr.mxu0 0.0
    %2537 = vmatpush1.msra.mxu0 0.0
    %2538 = vmatprep.subr.mxu0 0.0
    %2539 = vmatpush1.msra.mxu0 0.0
    %2540 = vmatprep.subr.mxu0 0.0
    %2541 = vmatpush1.msra.mxu0 0.0
    %2542 = vmatprep.subr.mxu0 0.0
    %2543 = vmatpush1.msra.mxu0 0.0
    %2544 = vmatprep.subr.mxu0 0.0
    %2545 = vmatpush1.msra.mxu0 0.0
    %2546 = vmatprep.subr.mxu0 0.0
    %2547 = vmatpush1.msra.mxu0 0.0
    %2548 = vmatprep.subr.mxu0 0.0
    %2549 = vmatpush1.msra.mxu0 0.0
    %2550 = vmatprep.subr.mxu0 0.0
    %2551 = vmatpush1.msra.mxu0 0.0
    %2552 = vmatprep.subr.mxu0 0.0
    %2553 = vmatpush1.msra.mxu0 0.0
    %2554 = vmatprep.subr.mxu0 0.0
    %2555 = vmatpush1.msra.mxu0 0.0
    %2556 = vmatprep.subr.mxu0 0.0
    %2557 = vmatpush1.msra.mxu0 0.0
    %2558 = vmatprep.subr.mxu0 0.0
    %2559 = vmatpush1.msra.mxu0 0.0
    %2560 = vmatprep.subr.mxu0 0.0
    %2561 = vmatpush1.msra.mxu0 0.0
    %2562 = vmatprep.subr.mxu0 0.0
    %2563 = vmatpush1.msra.mxu0 0.0
    %2564 = vmatprep.subr.mxu0 0.0
    %2565 = vmatpush1.msra.mxu0 0.0
    %2566 = vmatprep.subr.mxu0 0.0
    %2567 = vmatpush1.msra.mxu0 0.0
    %2568 = vmatprep.subr.mxu0 0.0
    %2569 = vmatpush1.msra.mxu0 0.0
    %2570 = vmatprep.mubr.f32.mxu0 0.0
    %2571 = vmatmul.mubr.f32.gmra.mrb[0].mxu0 %v2504
    %v2572 = vpop.f32.mrb[0].mxu0
    %v2573 = vadd.f32 %v2498, %v2572
    %v2574 = vpop.f32.mrb[0].mxu0
    %2575 = vdwg.mxu0
    %v2576 = vadd.f32 %v2573, %v492
    %v2577 = vxor.u32 %v2576, 2147483648
    %v2578 = vmul.f32 %v2577, 1.442695
    %v2579 = vpow.pop %v2578
    %v2580 = vadd.f32 %v2579, 1.0
    %v2581 = vrcp.pop %v2580
    %v2582 = vmul.f32 1.0, %v2581
    %v2583 = vtanh.pop %v2576
    %v2584 = vmul.f32 %v2582, %v2247
    %2586 = vrot.lane.b32.xlu0 %v2583, 64
    %v2587 = vpop.permute.xlu0 %2586
    %v2589 = vmul.f32 %v2582, %v2587
    %2591 = vrot.lane.b32.xlu0 %v2589, 32
    %v2592 = vpop.permute.xlu0 %2591
    %v2594 = vadd.f32 %v2584, %v2592
    %v2595 = vtanh.pop %v2594
    %2597 = vrot.lane.b32.xlu0 %v2595, 64
    %v2598 = vpop.permute.xlu0 %2597
    %v2600 = vmul.f32 %v2582, %v2598
    %2602 = vrot.lane.b32.xlu0 %v2600, 32
    %v2603 = vpop.permute.xlu0 %2602
    %s2605 = scalar_lea.vmem [#allocation3], 12
    %2606 = vst.msk [vmem:[%s2605] sm:$0x3] %vm523, %v2603
    %v2607 = vld [vmem:[%s145] sm:$0x3]
    %2608 = vmatprep.subr.mxu0 0.0
    %2609 = vmatpush1.msra.mxu0 %v149
    %2610 = vmatprep.subr.mxu0 0.0
    %2611 = vmatpush1.msra.mxu0 %v150
    %2612 = vmatprep.subr.mxu0 0.0
    %2613 = vmatpush1.msra.mxu0 %v151
    %2614 = vmatprep.subr.mxu0 0.0
    %2615 = vmatpush1.msra.mxu0 %v152
    %2616 = vmatprep.subr.mxu0 0.0
    %2617 = vmatpush1.msra.mxu0 0.0
    %2618 = vmatprep.subr.mxu0 0.0
    %2619 = vmatpush1.msra.mxu0 0.0
    %2620 = vmatprep.subr.mxu0 0.0
    %2621 = vmatpush1.msra.mxu0 0.0
    %2622 = vmatprep.subr.mxu0 0.0
    %2623 = vmatpush1.msra.mxu0 0.0
    %2624 = vmatprep.subr.mxu0 0.0
    %2625 = vmatpush1.msra.mxu0 0.0
    %2626 = vmatprep.subr.mxu0 0.0
    %2627 = vmatpush1.msra.mxu0 0.0
    %2628 = vmatprep.subr.mxu0 0.0
    %2629 = vmatpush1.msra.mxu0 0.0
    %2630 = vmatprep.subr.mxu0 0.0
    %2631 = vmatpush1.msra.mxu0 0.0
    %2632 = vmatprep.subr.mxu0 0.0
    %2633 = vmatpush1.msra.mxu0 0.0
    %2634 = vmatprep.subr.mxu0 0.0
    %2635 = vmatpush1.msra.mxu0 0.0
    %2636 = vmatprep.subr.mxu0 0.0
    %2637 = vmatpush1.msra.mxu0 0.0
    %2638 = vmatprep.subr.mxu0 0.0
    %2639 = vmatpush1.msra.mxu0 0.0
    %2640 = vmatprep.subr.mxu0 0.0
    %2641 = vmatpush1.msra.mxu0 0.0
    %2642 = vmatprep.subr.mxu0 0.0
    %2643 = vmatpush1.msra.mxu0 0.0
    %2644 = vmatprep.subr.mxu0 0.0
    %2645 = vmatpush1.msra.mxu0 0.0
    %2646 = vmatprep.subr.mxu0 0.0
    %2647 = vmatpush1.msra.mxu0 0.0
    %2648 = vmatprep.subr.mxu0 0.0
    %2649 = vmatpush1.msra.mxu0 0.0
    %2650 = vmatprep.subr.mxu0 0.0
    %2651 = vmatpush1.msra.mxu0 0.0
    %2652 = vmatprep.subr.mxu0 0.0
    %2653 = vmatpush1.msra.mxu0 0.0
    %2654 = vmatprep.subr.mxu0 0.0
    %2655 = vmatpush1.msra.mxu0 0.0
    %2656 = vmatprep.subr.mxu0 0.0
    %2657 = vmatpush1.msra.mxu0 0.0
    %2658 = vmatprep.subr.mxu0 0.0
    %2659 = vmatpush1.msra.mxu0 0.0
    %2660 = vmatprep.subr.mxu0 0.0
    %2661 = vmatpush1.msra.mxu0 0.0
    %2662 = vmatprep.subr.mxu0 0.0
    %2663 = vmatpush1.msra.mxu0 0.0
    %2664 = vmatprep.subr.mxu0 0.0
    %2665 = vmatpush1.msra.mxu0 0.0
    %2666 = vmatprep.subr.mxu0 0.0
    %2667 = vmatpush1.msra.mxu0 0.0
    %2668 = vmatprep.subr.mxu0 0.0
    %2669 = vmatpush1.msra.mxu0 0.0
    %2670 = vmatprep.subr.mxu0 0.0
    %2671 = vmatpush1.msra.mxu0 0.0
    %2672 = vmatprep.mubr.f32.mxu0 0.0
    %2673 = vmatmul.mubr.f32.gmra.mrb[0].mxu0 %v2504
    %v2674 = vpop.f32.mrb[0].mxu0
    %v2675 = vadd.f32 0.0, %v2674
    %v2676 = vpop.f32.mrb[0].mxu0
    %2677 = vdwg.mxu0
    %v2679 = vsel %vm238, %v2607, 0
    %2681 = vmatprep.subr.mxu0 0.0
    %2682 = vmatpush1.msra.mxu0 %v147
    %2683 = vmatprep.subr.mxu0 0.0
    %2684 = vmatpush1.msra.mxu0 %v148
    %2685 = vmatprep.subr.mxu0 0.0
    %2686 = vmatpush1.msra.mxu0 0.0
    %2687 = vmatprep.subr.mxu0 0.0
    %2688 = vmatpush1.msra.mxu0 0.0
    %2689 = vmatprep.subr.mxu0 0.0
    %2690 = vmatpush1.msra.mxu0 0.0
    %2691 = vmatprep.subr.mxu0 0.0
    %2692 = vmatpush1.msra.mxu0 0.0
    %2693 = vmatprep.subr.mxu0 0.0
    %2694 = vmatpush1.msra.mxu0 0.0
    %2695 = vmatprep.subr.mxu0 0.0
    %2696 = vmatpush1.msra.mxu0 0.0
    %2697 = vmatprep.subr.mxu0 0.0
    %2698 = vmatpush1.msra.mxu0 0.0
    %2699 = vmatprep.subr.mxu0 0.0
    %2700 = vmatpush1.msra.mxu0 0.0
    %2701 = vmatprep.subr.mxu0 0.0
    %2702 = vmatpush1.msra.mxu0 0.0
    %2703 = vmatprep.subr.mxu0 0.0
    %2704 = vmatpush1.msra.mxu0 0.0
    %2705 = vmatprep.subr.mxu0 0.0
    %2706 = vmatpush1.msra.mxu0 0.0
    %2707 = vmatprep.subr.mxu0 0.0
    %2708 = vmatpush1.msra.mxu0 0.0
    %2709 = vmatprep.subr.mxu0 0.0
    %2710 = vmatpush1.msra.mxu0 0.0
    %2711 = vmatprep.subr.mxu0 0.0
    %2712 = vmatpush1.msra.mxu0 0.0
    %2713 = vmatprep.subr.mxu0 0.0
    %2714 = vmatpush1.msra.mxu0 0.0
    %2715 = vmatprep.subr.mxu0 0.0
    %2716 = vmatpush1.msra.mxu0 0.0
    %2717 = vmatprep.subr.mxu0 0.0
    %2718 = vmatpush1.msra.mxu0 0.0
    %2719 = vmatprep.subr.mxu0 0.0
    %2720 = vmatpush1.msra.mxu0 0.0
    %2721 = vmatprep.subr.mxu0 0.0
    %2722 = vmatpush1.msra.mxu0 0.0
    %2723 = vmatprep.subr.mxu0 0.0
    %2724 = vmatpush1.msra.mxu0 0.0
    %2725 = vmatprep.subr.mxu0 0.0
    %2726 = vmatpush1.msra.mxu0 0.0
    %2727 = vmatprep.subr.mxu0 0.0
    %2728 = vmatpush1.msra.mxu0 0.0
    %2729 = vmatprep.subr.mxu0 0.0
    %2730 = vmatpush1.msra.mxu0 0.0
    %2731 = vmatprep.subr.mxu0 0.0
    %2732 = vmatpush1.msra.mxu0 0.0
    %2733 = vmatprep.subr.mxu0 0.0
    %2734 = vmatpush1.msra.mxu0 0.0
    %2735 = vmatprep.subr.mxu0 0.0
    %2736 = vmatpush1.msra.mxu0 0.0
    %2737 = vmatprep.subr.mxu0 0.0
    %2738 = vmatpush1.msra.mxu0 0.0
    %2739 = vmatprep.subr.mxu0 0.0
    %2740 = vmatpush1.msra.mxu0 0.0
    %2741 = vmatprep.subr.mxu0 0.0
    %2742 = vmatpush1.msra.mxu0 0.0
    %2743 = vmatprep.subr.mxu0 0.0
    %2744 = vmatpush1.msra.mxu0 0.0
    %2745 = vmatprep.mubr.f32.mxu0 0.0
    %2746 = vmatmul.mubr.f32.gmra.mrb[0].mxu0 %v2679
    %v2747 = vpop.f32.mrb[0].mxu0
    %v2748 = vadd.f32 %v2675, %v2747
    %v2749 = vpop.f32.mrb[0].mxu0
    %2750 = vdwg.mxu0
    %v2751 = vadd.f32 %v2748, %v316
    %v2752 = vxor.u32 %v2751, 2147483648
    %v2753 = vmul.f32 %v2752, 1.442695
    %v2754 = vpow.pop %v2753
    %v2755 = vadd.f32 %v2754, 1.0
    %v2756 = vrcp.pop %v2755
    %v2757 = vmul.f32 1.0, %v2756
    %v2758 = vtanh.pop %v2751
    %v2759 = vmul.f32 %v2757, %v2422
    %2761 = vrot.lane.b32.xlu0 %v2758, 64
    %v2762 = vpop.permute.xlu0 %2761
    %v2764 = vmul.f32 %v2757, %v2762
    %2766 = vrot.lane.b32.xlu0 %v2764, 32
    %v2767 = vpop.permute.xlu0 %2766
    %v2769 = vadd.f32 %v2759, %v2767
    %v2770 = vtanh.pop %v2769
    %2772 = vrot.lane.b32.xlu0 %v2770, 64
    %v2773 = vpop.permute.xlu0 %2772
    %v2775 = vmul.f32 %v2757, %v2773
    %v2776 = vsel %vm164, %v2603, 0
    %2778 = vmatprep.subr.mxu0 0.0
    %2779 = vmatpush1.msra.mxu0 %v158
    %2780 = vmatprep.subr.mxu0 0.0
    %2781 = vmatpush1.msra.mxu0 %v159
    %2782 = vmatprep.subr.mxu0 0.0
    %2783 = vmatpush1.msra.mxu0 %v160
    %2784 = vmatprep.subr.mxu0 0.0
    %2785 = vmatpush1.msra.mxu0 %v161
    %2786 = vmatprep.subr.mxu0 0.0
    %2787 = vmatpush1.msra.mxu0 0.0
    %2788 = vmatprep.subr.mxu0 0.0
    %2789 = vmatpush1.msra.mxu0 0.0
    %2790 = vmatprep.subr.mxu0 0.0
    %2791 = vmatpush1.msra.mxu0 0.0
    %2792 = vmatprep.subr.mxu0 0.0
    %2793 = vmatpush1.msra.mxu0 0.0
    %2794 = vmatprep.subr.mxu0 0.0
    %2795 = vmatpush1.msra.mxu0 0.0
    %2796 = vmatprep.subr.mxu0 0.0
    %2797 = vmatpush1.msra.mxu0 0.0
    %2798 = vmatprep.subr.mxu0 0.0
    %2799 = vmatpush1.msra.mxu0 0.0
    %2800 = vmatprep.subr.mxu0 0.0
    %2801 = vmatpush1.msra.mxu0 0.0
    %2802 = vmatprep.subr.mxu0 0.0
    %2803 = vmatpush1.msra.mxu0 0.0
    %2804 = vmatprep.subr.mxu0 0.0
    %2805 = vmatpush1.msra.mxu0 0.0
    %2806 = vmatprep.subr.mxu0 0.0
    %2807 = vmatpush1.msra.mxu0 0.0
    %2808 = vmatprep.subr.mxu0 0.0
    %2809 = vmatpush1.msra.mxu0 0.0
    %2810 = vmatprep.subr.mxu0 0.0
    %2811 = vmatpush1.msra.mxu0 0.0
    %2812 = vmatprep.subr.mxu0 0.0
    %2813 = vmatpush1.msra.mxu0 0.0
    %2814 = vmatprep.subr.mxu0 0.0
    %2815 = vmatpush1.msra.mxu0 0.0
    %2816 = vmatprep.subr.mxu0 0.0
    %2817 = vmatpush1.msra.mxu0 0.0
    %2818 = vmatprep.subr.mxu0 0.0
    %2819 = vmatpush1.msra.mxu0 0.0
    %2820 = vmatprep.subr.mxu0 0.0
    %2821 = vmatpush1.msra.mxu0 0.0
    %2822 = vmatprep.subr.mxu0 0.0
    %2823 = vmatpush1.msra.mxu0 0.0
    %2824 = vmatprep.subr.mxu0 0.0
    %2825 = vmatpush1.msra.mxu0 0.0
    %2826 = vmatprep.subr.mxu0 0.0
    %2827 = vmatpush1.msra.mxu0 0.0
    %2828 = vmatprep.subr.mxu0 0.0
    %2829 = vmatpush1.msra.mxu0 0.0
    %2830 = vmatprep.subr.mxu0 0.0
    %2831 = vmatpush1.msra.mxu0 0.0
    %2832 = vmatprep.subr.mxu0 0.0
    %2833 = vmatpush1.msra.mxu0 0.0
    %2834 = vmatprep.subr.mxu0 0.0
    %2835 = vmatpush1.msra.mxu0 0.0
    %2836 = vmatprep.subr.mxu0 0.0
    %2837 = vmatpush1.msra.mxu0 0.0
    %2838 = vmatprep.subr.mxu0 0.0
    %2839 = vmatpush1.msra.mxu0 0.0
    %2840 = vmatprep.subr.mxu0 0.0
    %2841 = vmatpush1.msra.mxu0 0.0
    %2842 = vmatprep.mubr.f32.mxu0 0.0
    %2843 = vmatmul.mubr.f32.gmra.mrb[0].mxu0 %v2776
    %v2844 = vpop.f32.mrb[0].mxu0
    %v2845 = vadd.f32 0.0, %v2844
    %v2846 = vpop.f32.mrb[0].mxu0
    %2847 = vdwg.mxu0
    %2849 = vrot.lane.b32.xlu0 %v2775, 32
    %v2850 = vpop.permute.xlu0 %2849
    %v2851 = vsel %vm164, %v2850, 0
    %2853 = vmatprep.subr.mxu0 0.0
    %2854 = vmatpush1.msra.mxu0 %v154
    %2855 = vmatprep.subr.mxu0 0.0
    %2856 = vmatpush1.msra.mxu0 %v155
    %2857 = vmatprep.subr.mxu0 0.0
    %2858 = vmatpush1.msra.mxu0 %v156
    %2859 = vmatprep.subr.mxu0 0.0
    %2860 = vmatpush1.msra.mxu0 %v157
    %2861 = vmatprep.subr.mxu0 0.0
    %2862 = vmatpush1.msra.mxu0 0.0
    %2863 = vmatprep.subr.mxu0 0.0
    %2864 = vmatpush1.msra.mxu0 0.0
    %2865 = vmatprep.subr.mxu0 0.0
    %2866 = vmatpush1.msra.mxu0 0.0
    %2867 = vmatprep.subr.mxu0 0.0
    %2868 = vmatpush1.msra.mxu0 0.0
    %2869 = vmatprep.subr.mxu0 0.0
    %2870 = vmatpush1.msra.mxu0 0.0
    %2871 = vmatprep.subr.mxu0 0.0
    %2872 = vmatpush1.msra.mxu0 0.0
    %2873 = vmatprep.subr.mxu0 0.0
    %2874 = vmatpush1.msra.mxu0 0.0
    %2875 = vmatprep.subr.mxu0 0.0
    %2876 = vmatpush1.msra.mxu0 0.0
    %2877 = vmatprep.subr.mxu0 0.0
    %2878 = vmatpush1.msra.mxu0 0.0
    %2879 = vmatprep.subr.mxu0 0.0
    %2880 = vmatpush1.msra.mxu0 0.0
    %2881 = vmatprep.subr.mxu0 0.0
    %2882 = vmatpush1.msra.mxu0 0.0
    %2883 = vmatprep.subr.mxu0 0.0
    %2884 = vmatpush1.msra.mxu0 0.0
    %2885 = vmatprep.subr.mxu0 0.0
    %2886 = vmatpush1.msra.mxu0 0.0
    %2887 = vmatprep.subr.mxu0 0.0
    %2888 = vmatpush1.msra.mxu0 0.0
    %2889 = vmatprep.subr.mxu0 0.0
    %2890 = vmatpush1.msra.mxu0 0.0
    %2891 = vmatprep.subr.mxu0 0.0
    %2892 = vmatpush1.msra.mxu0 0.0
    %2893 = vmatprep.subr.mxu0 0.0
    %2894 = vmatpush1.msra.mxu0 0.0
    %2895 = vmatprep.subr.mxu0 0.0
    %2896 = vmatpush1.msra.mxu0 0.0
    %2897 = vmatprep.subr.mxu0 0.0
    %2898 = vmatpush1.msra.mxu0 0.0
    %2899 = vmatprep.subr.mxu0 0.0
    %2900 = vmatpush1.msra.mxu0 0.0
    %2901 = vmatprep.subr.mxu0 0.0
    %2902 = vmatpush1.msra.mxu0 0.0
    %2903 = vmatprep.subr.mxu0 0.0
    %2904 = vmatpush1.msra.mxu0 0.0
    %2905 = vmatprep.subr.mxu0 0.0
    %2906 = vmatpush1.msra.mxu0 0.0
    %2907 = vmatprep.subr.mxu0 0.0
    %2908 = vmatpush1.msra.mxu0 0.0
    %2909 = vmatprep.subr.mxu0 0.0
    %2910 = vmatpush1.msra.mxu0 0.0
    %2911 = vmatprep.subr.mxu0 0.0
    %2912 = vmatpush1.msra.mxu0 0.0
    %2913 = vmatprep.subr.mxu0 0.0
    %2914 = vmatpush1.msra.mxu0 0.0
    %2915 = vmatprep.subr.mxu0 0.0
    %2916 = vmatpush1.msra.mxu0 0.0
    %2917 = vmatprep.mubr.f32.mxu0 0.0
    %2918 = vmatmul.mubr.f32.gmra.mrb[0].mxu0 %v2851
    %v2919 = vpop.f32.mrb[0].mxu0
    %v2920 = vadd.f32 %v2845, %v2919
    %v2921 = vpop.f32.mrb[0].mxu0
    %2922 = vdwg.mxu0
    %v2923 = vadd.f32 %v2920, %v492
    %v2924 = vxor.u32 %v2923, 2147483648
    %v2925 = vmul.f32 %v2924, 1.442695
    %v2926 = vpow.pop %v2925
    %v2927 = vadd.f32 %v2926, 1.0
    %v2928 = vrcp.pop %v2927
    %v2929 = vmul.f32 1.0, %v2928
    %v2930 = vtanh.pop %v2923
    %v2931 = vmul.f32 %v2929, %v2594
    %2933 = vrot.lane.b32.xlu0 %v2930, 64
    %v2934 = vpop.permute.xlu0 %2933
    %v2936 = vmul.f32 %v2929, %v2934
    %2938 = vrot.lane.b32.xlu0 %v2936, 32
    %v2939 = vpop.permute.xlu0 %2938
    %v2941 = vadd.f32 %v2931, %v2939
    %v2942 = vtanh.pop %v2941
    %2944 = vrot.lane.b32.xlu0 %v2942, 64
    %v2945 = vpop.permute.xlu0 %2944
    %v2947 = vmul.f32 %v2929, %v2945
    %2949 = vrot.lane.b32.xlu0 %v2947, 32
    %v2950 = vpop.permute.xlu0 %2949
    %s2952 = scalar_lea.vmem [#allocation3], 14
    %2953 = vst.msk [vmem:[%s2952] sm:$0x3] %vm523, %v2950
    %v2954 = vld [vmem:[%s7] sm:$0xff]
    %v2955 = vld [vmem:[%s7 + $0x8] sm:$0xff]
    %v2956 = vld [vmem:[%s7 + $0x10] sm:$0xff]
    %v2957 = vld [vmem:[%s7 + $0x18] sm:$0xff]
    %v2958 = vld [vmem:[#allocation9] sm:$0x1]
    %v2959 = vld [vmem:[#allocation3] sm:$0x3]
    %v2962 = vunpack.c.l.s4 1966171168
    %v2963 = vunpack.c.0.s8 %v2962
    %v2964 = vlaneseq
    %v2965 = vshrl.u32 %v2964, 7
    %v2966 = vsub.s32 %v2963, %v2965
    %v2967 = vrot.slane %v2959, %v2966
    %v2968 = vcombine.high %v2967, %v2967
    %v2970 = vunpack.c.l.s4 1966171168
    %v2971 = vunpack.c.0.s8 %v2970
    %v2972 = vlaneseq
    %v2973 = vshrl.u32 %v2972, 7
    %v2974 = vsub.s32 %v2971, %v2973
    %v2975 = vrot.slane %v2967, %v2974
    %v2977 = vunpack.c.l.s4 1966171168
    %v2978 = vunpack.c.0.s8 %v2977
    %v2979 = vlaneseq
    %v2980 = vshrl.u32 %v2979, 7
    %v2981 = vsub.s32 %v2978, %v2980
    %v2982 = vrot.slane %v2968, %v2981
    %vm2985 = vcmask 253952
    %2986 = vst.msk [vmem:[#allocation10] sm:$0x1] %vm2985, %v2975
    %2987 = vst.msk [vmem:[#allocation10 + $0x8] sm:$0x1] %vm2985, %v2982
    %v2989 = vlaneseq
    %v2990 = vshrl.u32 %v2989, 7
    %v2991 = vsub.s32 0, %v2990
    %v2992 = vrot.slane %v2958, %v2991
    %v2994 = vsel %vm164, %v2959, 0
    %2996 = vmatprep.subr.mxu0 0.0
    %2997 = vmatpush1.msra.mxu0 %v2954
    %2998 = vmatprep.subr.mxu0 0.0
    %2999 = vmatpush1.msra.mxu0 %v2955
    %3000 = vmatprep.subr.mxu0 0.0
    %3001 = vmatpush1.msra.mxu0 %v2956
    %3002 = vmatprep.subr.mxu0 0.0
    %3003 = vmatpush1.msra.mxu0 %v2957
    %3004 = vmatprep.subr.mxu0 0.0
    %3005 = vmatpush1.msra.mxu0 0.0
    %3006 = vmatprep.subr.mxu0 0.0
    %3007 = vmatpush1.msra.mxu0 0.0
    %3008 = vmatprep.subr.mxu0 0.0
    %3009 = vmatpush1.msra.mxu0 0.0
    %3010 = vmatprep.subr.mxu0 0.0
    %3011 = vmatpush1.msra.mxu0 0.0
    %3012 = vmatprep.subr.mxu0 0.0
    %3013 = vmatpush1.msra.mxu0 0.0
    %3014 = vmatprep.subr.mxu0 0.0
    %3015 = vmatpush1.msra.mxu0 0.0
    %3016 = vmatprep.subr.mxu0 0.0
    %3017 = vmatpush1.msra.mxu0 0.0
    %3018 = vmatprep.subr.mxu0 0.0
    %3019 = vmatpush1.msra.mxu0 0.0
    %3020 = vmatprep.subr.mxu0 0.0
    %3021 = vmatpush1.msra.mxu0 0.0
    %3022 = vmatprep.subr.mxu0 0.0
    %3023 = vmatpush1.msra.mxu0 0.0
    %3024 = vmatprep.subr.mxu0 0.0
    %3025 = vmatpush1.msra.mxu0 0.0
    %3026 = vmatprep.subr.mxu0 0.0
    %3027 = vmatpush1.msra.mxu0 0.0
    %3028 = vmatprep.subr.mxu0 0.0
    %3029 = vmatpush1.msra.mxu0 0.0
    %3030 = vmatprep.subr.mxu0 0.0
    %3031 = vmatpush1.msra.mxu0 0.0
    %3032 = vmatprep.subr.mxu0 0.0
    %3033 = vmatpush1.msra.mxu0 0.0
    %3034 = vmatprep.subr.mxu0 0.0
    %3035 = vmatpush1.msra.mxu0 0.0
    %3036 = vmatprep.subr.mxu0 0.0
    %3037 = vmatpush1.msra.mxu0 0.0
    %3038 = vmatprep.subr.mxu0 0.0
    %3039 = vmatpush1.msra.mxu0 0.0
    %3040 = vmatprep.subr.mxu0 0.0
    %3041 = vmatpush1.msra.mxu0 0.0
    %3042 = vmatprep.subr.mxu0 0.0
    %3043 = vmatpush1.msra.mxu0 0.0
    %3044 = vmatprep.subr.mxu0 0.0
    %3045 = vmatpush1.msra.mxu0 0.0
    %3046 = vmatprep.subr.mxu0 0.0
    %3047 = vmatpush1.msra.mxu0 0.0
    %3048 = vmatprep.subr.mxu0 0.0
    %3049 = vmatpush1.msra.mxu0 0.0
    %3050 = vmatprep.subr.mxu0 0.0
    %3051 = vmatpush1.msra.mxu0 0.0
    %3052 = vmatprep.subr.mxu0 0.0
    %3053 = vmatpush1.msra.mxu0 0.0
    %3054 = vmatprep.subr.mxu0 0.0
    %3055 = vmatpush1.msra.mxu0 0.0
    %3056 = vmatprep.subr.mxu0 0.0
    %3057 = vmatpush1.msra.mxu0 0.0
    %3058 = vmatprep.subr.mxu0 0.0
    %3059 = vmatpush1.msra.mxu0 0.0
    %3060 = vmatprep.mubr.f32.mxu0 0.0
    %3061 = vmatmul.mubr.f32.gmra.mrb[0].mxu0 %v2994
    %v3062 = vpop.f32.mrb[0].mxu0
    %v3063 = vadd.f32 %v2992, %v3062
    %v3064 = vpop.f32.mrb[0].mxu0
    %3065 = vdwg.mxu0
    %v3068 = vunpack.c.l.s4 1966171168
    %v3069 = vunpack.c.0.s8 %v3068
    %v3070 = vlaneseq
    %v3071 = vshrl.u32 %v3070, 7
    %v3072 = vsub.s32 %v3069, %v3071
    %v3073 = vrot.slane %v3063, %v3072
    %v3074 = vcombine.high %v3073, %v3073
    %v3076 = vunpack.c.l.s4 1966171168
    %v3077 = vunpack.c.0.s8 %v3076
    %v3078 = vlaneseq
    %v3079 = vshrl.u32 %v3078, 7
    %v3080 = vsub.s32 %v3077, %v3079
    %v3081 = vrot.slane %v3073, %v3080
    %v3083 = vunpack.c.l.s4 1966171168
    %v3084 = vunpack.c.0.s8 %v3083
    %v3085 = vlaneseq
    %v3086 = vshrl.u32 %v3085, 7
    %v3087 = vsub.s32 %v3084, %v3086
    %v3088 = vrot.slane %v3074, %v3087
    %vm3091 = vcmask 8192
    %3092 = vst.msk [vmem:[%s9] sm:$0x1] %vm3091, %v3081
    %3093 = vst.msk [vmem:[%s9 + $0x8] sm:$0x1] %vm3091, %v3088
    %v3094 = vld [vmem:[%s870] sm:$0x3]
    %v3097 = vunpack.c.l.s4 1966171168
    %v3098 = vunpack.c.0.s8 %v3097
    %v3099 = vlaneseq
    %v3100 = vshrl.u32 %v3099, 7
    %v3101 = vsub.s32 %v3098, %v3100
    %v3102 = vrot.slane %v3094, %v3101
    %v3103 = vcombine.high %v3102, %v3102
    %v3105 = vunpack.c.l.s4 1966171168
    %v3106 = vunpack.c.0.s8 %v3105
    %v3107 = vlaneseq
    %v3108 = vshrl.u32 %v3107, 7
    %v3109 = vsub.s32 %v3106, %v3108
    %v3110 = vrot.slane %v3102, %v3109
    %v3112 = vunpack.c.l.s4 1966171168
    %v3113 = vunpack.c.0.s8 %v3112
    %v3114 = vlaneseq
    %v3115 = vshrl.u32 %v3114, 7
    %v3116 = vsub.s32 %v3113, %v3115
    %v3117 = vrot.slane %v3103, %v3116
    %3120 = vst.msk [vmem:[#allocation10 + $0x1] sm:$0x1] %vm2985, %v3110
    %3121 = vst.msk [vmem:[#allocation10 + $0x9] sm:$0x1] %vm2985, %v3117
    %v3122 = vsel %vm164, %v3094, 0
    %3124 = vmatprep.subr.mxu0 0.0
    %3125 = vmatpush1.msra.mxu0 %v2954
    %3126 = vmatprep.subr.mxu0 0.0
    %3127 = vmatpush1.msra.mxu0 %v2955
    %3128 = vmatprep.subr.mxu0 0.0
    %3129 = vmatpush1.msra.mxu0 %v2956
    %3130 = vmatprep.subr.mxu0 0.0
    %3131 = vmatpush1.msra.mxu0 %v2957
    %3132 = vmatprep.subr.mxu0 0.0
    %3133 = vmatpush1.msra.mxu0 0.0
    %3134 = vmatprep.subr.mxu0 0.0
    %3135 = vmatpush1.msra.mxu0 0.0
    %3136 = vmatprep.subr.mxu0 0.0
    %3137 = vmatpush1.msra.mxu0 0.0
    %3138 = vmatprep.subr.mxu0 0.0
    %3139 = vmatpush1.msra.mxu0 0.0
    %3140 = vmatprep.subr.mxu0 0.0
    %3141 = vmatpush1.msra.mxu0 0.0
    %3142 = vmatprep.subr.mxu0 0.0
    %3143 = vmatpush1.msra.mxu0 0.0
    %3144 = vmatprep.subr.mxu0 0.0
    %3145 = vmatpush1.msra.mxu0 0.0
    %3146 = vmatprep.subr.mxu0 0.0
    %3147 = vmatpush1.msra.mxu0 0.0
    %3148 = vmatprep.subr.mxu0 0.0
    %3149 = vmatpush1.msra.mxu0 0.0
    %3150 = vmatprep.subr.mxu0 0.0
    %3151 = vmatpush1.msra.mxu0 0.0
    %3152 = vmatprep.subr.mxu0 0.0
    %3153 = vmatpush1.msra.mxu0 0.0
    %3154 = vmatprep.subr.mxu0 0.0
    %3155 = vmatpush1.msra.mxu0 0.0
    %3156 = vmatprep.subr.mxu0 0.0
    %3157 = vmatpush1.msra.mxu0 0.0
    %3158 = vmatprep.subr.mxu0 0.0
    %3159 = vmatpush1.msra.mxu0 0.0
    %3160 = vmatprep.subr.mxu0 0.0
    %3161 = vmatpush1.msra.mxu0 0.0
    %3162 = vmatprep.subr.mxu0 0.0
    %3163 = vmatpush1.msra.mxu0 0.0
    %3164 = vmatprep.subr.mxu0 0.0
    %3165 = vmatpush1.msra.mxu0 0.0
    %3166 = vmatprep.subr.mxu0 0.0
    %3167 = vmatpush1.msra.mxu0 0.0
    %3168 = vmatprep.subr.mxu0 0.0
    %3169 = vmatpush1.msra.mxu0 0.0
    %3170 = vmatprep.subr.mxu0 0.0
    %3171 = vmatpush1.msra.mxu0 0.0
    %3172 = vmatprep.subr.mxu0 0.0
    %3173 = vmatpush1.msra.mxu0 0.0
    %3174 = vmatprep.subr.mxu0 0.0
    %3175 = vmatpush1.msra.mxu0 0.0
    %3176 = vmatprep.subr.mxu0 0.0
    %3177 = vmatpush1.msra.mxu0 0.0
    %3178 = vmatprep.subr.mxu0 0.0
    %3179 = vmatpush1.msra.mxu0 0.0
    %3180 = vmatprep.subr.mxu0 0.0
    %3181 = vmatpush1.msra.mxu0 0.0
    %3182 = vmatprep.subr.mxu0 0.0
    %3183 = vmatpush1.msra.mxu0 0.0
    %3184 = vmatprep.subr.mxu0 0.0
    %3185 = vmatpush1.msra.mxu0 0.0
    %3186 = vmatprep.subr.mxu0 0.0
    %3187 = vmatpush1.msra.mxu0 0.0
    %3188 = vmatprep.mubr.f32.mxu0 0.0
    %3189 = vmatmul.mubr.f32.gmra.mrb[0].mxu0 %v3122
    %v3190 = vpop.f32.mrb[0].mxu0
    %v3191 = vadd.f32 %v2992, %v3190
    %v3192 = vpop.f32.mrb[0].mxu0
    %3193 = vdwg.mxu0
    %v3196 = vunpack.c.l.s4 1966171168
    %v3197 = vunpack.c.0.s8 %v3196
    %v3198 = vlaneseq
    %v3199 = vshrl.u32 %v3198, 7
    %v3200 = vsub.s32 %v3197, %v3199
    %v3201 = vrot.slane %v3191, %v3200
    %v3202 = vcombine.high %v3201, %v3201
    %v3204 = vunpack.c.l.s4 1966171168
    %v3205 = vunpack.c.0.s8 %v3204
    %v3206 = vlaneseq
    %v3207 = vshrl.u32 %v3206, 7
    %v3208 = vsub.s32 %v3205, %v3207
    %v3209 = vrot.slane %v3201, %v3208
    %v3211 = vunpack.c.l.s4 1966171168
    %v3212 = vunpack.c.0.s8 %v3211
    %v3213 = vlaneseq
    %v3214 = vshrl.u32 %v3213, 7
    %v3215 = vsub.s32 %v3212, %v3214
    %v3216 = vrot.slane %v3202, %v3215
    %3219 = vst.msk [vmem:[%s9 + $0x1] sm:$0x1] %vm3091, %v3209
    %3220 = vst.msk [vmem:[%s9 + $0x9] sm:$0x1] %vm3091, %v3216
    %v3221 = vld [vmem:[%s1217] sm:$0x3]
    %v3224 = vunpack.c.l.s4 1966171168
    %v3225 = vunpack.c.0.s8 %v3224
    %v3226 = vlaneseq
    %v3227 = vshrl.u32 %v3226, 7
    %v3228 = vsub.s32 %v3225, %v3227
    %v3229 = vrot.slane %v3221, %v3228
    %v3230 = vcombine.high %v3229, %v3229
    %v3232 = vunpack.c.l.s4 1966171168
    %v3233 = vunpack.c.0.s8 %v3232
    %v3234 = vlaneseq
    %v3235 = vshrl.u32 %v3234, 7
    %v3236 = vsub.s32 %v3233, %v3235
    %v3237 = vrot.slane %v3229, %v3236
    %v3239 = vunpack.c.l.s4 1966171168
    %v3240 = vunpack.c.0.s8 %v3239
    %v3241 = vlaneseq
    %v3242 = vshrl.u32 %v3241, 7
    %v3243 = vsub.s32 %v3240, %v3242
    %v3244 = vrot.slane %v3230, %v3243
    %3247 = vst.msk [vmem:[#allocation10 + $0x2] sm:$0x1] %vm2985, %v3237
    %3248 = vst.msk [vmem:[#allocation10 + $0xa] sm:$0x1] %vm2985, %v3244
    %v3249 = vsel %vm164, %v3221, 0
    %3251 = vmatprep.subr.mxu0 0.0
    %3252 = vmatpush1.msra.mxu0 %v2954
    %3253 = vmatprep.subr.mxu0 0.0
    %3254 = vmatpush1.msra.mxu0 %v2955
    %3255 = vmatprep.subr.mxu0 0.0
    %3256 = vmatpush1.msra.mxu0 %v2956
    %3257 = vmatprep.subr.mxu0 0.0
    %3258 = vmatpush1.msra.mxu0 %v2957
    %3259 = vmatprep.subr.mxu0 0.0
    %3260 = vmatpush1.msra.mxu0 0.0
    %3261 = vmatprep.subr.mxu0 0.0
    %3262 = vmatpush1.msra.mxu0 0.0
    %3263 = vmatprep.subr.mxu0 0.0
    %3264 = vmatpush1.msra.mxu0 0.0
    %3265 = vmatprep.subr.mxu0 0.0
    %3266 = vmatpush1.msra.mxu0 0.0
    %3267 = vmatprep.subr.mxu0 0.0
    %3268 = vmatpush1.msra.mxu0 0.0
    %3269 = vmatprep.subr.mxu0 0.0
    %3270 = vmatpush1.msra.mxu0 0.0
    %3271 = vmatprep.subr.mxu0 0.0
    %3272 = vmatpush1.msra.mxu0 0.0
    %3273 = vmatprep.subr.mxu0 0.0
    %3274 = vmatpush1.msra.mxu0 0.0
    %3275 = vmatprep.subr.mxu0 0.0
    %3276 = vmatpush1.msra.mxu0 0.0
    %3277 = vmatprep.subr.mxu0 0.0
    %3278 = vmatpush1.msra.mxu0 0.0
    %3279 = vmatprep.subr.mxu0 0.0
    %3280 = vmatpush1.msra.mxu0 0.0
    %3281 = vmatprep.subr.mxu0 0.0
    %3282 = vmatpush1.msra.mxu0 0.0
    %3283 = vmatprep.subr.mxu0 0.0
    %3284 = vmatpush1.msra.mxu0 0.0
    %3285 = vmatprep.subr.mxu0 0.0
    %3286 = vmatpush1.msra.mxu0 0.0
    %3287 = vmatprep.subr.mxu0 0.0
    %3288 = vmatpush1.msra.mxu0 0.0
    %3289 = vmatprep.subr.mxu0 0.0
    %3290 = vmatpush1.msra.mxu0 0.0
    %3291 = vmatprep.subr.mxu0 0.0
    %3292 = vmatpush1.msra.mxu0 0.0
    %3293 = vmatprep.subr.mxu0 0.0
    %3294 = vmatpush1.msra.mxu0 0.0
    %3295 = vmatprep.subr.mxu0 0.0
    %3296 = vmatpush1.msra.mxu0 0.0
    %3297 = vmatprep.subr.mxu0 0.0
    %3298 = vmatpush1.msra.mxu0 0.0
    %3299 = vmatprep.subr.mxu0 0.0
    %3300 = vmatpush1.msra.mxu0 0.0
    %3301 = vmatprep.subr.mxu0 0.0
    %3302 = vmatpush1.msra.mxu0 0.0
    %3303 = vmatprep.subr.mxu0 0.0
    %3304 = vmatpush1.msra.mxu0 0.0
    %3305 = vmatprep.subr.mxu0 0.0
    %3306 = vmatpush1.msra.mxu0 0.0
    %3307 = vmatprep.subr.mxu0 0.0
    %3308 = vmatpush1.msra.mxu0 0.0
    %3309 = vmatprep.subr.mxu0 0.0
    %3310 = vmatpush1.msra.mxu0 0.0
    %3311 = vmatprep.subr.mxu0 0.0
    %3312 = vmatpush1.msra.mxu0 0.0
    %3313 = vmatprep.subr.mxu0 0.0
    %3314 = vmatpush1.msra.mxu0 0.0
    %3315 = vmatprep.mubr.f32.mxu0 0.0
    %3316 = vmatmul.mubr.f32.gmra.mrb[0].mxu0 %v3249
    %v3317 = vpop.f32.mrb[0].mxu0
    %v3318 = vadd.f32 %v2992, %v3317
    %v3319 = vpop.f32.mrb[0].mxu0
    %3320 = vdwg.mxu0
    %v3323 = vunpack.c.l.s4 1966171168
    %v3324 = vunpack.c.0.s8 %v3323
    %v3325 = vlaneseq
    %v3326 = vshrl.u32 %v3325, 7
    %v3327 = vsub.s32 %v3324, %v3326
    %v3328 = vrot.slane %v3318, %v3327
    %v3329 = vcombine.high %v3328, %v3328
    %v3331 = vunpack.c.l.s4 1966171168
    %v3332 = vunpack.c.0.s8 %v3331
    %v3333 = vlaneseq
    %v3334 = vshrl.u32 %v3333, 7
    %v3335 = vsub.s32 %v3332, %v3334
    %v3336 = vrot.slane %v3328, %v3335
    %v3338 = vunpack.c.l.s4 1966171168
    %v3339 = vunpack.c.0.s8 %v3338
    %v3340 = vlaneseq
    %v3341 = vshrl.u32 %v3340, 7
    %v3342 = vsub.s32 %v3339, %v3341
    %v3343 = vrot.slane %v3329, %v3342
    %3346 = vst.msk [vmem:[%s9 + $0x2] sm:$0x1] %vm3091, %v3336
    %3347 = vst.msk [vmem:[%s9 + $0xa] sm:$0x1] %vm3091, %v3343
    %v3348 = vld [vmem:[%s1564] sm:$0x3]
    %v3351 = vunpack.c.l.s4 1966171168
    %v3352 = vunpack.c.0.s8 %v3351
    %v3353 = vlaneseq
    %v3354 = vshrl.u32 %v3353, 7
    %v3355 = vsub.s32 %v3352, %v3354
    %v3356 = vrot.slane %v3348, %v3355
    %v3357 = vcombine.high %v3356, %v3356
    %v3359 = vunpack.c.l.s4 1966171168
    %v3360 = vunpack.c.0.s8 %v3359
    %v3361 = vlaneseq
    %v3362 = vshrl.u32 %v3361, 7
    %v3363 = vsub.s32 %v3360, %v3362
    %v3364 = vrot.slane %v3356, %v3363
    %v3366 = vunpack.c.l.s4 1966171168
    %v3367 = vunpack.c.0.s8 %v3366
    %v3368 = vlaneseq
    %v3369 = vshrl.u32 %v3368, 7
    %v3370 = vsub.s32 %v3367, %v3369
    %v3371 = vrot.slane %v3357, %v3370
    %3374 = vst.msk [vmem:[#allocation10 + $0x3] sm:$0x1] %vm2985, %v3364
    %3375 = vst.msk [vmem:[#allocation10 + $0xb] sm:$0x1] %vm2985, %v3371
    %v3376 = vsel %vm164, %v3348, 0
    %3378 = vmatprep.subr.mxu0 0.0
    %3379 = vmatpush1.msra.mxu0 %v2954
    %3380 = vmatprep.subr.mxu0 0.0
    %3381 = vmatpush1.msra.mxu0 %v2955
    %3382 = vmatprep.subr.mxu0 0.0
    %3383 = vmatpush1.msra.mxu0 %v2956
    %3384 = vmatprep.subr.mxu0 0.0
    %3385 = vmatpush1.msra.mxu0 %v2957
    %3386 = vmatprep.subr.mxu0 0.0
    %3387 = vmatpush1.msra.mxu0 0.0
    %3388 = vmatprep.subr.mxu0 0.0
    %3389 = vmatpush1.msra.mxu0 0.0
    %3390 = vmatprep.subr.mxu0 0.0
    %3391 = vmatpush1.msra.mxu0 0.0
    %3392 = vmatprep.subr.mxu0 0.0
    %3393 = vmatpush1.msra.mxu0 0.0
    %3394 = vmatprep.subr.mxu0 0.0
    %3395 = vmatpush1.msra.mxu0 0.0
    %3396 = vmatprep.subr.mxu0 0.0
    %3397 = vmatpush1.msra.mxu0 0.0
    %3398 = vmatprep.subr.mxu0 0.0
    %3399 = vmatpush1.msra.mxu0 0.0
    %3400 = vmatprep.subr.mxu0 0.0
    %3401 = vmatpush1.msra.mxu0 0.0
    %3402 = vmatprep.subr.mxu0 0.0
    %3403 = vmatpush1.msra.mxu0 0.0
    %3404 = vmatprep.subr.mxu0 0.0
    %3405 = vmatpush1.msra.mxu0 0.0
    %3406 = vmatprep.subr.mxu0 0.0
    %3407 = vmatpush1.msra.mxu0 0.0
    %3408 = vmatprep.subr.mxu0 0.0
    %3409 = vmatpush1.msra.mxu0 0.0
    %3410 = vmatprep.subr.mxu0 0.0
    %3411 = vmatpush1.msra.mxu0 0.0
    %3412 = vmatprep.subr.mxu0 0.0
    %3413 = vmatpush1.msra.mxu0 0.0
    %3414 = vmatprep.subr.mxu0 0.0
    %3415 = vmatpush1.msra.mxu0 0.0
    %3416 = vmatprep.subr.mxu0 0.0
    %3417 = vmatpush1.msra.mxu0 0.0
    %3418 = vmatprep.subr.mxu0 0.0
    %3419 = vmatpush1.msra.mxu0 0.0
    %3420 = vmatprep.subr.mxu0 0.0
    %3421 = vmatpush1.msra.mxu0 0.0
    %3422 = vmatprep.subr.mxu0 0.0
    %3423 = vmatpush1.msra.mxu0 0.0
    %3424 = vmatprep.subr.mxu0 0.0
    %3425 = vmatpush1.msra.mxu0 0.0
    %3426 = vmatprep.subr.mxu0 0.0
    %3427 = vmatpush1.msra.mxu0 0.0
    %3428 = vmatprep.subr.mxu0 0.0
    %3429 = vmatpush1.msra.mxu0 0.0
    %3430 = vmatprep.subr.mxu0 0.0
    %3431 = vmatpush1.msra.mxu0 0.0
    %3432 = vmatprep.subr.mxu0 0.0
    %3433 = vmatpush1.msra.mxu0 0.0
    %3434 = vmatprep.subr.mxu0 0.0
    %3435 = vmatpush1.msra.mxu0 0.0
    %3436 = vmatprep.subr.mxu0 0.0
    %3437 = vmatpush1.msra.mxu0 0.0
    %3438 = vmatprep.subr.mxu0 0.0
    %3439 = vmatpush1.msra.mxu0 0.0
    %3440 = vmatprep.subr.mxu0 0.0
    %3441 = vmatpush1.msra.mxu0 0.0
    %3442 = vmatprep.mubr.f32.mxu0 0.0
    %3443 = vmatmul.mubr.f32.gmra.mrb[0].mxu0 %v3376
    %v3444 = vpop.f32.mrb[0].mxu0
    %v3445 = vadd.f32 %v2992, %v3444
    %v3446 = vpop.f32.mrb[0].mxu0
    %3447 = vdwg.mxu0
    %v3450 = vunpack.c.l.s4 1966171168
    %v3451 = vunpack.c.0.s8 %v3450
    %v3452 = vlaneseq
    %v3453 = vshrl.u32 %v3452, 7
    %v3454 = vsub.s32 %v3451, %v3453
    %v3455 = vrot.slane %v3445, %v3454
    %v3456 = vcombine.high %v3455, %v3455
    %v3458 = vunpack.c.l.s4 1966171168
    %v3459 = vunpack.c.0.s8 %v3458
    %v3460 = vlaneseq
    %v3461 = vshrl.u32 %v3460, 7
    %v3462 = vsub.s32 %v3459, %v3461
    %v3463 = vrot.slane %v3455, %v3462
    %v3465 = vunpack.c.l.s4 1966171168
    %v3466 = vunpack.c.0.s8 %v3465
    %v3467 = vlaneseq
    %v3468 = vshrl.u32 %v3467, 7
    %v3469 = vsub.s32 %v3466, %v3468
    %v3470 = vrot.slane %v3456, %v3469
    %3473 = vst.msk [vmem:[%s9 + $0x3] sm:$0x1] %vm3091, %v3463
    %3474 = vst.msk [vmem:[%s9 + $0xb] sm:$0x1] %vm3091, %v3470
    %v3475 = vld [vmem:[%s1911] sm:$0x3]
    %v3478 = vunpack.c.l.s4 1966171168
    %v3479 = vunpack.c.0.s8 %v3478
    %v3480 = vlaneseq
    %v3481 = vshrl.u32 %v3480, 7
    %v3482 = vsub.s32 %v3479, %v3481
    %v3483 = vrot.slane %v3475, %v3482
    %v3484 = vcombine.high %v3483, %v3483
    %v3486 = vunpack.c.l.s4 1966171168
    %v3487 = vunpack.c.0.s8 %v3486
    %v3488 = vlaneseq
    %v3489 = vshrl.u32 %v3488, 7
    %v3490 = vsub.s32 %v3487, %v3489
    %v3491 = vrot.slane %v3483, %v3490
    %v3493 = vunpack.c.l.s4 1966171168
    %v3494 = vunpack.c.0.s8 %v3493
    %v3495 = vlaneseq
    %v3496 = vshrl.u32 %v3495, 7
    %v3497 = vsub.s32 %v3494, %v3496
    %v3498 = vrot.slane %v3484, %v3497
    %3501 = vst.msk [vmem:[#allocation10 + $0x4] sm:$0x1] %vm2985, %v3491
    %3502 = vst.msk [vmem:[#allocation10 + $0xc] sm:$0x1] %vm2985, %v3498
    %v3503 = vsel %vm164, %v3475, 0
    %3505 = vmatprep.subr.mxu0 0.0
    %3506 = vmatpush1.msra.mxu0 %v2954
    %3507 = vmatprep.subr.mxu0 0.0
    %3508 = vmatpush1.msra.mxu0 %v2955
    %3509 = vmatprep.subr.mxu0 0.0
    %3510 = vmatpush1.msra.mxu0 %v2956
    %3511 = vmatprep.subr.mxu0 0.0
    %3512 = vmatpush1.msra.mxu0 %v2957
    %3513 = vmatprep.subr.mxu0 0.0
    %3514 = vmatpush1.msra.mxu0 0.0
    %3515 = vmatprep.subr.mxu0 0.0
    %3516 = vmatpush1.msra.mxu0 0.0
    %3517 = vmatprep.subr.mxu0 0.0
    %3518 = vmatpush1.msra.mxu0 0.0
    %3519 = vmatprep.subr.mxu0 0.0
    %3520 = vmatpush1.msra.mxu0 0.0
    %3521 = vmatprep.subr.mxu0 0.0
    %3522 = vmatpush1.msra.mxu0 0.0
    %3523 = vmatprep.subr.mxu0 0.0
    %3524 = vmatpush1.msra.mxu0 0.0
    %3525 = vmatprep.subr.mxu0 0.0
    %3526 = vmatpush1.msra.mxu0 0.0
    %3527 = vmatprep.subr.mxu0 0.0
    %3528 = vmatpush1.msra.mxu0 0.0
    %3529 = vmatprep.subr.mxu0 0.0
    %3530 = vmatpush1.msra.mxu0 0.0
    %3531 = vmatprep.subr.mxu0 0.0
    %3532 = vmatpush1.msra.mxu0 0.0
    %3533 = vmatprep.subr.mxu0 0.0
    %3534 = vmatpush1.msra.mxu0 0.0
    %3535 = vmatprep.subr.mxu0 0.0
    %3536 = vmatpush1.msra.mxu0 0.0
    %3537 = vmatprep.subr.mxu0 0.0
    %3538 = vmatpush1.msra.mxu0 0.0
    %3539 = vmatprep.subr.mxu0 0.0
    %3540 = vmatpush1.msra.mxu0 0.0
    %3541 = vmatprep.subr.mxu0 0.0
    %3542 = vmatpush1.msra.mxu0 0.0
    %3543 = vmatprep.subr.mxu0 0.0
    %3544 = vmatpush1.msra.mxu0 0.0
    %3545 = vmatprep.subr.mxu0 0.0
    %3546 = vmatpush1.msra.mxu0 0.0
    %3547 = vmatprep.subr.mxu0 0.0
    %3548 = vmatpush1.msra.mxu0 0.0
    %3549 = vmatprep.subr.mxu0 0.0
    %3550 = vmatpush1.msra.mxu0 0.0
    %3551 = vmatprep.subr.mxu0 0.0
    %3552 = vmatpush1.msra.mxu0 0.0
    %3553 = vmatprep.subr.mxu0 0.0
    %3554 = vmatpush1.msra.mxu0 0.0
    %3555 = vmatprep.subr.mxu0 0.0
    %3556 = vmatpush1.msra.mxu0 0.0
    %3557 = vmatprep.subr.mxu0 0.0
    %3558 = vmatpush1.msra.mxu0 0.0
    %3559 = vmatprep.subr.mxu0 0.0
    %3560 = vmatpush1.msra.mxu0 0.0
    %3561 = vmatprep.subr.mxu0 0.0
    %3562 = vmatpush1.msra.mxu0 0.0
    %3563 = vmatprep.subr.mxu0 0.0
    %3564 = vmatpush1.msra.mxu0 0.0
    %3565 = vmatprep.subr.mxu0 0.0
    %3566 = vmatpush1.msra.mxu0 0.0
    %3567 = vmatprep.subr.mxu0 0.0
    %3568 = vmatpush1.msra.mxu0 0.0
    %3569 = vmatprep.mubr.f32.mxu0 0.0
    %3570 = vmatmul.mubr.f32.gmra.mrb[0].mxu0 %v3503
    %v3571 = vpop.f32.mrb[0].mxu0
    %v3572 = vadd.f32 %v2992, %v3571
    %v3573 = vpop.f32.mrb[0].mxu0
    %3574 = vdwg.mxu0
    %v3577 = vunpack.c.l.s4 1966171168
    %v3578 = vunpack.c.0.s8 %v3577
    %v3579 = vlaneseq
    %v3580 = vshrl.u32 %v3579, 7
    %v3581 = vsub.s32 %v3578, %v3580
    %v3582 = vrot.slane %v3572, %v3581
    %v3583 = vcombine.high %v3582, %v3582
    %v3585 = vunpack.c.l.s4 1966171168
    %v3586 = vunpack.c.0.s8 %v3585
    %v3587 = vlaneseq
    %v3588 = vshrl.u32 %v3587, 7
    %v3589 = vsub.s32 %v3586, %v3588
    %v3590 = vrot.slane %v3582, %v3589
    %v3592 = vunpack.c.l.s4 1966171168
    %v3593 = vunpack.c.0.s8 %v3592
    %v3594 = vlaneseq
    %v3595 = vshrl.u32 %v3594, 7
    %v3596 = vsub.s32 %v3593, %v3595
    %v3597 = vrot.slane %v3583, %v3596
    %3600 = vst.msk [vmem:[%s9 + $0x4] sm:$0x1] %vm3091, %v3590
    %3601 = vst.msk [vmem:[%s9 + $0xc] sm:$0x1] %vm3091, %v3597
    %v3602 = vld [vmem:[%s2258] sm:$0x3]
    %v3605 = vunpack.c.l.s4 1966171168
    %v3606 = vunpack.c.0.s8 %v3605
    %v3607 = vlaneseq
    %v3608 = vshrl.u32 %v3607, 7
    %v3609 = vsub.s32 %v3606, %v3608
    %v3610 = vrot.slane %v3602, %v3609
    %v3611 = vcombine.high %v3610, %v3610
    %v3613 = vunpack.c.l.s4 1966171168
    %v3614 = vunpack.c.0.s8 %v3613
    %v3615 = vlaneseq
    %v3616 = vshrl.u32 %v3615, 7
    %v3617 = vsub.s32 %v3614, %v3616
    %v3618 = vrot.slane %v3610, %v3617
    %v3620 = vunpack.c.l.s4 1966171168
    %v3621 = vunpack.c.0.s8 %v3620
    %v3622 = vlaneseq
    %v3623 = vshrl.u32 %v3622, 7
    %v3624 = vsub.s32 %v3621, %v3623
    %v3625 = vrot.slane %v3611, %v3624
    %3628 = vst.msk [vmem:[#allocation10 + $0x5] sm:$0x1] %vm2985, %v3618
    %3629 = vst.msk [vmem:[#allocation10 + $0xd] sm:$0x1] %vm2985, %v3625
    %v3630 = vsel %vm164, %v3602, 0
    %3632 = vmatprep.subr.mxu0 0.0
    %3633 = vmatpush1.msra.mxu0 %v2954
    %3634 = vmatprep.subr.mxu0 0.0
    %3635 = vmatpush1.msra.mxu0 %v2955
    %3636 = vmatprep.subr.mxu0 0.0
    %3637 = vmatpush1.msra.mxu0 %v2956
    %3638 = vmatprep.subr.mxu0 0.0
    %3639 = vmatpush1.msra.mxu0 %v2957
    %3640 = vmatprep.subr.mxu0 0.0
    %3641 = vmatpush1.msra.mxu0 0.0
    %3642 = vmatprep.subr.mxu0 0.0
    %3643 = vmatpush1.msra.mxu0 0.0
    %3644 = vmatprep.subr.mxu0 0.0
    %3645 = vmatpush1.msra.mxu0 0.0
    %3646 = vmatprep.subr.mxu0 0.0
    %3647 = vmatpush1.msra.mxu0 0.0
    %3648 = vmatprep.subr.mxu0 0.0
    %3649 = vmatpush1.msra.mxu0 0.0
    %3650 = vmatprep.subr.mxu0 0.0
    %3651 = vmatpush1.msra.mxu0 0.0
    %3652 = vmatprep.subr.mxu0 0.0
    %3653 = vmatpush1.msra.mxu0 0.0
    %3654 = vmatprep.subr.mxu0 0.0
    %3655 = vmatpush1.msra.mxu0 0.0
    %3656 = vmatprep.subr.mxu0 0.0
    %3657 = vmatpush1.msra.mxu0 0.0
    %3658 = vmatprep.subr.mxu0 0.0
    %3659 = vmatpush1.msra.mxu0 0.0
    %3660 = vmatprep.subr.mxu0 0.0
    %3661 = vmatpush1.msra.mxu0 0.0
    %3662 = vmatprep.subr.mxu0 0.0
    %3663 = vmatpush1.msra.mxu0 0.0
    %3664 = vmatprep.subr.mxu0 0.0
    %3665 = vmatpush1.msra.mxu0 0.0
    %3666 = vmatprep.subr.mxu0 0.0
    %3667 = vmatpush1.msra.mxu0 0.0
    %3668 = vmatprep.subr.mxu0 0.0
    %3669 = vmatpush1.msra.mxu0 0.0
    %3670 = vmatprep.subr.mxu0 0.0
    %3671 = vmatpush1.msra.mxu0 0.0
    %3672 = vmatprep.subr.mxu0 0.0
    %3673 = vmatpush1.msra.mxu0 0.0
    %3674 = vmatprep.subr.mxu0 0.0
    %3675 = vmatpush1.msra.mxu0 0.0
    %3676 = vmatprep.subr.mxu0 0.0
    %3677 = vmatpush1.msra.mxu0 0.0
    %3678 = vmatprep.subr.mxu0 0.0
    %3679 = vmatpush1.msra.mxu0 0.0
    %3680 = vmatprep.subr.mxu0 0.0
    %3681 = vmatpush1.msra.mxu0 0.0
    %3682 = vmatprep.subr.mxu0 0.0
    %3683 = vmatpush1.msra.mxu0 0.0
    %3684 = vmatprep.subr.mxu0 0.0
    %3685 = vmatpush1.msra.mxu0 0.0
    %3686 = vmatprep.subr.mxu0 0.0
    %3687 = vmatpush1.msra.mxu0 0.0
    %3688 = vmatprep.subr.mxu0 0.0
    %3689 = vmatpush1.msra.mxu0 0.0
    %3690 = vmatprep.subr.mxu0 0.0
    %3691 = vmatpush1.msra.mxu0 0.0
    %3692 = vmatprep.subr.mxu0 0.0
    %3693 = vmatpush1.msra.mxu0 0.0
    %3694 = vmatprep.subr.mxu0 0.0
    %3695 = vmatpush1.msra.mxu0 0.0
    %3696 = vmatprep.mubr.f32.mxu0 0.0
    %3697 = vmatmul.mubr.f32.gmra.mrb[0].mxu0 %v3630
    %v3698 = vpop.f32.mrb[0].mxu0
    %v3699 = vadd.f32 %v2992, %v3698
    %v3700 = vpop.f32.mrb[0].mxu0
    %3701 = vdwg.mxu0
    %v3704 = vunpack.c.l.s4 1966171168
    %v3705 = vunpack.c.0.s8 %v3704
    %v3706 = vlaneseq
    %v3707 = vshrl.u32 %v3706, 7
    %v3708 = vsub.s32 %v3705, %v3707
    %v3709 = vrot.slane %v3699, %v3708
    %v3710 = vcombine.high %v3709, %v3709
    %v3712 = vunpack.c.l.s4 1966171168
    %v3713 = vunpack.c.0.s8 %v3712
    %v3714 = vlaneseq
    %v3715 = vshrl.u32 %v3714, 7
    %v3716 = vsub.s32 %v3713, %v3715
    %v3717 = vrot.slane %v3709, %v3716
    %v3719 = vunpack.c.l.s4 1966171168
    %v3720 = vunpack.c.0.s8 %v3719
    %v3721 = vlaneseq
    %v3722 = vshrl.u32 %v3721, 7
    %v3723 = vsub.s32 %v3720, %v3722
    %v3724 = vrot.slane %v3710, %v3723
    %3727 = vst.msk [vmem:[%s9 + $0x5] sm:$0x1] %vm3091, %v3717
    %3728 = vst.msk [vmem:[%s9 + $0xd] sm:$0x1] %vm3091, %v3724
    %v3729 = vld [vmem:[%s2605] sm:$0x3]
    %v3732 = vunpack.c.l.s4 1966171168
    %v3733 = vunpack.c.0.s8 %v3732
    %v3734 = vlaneseq
    %v3735 = vshrl.u32 %v3734, 7
    %v3736 = vsub.s32 %v3733, %v3735
    %v3737 = vrot.slane %v3729, %v3736
    %v3738 = vcombine.high %v3737, %v3737
    %v3740 = vunpack.c.l.s4 1966171168
    %v3741 = vunpack.c.0.s8 %v3740
    %v3742 = vlaneseq
    %v3743 = vshrl.u32 %v3742, 7
    %v3744 = vsub.s32 %v3741, %v3743
    %v3745 = vrot.slane %v3737, %v3744
    %v3747 = vunpack.c.l.s4 1966171168
    %v3748 = vunpack.c.0.s8 %v3747
    %v3749 = vlaneseq
    %v3750 = vshrl.u32 %v3749, 7
    %v3751 = vsub.s32 %v3748, %v3750
    %v3752 = vrot.slane %v3738, %v3751
    %3755 = vst.msk [vmem:[#allocation10 + $0x6] sm:$0x1] %vm2985, %v3745
    %3756 = vst.msk [vmem:[#allocation10 + $0xe] sm:$0x1] %vm2985, %v3752
    %v3757 = vsel %vm164, %v3729, 0
    %3759 = vmatprep.subr.mxu0 0.0
    %3760 = vmatpush1.msra.mxu0 %v2954
    %3761 = vmatprep.subr.mxu0 0.0
    %3762 = vmatpush1.msra.mxu0 %v2955
    %3763 = vmatprep.subr.mxu0 0.0
    %3764 = vmatpush1.msra.mxu0 %v2956
    %3765 = vmatprep.subr.mxu0 0.0
    %3766 = vmatpush1.msra.mxu0 %v2957
    %3767 = vmatprep.subr.mxu0 0.0
    %3768 = vmatpush1.msra.mxu0 0.0
    %3769 = vmatprep.subr.mxu0 0.0
    %3770 = vmatpush1.msra.mxu0 0.0
    %3771 = vmatprep.subr.mxu0 0.0
    %3772 = vmatpush1.msra.mxu0 0.0
    %3773 = vmatprep.subr.mxu0 0.0
    %3774 = vmatpush1.msra.mxu0 0.0
    %3775 = vmatprep.subr.mxu0 0.0
    %3776 = vmatpush1.msra.mxu0 0.0
    %3777 = vmatprep.subr.mxu0 0.0
    %3778 = vmatpush1.msra.mxu0 0.0
    %3779 = vmatprep.subr.mxu0 0.0
    %3780 = vmatpush1.msra.mxu0 0.0
    %3781 = vmatprep.subr.mxu0 0.0
    %3782 = vmatpush1.msra.mxu0 0.0
    %3783 = vmatprep.subr.mxu0 0.0
    %3784 = vmatpush1.msra.mxu0 0.0
    %3785 = vmatprep.subr.mxu0 0.0
    %3786 = vmatpush1.msra.mxu0 0.0
    %3787 = vmatprep.subr.mxu0 0.0
    %3788 = vmatpush1.msra.mxu0 0.0
    %3789 = vmatprep.subr.mxu0 0.0
    %3790 = vmatpush1.msra.mxu0 0.0
    %3791 = vmatprep.subr.mxu0 0.0
    %3792 = vmatpush1.msra.mxu0 0.0
    %3793 = vmatprep.subr.mxu0 0.0
    %3794 = vmatpush1.msra.mxu0 0.0
    %3795 = vmatprep.subr.mxu0 0.0
    %3796 = vmatpush1.msra.mxu0 0.0
    %3797 = vmatprep.subr.mxu0 0.0
    %3798 = vmatpush1.msra.mxu0 0.0
    %3799 = vmatprep.subr.mxu0 0.0
    %3800 = vmatpush1.msra.mxu0 0.0
    %3801 = vmatprep.subr.mxu0 0.0
    %3802 = vmatpush1.msra.mxu0 0.0
    %3803 = vmatprep.subr.mxu0 0.0
    %3804 = vmatpush1.msra.mxu0 0.0
    %3805 = vmatprep.subr.mxu0 0.0
    %3806 = vmatpush1.msra.mxu0 0.0
    %3807 = vmatprep.subr.mxu0 0.0
    %3808 = vmatpush1.msra.mxu0 0.0
    %3809 = vmatprep.subr.mxu0 0.0
    %3810 = vmatpush1.msra.mxu0 0.0
    %3811 = vmatprep.subr.mxu0 0.0
    %3812 = vmatpush1.msra.mxu0 0.0
    %3813 = vmatprep.subr.mxu0 0.0
    %3814 = vmatpush1.msra.mxu0 0.0
    %3815 = vmatprep.subr.mxu0 0.0
    %3816 = vmatpush1.msra.mxu0 0.0
    %3817 = vmatprep.subr.mxu0 0.0
    %3818 = vmatpush1.msra.mxu0 0.0
    %3819 = vmatprep.subr.mxu0 0.0
    %3820 = vmatpush1.msra.mxu0 0.0
    %3821 = vmatprep.subr.mxu0 0.0
    %3822 = vmatpush1.msra.mxu0 0.0
    %3823 = vmatprep.mubr.f32.mxu0 0.0
    %3824 = vmatmul.mubr.f32.gmra.mrb[0].mxu0 %v3757
    %v3825 = vpop.f32.mrb[0].mxu0
    %v3826 = vadd.f32 %v2992, %v3825
    %v3827 = vpop.f32.mrb[0].mxu0
    %3828 = vdwg.mxu0
    %v3831 = vunpack.c.l.s4 1966171168
    %v3832 = vunpack.c.0.s8 %v3831
    %v3833 = vlaneseq
    %v3834 = vshrl.u32 %v3833, 7
    %v3835 = vsub.s32 %v3832, %v3834
    %v3836 = vrot.slane %v3826, %v3835
    %v3837 = vcombine.high %v3836, %v3836
    %v3839 = vunpack.c.l.s4 1966171168
    %v3840 = vunpack.c.0.s8 %v3839
    %v3841 = vlaneseq
    %v3842 = vshrl.u32 %v3841, 7
    %v3843 = vsub.s32 %v3840, %v3842
    %v3844 = vrot.slane %v3836, %v3843
    %v3846 = vunpack.c.l.s4 1966171168
    %v3847 = vunpack.c.0.s8 %v3846
    %v3848 = vlaneseq
    %v3849 = vshrl.u32 %v3848, 7
    %v3850 = vsub.s32 %v3847, %v3849
    %v3851 = vrot.slane %v3837, %v3850
    %3854 = vst.msk [vmem:[%s9 + $0x6] sm:$0x1] %vm3091, %v3844
    %3855 = vst.msk [vmem:[%s9 + $0xe] sm:$0x1] %vm3091, %v3851
    %v3856 = vld [vmem:[%s2952] sm:$0x3]
    %v3859 = vunpack.c.l.s4 1966171168
    %v3860 = vunpack.c.0.s8 %v3859
    %v3861 = vlaneseq
    %v3862 = vshrl.u32 %v3861, 7
    %v3863 = vsub.s32 %v3860, %v3862
    %v3864 = vrot.slane %v3856, %v3863
    %v3865 = vcombine.high %v3864, %v3864
    %v3867 = vunpack.c.l.s4 1966171168
    %v3868 = vunpack.c.0.s8 %v3867
    %v3869 = vlaneseq
    %v3870 = vshrl.u32 %v3869, 7
    %v3871 = vsub.s32 %v3868, %v3870
    %v3872 = vrot.slane %v3864, %v3871
    %v3874 = vunpack.c.l.s4 1966171168
    %v3875 = vunpack.c.0.s8 %v3874
    %v3876 = vlaneseq
    %v3877 = vshrl.u32 %v3876, 7
    %v3878 = vsub.s32 %v3875, %v3877
    %v3879 = vrot.slane %v3865, %v3878
    %3882 = vst.msk [vmem:[#allocation10 + $0x7] sm:$0x1] %vm2985, %v3872
    %3883 = vst.msk [vmem:[#allocation10 + $0xf] sm:$0x1] %vm2985, %v3879
    %v3884 = vsel %vm164, %v3856, 0
    %3886 = vmatprep.subr.mxu0 0.0
    %3887 = vmatpush1.msra.mxu0 %v2954
    %3888 = vmatprep.subr.mxu0 0.0
    %3889 = vmatpush1.msra.mxu0 %v2955
    %3890 = vmatprep.subr.mxu0 0.0
    %3891 = vmatpush1.msra.mxu0 %v2956
    %3892 = vmatprep.subr.mxu0 0.0
    %3893 = vmatpush1.msra.mxu0 %v2957
    %3894 = vmatprep.subr.mxu0 0.0
    %3895 = vmatpush1.msra.mxu0 0.0
    %3896 = vmatprep.subr.mxu0 0.0
    %3897 = vmatpush1.msra.mxu0 0.0
    %3898 = vmatprep.subr.mxu0 0.0
    %3899 = vmatpush1.msra.mxu0 0.0
    %3900 = vmatprep.subr.mxu0 0.0
    %3901 = vmatpush1.msra.mxu0 0.0
    %3902 = vmatprep.subr.mxu0 0.0
    %3903 = vmatpush1.msra.mxu0 0.0
    %3904 = vmatprep.subr.mxu0 0.0
    %3905 = vmatpush1.msra.mxu0 0.0
    %3906 = vmatprep.subr.mxu0 0.0
    %3907 = vmatpush1.msra.mxu0 0.0
    %3908 = vmatprep.subr.mxu0 0.0
    %3909 = vmatpush1.msra.mxu0 0.0
    %3910 = vmatprep.subr.mxu0 0.0
    %3911 = vmatpush1.msra.mxu0 0.0
    %3912 = vmatprep.subr.mxu0 0.0
    %3913 = vmatpush1.msra.mxu0 0.0
    %3914 = vmatprep.subr.mxu0 0.0
    %3915 = vmatpush1.msra.mxu0 0.0
    %3916 = vmatprep.subr.mxu0 0.0
    %3917 = vmatpush1.msra.mxu0 0.0
    %3918 = vmatprep.subr.mxu0 0.0
    %3919 = vmatpush1.msra.mxu0 0.0
    %3920 = vmatprep.subr.mxu0 0.0
    %3921 = vmatpush1.msra.mxu0 0.0
    %3922 = vmatprep.subr.mxu0 0.0
    %3923 = vmatpush1.msra.mxu0 0.0
    %3924 = vmatprep.subr.mxu0 0.0
    %3925 = vmatpush1.msra.mxu0 0.0
    %3926 = vmatprep.subr.mxu0 0.0
    %3927 = vmatpush1.msra.mxu0 0.0
    %3928 = vmatprep.subr.mxu0 0.0
    %3929 = vmatpush1.msra.mxu0 0.0
    %3930 = vmatprep.subr.mxu0 0.0
    %3931 = vmatpush1.msra.mxu0 0.0
    %3932 = vmatprep.subr.mxu0 0.0
    %3933 = vmatpush1.msra.mxu0 0.0
    %3934 = vmatprep.subr.mxu0 0.0
    %3935 = vmatpush1.msra.mxu0 0.0
    %3936 = vmatprep.subr.mxu0 0.0
    %3937 = vmatpush1.msra.mxu0 0.0
    %3938 = vmatprep.subr.mxu0 0.0
    %3939 = vmatpush1.msra.mxu0 0.0
    %3940 = vmatprep.subr.mxu0 0.0
    %3941 = vmatpush1.msra.mxu0 0.0
    %3942 = vmatprep.subr.mxu0 0.0
    %3943 = vmatpush1.msra.mxu0 0.0
    %3944 = vmatprep.subr.mxu0 0.0
    %3945 = vmatpush1.msra.mxu0 0.0
    %3946 = vmatprep.subr.mxu0 0.0
    %3947 = vmatpush1.msra.mxu0 0.0
    %3948 = vmatprep.subr.mxu0 0.0
    %3949 = vmatpush1.msra.mxu0 0.0
    %3950 = vmatprep.mubr.f32.mxu0 0.0
    %3951 = vmatmul.mubr.f32.gmra.mrb[0].mxu0 %v3884
    %v3952 = vpop.f32.mrb[0].mxu0
    %v3953 = vadd.f32 %v2992, %v3952
    %v3954 = vpop.f32.mrb[0].mxu0
    %3955 = vdwg.mxu0
    %v3958 = vunpack.c.l.s4 1966171168
    %v3959 = vunpack.c.0.s8 %v3958
    %v3960 = vlaneseq
    %v3961 = vshrl.u32 %v3960, 7
    %v3962 = vsub.s32 %v3959, %v3961
    %v3963 = vrot.slane %v3953, %v3962
    %v3964 = vcombine.high %v3963, %v3963
    %v3966 = vunpack.c.l.s4 1966171168
    %v3967 = vunpack.c.0.s8 %v3966
    %v3968 = vlaneseq
    %v3969 = vshrl.u32 %v3968, 7
    %v3970 = vsub.s32 %v3967, %v3969
    %v3971 = vrot.slane %v3963, %v3970
    %v3973 = vunpack.c.l.s4 1966171168
    %v3974 = vunpack.c.0.s8 %v3973
    %v3975 = vlaneseq
    %v3976 = vshrl.u32 %v3975, 7
    %v3977 = vsub.s32 %v3974, %v3976
    %v3978 = vrot.slane %v3964, %v3977
    %3981 = vst.msk [vmem:[%s9 + $0x7] sm:$0x1] %vm3091, %v3971
    %3982 = vst.msk [vmem:[%s9 + $0xf] sm:$0x1] %vm3091, %v3978
    // Predicated region
    $region50: #{lstm_model_forward.1} parent=1 // pred_check
      _
    $region51: #{lstm_model_forward.1} parent=1 // pred_check_branch
      %3984 = sbr.rel (0) target = $region53
    $region52: #{lstm_model_forward.1} parent=1 // pred_region
      _
    $region53: #{lstm_model_forward.1} parent=1 // pred_fallthru
      _
    // Predicated region
    $region54: #{lstm_model_forward.1} parent=1 // pred_check
      _
    $region55: #{lstm_model_forward.1} parent=1 // pred_check_branch
      %3986 = sbr.rel (0) target = $region57
    $region56: #{lstm_model_forward.1} parent=1 // pred_region
      %s3988 = ssub.s32 256, 256
      %3989 = vsyncadd [#allocation6], %s3988
      %s3990 = sshll.u32 [#allocation10], 4
      %s3991 = int_to_ptr.vmem [resolvable:$true] %s3990
      %3996 = dma.vmem_to_hbm [thread:$0]  %s3991, 256, %s10, [#allocation6], 128, 128, 8
    $region57: #{lstm_model_forward.1} parent=1 // pred_fallthru
      _
    // Predicated region
    $region58: #{lstm_model_forward.1} parent=1 // pred_check
      _
    $region59: #{lstm_model_forward.1} parent=1 // pred_check_branch
      %3998 = sbr.rel (0) target = $region61
    $region60: #{lstm_model_forward.1} parent=1 // pred_region
      _
    $region61: #{lstm_model_forward.1} parent=1 // pred_fallthru
      _
    // Predicated region
    $region62: #{lstm_model_forward.1} parent=1 // pred_check
      _
    $region63: #{lstm_model_forward.1} parent=1 // pred_check_branch
      %4000 = sbr.rel (0) target = $region65
    $region64: #{lstm_model_forward.1} parent=1 // pred_region
      %4001 = dma.done [#allocation6], 256
    $region65: #{lstm_model_forward.1} parent=1 // pred_fallthru
      _
    %4002 = vsyncpa [#allocation5], 1
    %4003 = vsyncpa [#allocation8], 1
    %4004 = vsyncpa [#allocation6], 1

</llo_original>
